<compile_context>
chip_gen: v7x
topology: tpu7x:2x2x1
jax: 0.10.0
libtpu: 0.0.40
codegen_flags: <defaults>
</compile_context>

<pallas_src>
import math

import jax
import jax.numpy as jnp
from jax.experimental import pallas as pl
from jax.experimental.pallas import tpu as pltpu

# ---- synthetic DistilBERT config (small shapes) -----------------------------
VOCAB = 100
MAX_POS = 16
B, S, D = 2, 8, 32
N_HEADS = 4
HEAD_DIM = D // N_HEADS
FFN_DIM = 64
N_LAYERS = 2
LN_EPS = 1e-12  # DistilBERT LayerNorm eps
BS = B * S
BHS = B * N_HEADS * S

# indices into the packed per-layer (6, 1, D) vector bundle
_BO, _LN1G, _LN1B, _B2, _LN2G, _LN2B = range(6)


# ---- shared helpers (pure jnp, usable inside and outside the kernel) --------
def _layer_norm(x, g, b, eps=LN_EPS):
    mean = jnp.mean(x, axis=-1, keepdims=True)
    var = jnp.mean(jnp.square(x - mean), axis=-1, keepdims=True)
    return (x - mean) * jax.lax.rsqrt(var + eps) * g + b


def _gelu(x):
    # TODO(synk): PyTorch F.gelu is erf-based; tanh approximation kept for robust
    # Mosaic lowering (EUP tanh). Max difference vs the erf form is ~1e-3.
    c = math.sqrt(2.0 / math.pi)
    return 0.5 * x * (1.0 + jnp.tanh(c * (x + 0.044715 * x * x * x)))


# ---- fused whole-forward kernel ----------------------------------------------
def fused_forward_kernel(
    emb_ref, maskb_ref, embln_ref,
    wqk_ref, bqk_ref, wvo_ref, bvo_ref, w1_ref, b1_ref, w2_ref, dvec_ref,
    hid_ref, attn_ref,
    sc_ref, acc_ref,
):
    mask_slab = maskb_ref[...]                                   # (BHS, S): 0 / -1e9
    x = _layer_norm(emb_ref[...], embln_ref[0], embln_ref[1])    # (BS, D)
    hid_ref[0] = x

    for l in range(N_LAYERS):                                    # static unroll
        # ---- fused Q/K projection (scale folded into Wq/bq at pack time) ----
        qk = jnp.dot(x, wqk_ref[l], preferred_element_type=jnp.float32) + bqk_ref[l]

        # ---- raw attention scores per (batch, head) -> (BHS, S) scratch slab ----
        for b in range(B):
            qb = qk[b * S:(b + 1) * S, :D]                       # (S, D): all heads' q
            kb = qk[b * S:(b + 1) * S, D:]                       # (S, D): all heads' k
            for h in range(N_HEADS):
                q = qb[:, h * HEAD_DIM:(h + 1) * HEAD_DIM]
                k = kb[:, h * HEAD_DIM:(h + 1) * HEAD_DIM]
                s = jax.lax.dot_general(q, k, (((1,), (1,)), ((), ())),
                                        preferred_element_type=jnp.float32)  # (S, S)
                r = (b * N_HEADS + h) * S
                sc_ref[r:r + S, :] = s                            # sublane-offset store

        # ---- one batched softmax over all (batch, head) blocks ----
        # exact divide: attention probs are a public output (rows must sum to 1)
        sc = sc_ref[...] + mask_slab
        e = jnp.exp(sc - jnp.max(sc, axis=-1, keepdims=True))
        p_all = e / jnp.sum(e, axis=-1, keepdims=True)            # (BHS, S)
        attn_ref[l] = p_all                                       # single slab store

        # ---- attention output with Wo folded into Wv at pack time ----
        #   vo_h = x @ (Wv_h @ Wo_h) + bv_h @ Wo_h ;  sa = x + bo + sum_h p_h @ vo_h
        vo = [jnp.dot(x, wvo_ref[l, h], preferred_element_type=jnp.float32)
              + bvo_ref[l, h] for h in range(N_HEADS)]            # each (BS, D)
        for b in range(B):
            acc_b = x[b * S:(b + 1) * S, :] + dvec_ref[l, _BO]    # residual + out-proj bias
            for h in range(N_HEADS):
                r = (b * N_HEADS + h) * S
                acc_b = acc_b + jnp.dot(p_all[r:r + S, :],
                                        vo[h][b * S:(b + 1) * S, :],
                                        preferred_element_type=jnp.float32)
            acc_ref[b * S:(b + 1) * S, :] = acc_b
        x = _layer_norm(acc_ref[...], dvec_ref[l, _LN1G], dvec_ref[l, _LN1B])

        # ---- FFN ----
        h1 = _gelu(jnp.dot(x, w1_ref[l], preferred_element_type=jnp.float32)
                   + b1_ref[l])
        ffn = jnp.dot(h1, w2_ref[l], preferred_element_type=jnp.float32) \
            + dvec_ref[l, _B2]
        x = _layer_norm(ffn + x, dvec_ref[l, _LN2G], dvec_ref[l, _LN2B])
        hid_ref[l + 1] = x


def _fused_forward(emb_flat, mask_slab, pk):
    # Single invocation (no grid): every ref is the whole array, resident in VMEM;
    # weights are DMA'd once and the activation never round-trips to HBM.
    return pl.pallas_call(
        fused_forward_kernel,
        out_shape=(
            jax.ShapeDtypeStruct((N_LAYERS + 1, BS, D), jnp.float32),   # hidden states
            jax.ShapeDtypeStruct((N_LAYERS, BHS, S), jnp.float32),      # attn probs slab
        ),
        scratch_shapes=[
            pltpu.VMEM((BHS, S), jnp.float32),   # per-layer raw-score slab
            pltpu.VMEM((BS, D), jnp.float32),    # attention-output accumulator
        ],
    )(emb_flat, mask_slab, pk["embln"], pk["wqk"], pk["bqk"], pk["wvo"],
      pk["bvo"], pk["w1"], pk["b1"], pk["w2"], pk["dvec"])


# ---- parameter packing (one-time, trace-time reshapes / folds only) ----------
def pack_params(params):
    layers = params["layers"]
    scale = 1.0 / math.sqrt(HEAD_DIM)

    # fused Q|K weights with 1/sqrt(HD) folded into the Q half
    wqk = jnp.stack([jnp.concatenate([lp["wq"] * scale, lp["wk"]], axis=1)
                     for lp in layers])                                # (L, D, 2D)
    bqk = jnp.stack([jnp.concatenate([lp["bq"] * scale, lp["bk"]])[None, :]
                     for lp in layers])                                # (L, 1, 2D)

    # fold the output projection into V, per head
    wvo_l, bvo_l = [], []
    for lp in layers:
        wv = lp["wv"].reshape(D, N_HEADS, HEAD_DIM)                    # (D, H, HD)
        wo = lp["wo"].reshape(N_HEADS, HEAD_DIM, D)                    # (H, HD, D)
        bv = lp["bv"].reshape(N_HEADS, HEAD_DIM)                       # (H, HD)
        wvo_l.append(jnp.einsum("dhk,hko->hdo", wv, wo))               # (H, D, D)
        bvo_l.append(jnp.einsum("hk,hko->ho", bv, wo)[:, None, :])     # (H, 1, D)
    wvo = jnp.stack(wvo_l)                                             # (L, H, D, D)
    bvo = jnp.stack(bvo_l)                                             # (L, H, 1, D)

    w1 = jnp.stack([lp["w1"] for lp in layers])                        # (L, D, FFN)
    b1 = jnp.stack([lp["b1"].reshape(1, FFN_DIM) for lp in layers])    # (L, 1, FFN)
    w2 = jnp.stack([lp["w2"] for lp in layers])                        # (L, FFN, D)
    dvec = jnp.stack([
        jnp.stack([lp["bo"], lp["ln1_g"], lp["ln1_b"],
                   lp["b2"], lp["ln2_g"], lp["ln2_b"]])[:, None, :]
        for lp in layers])                                             # (L, 6, 1, D)
    embln = jnp.stack([params["emb_ln_g"], params["emb_ln_b"]])[:, None, :]  # (2, 1, D)
    return {
        "word_emb": params["word_emb"], "pos_emb": params["pos_emb"],
        "embln": embln, "wqk": wqk, "bqk": bqk, "wvo": wvo, "bvo": bvo,
        "w1": w1, "b1": b1, "w2": w2, "dvec": dvec,
    }


# ---- full forward (DistilBertWrap.forward semantics) -------------------------
@jax.jit
def distil_bert_wrap_forward(input_ids, attention_mask, packed):
    pos_ids = jnp.arange(S)
    emb = packed["word_emb"][input_ids] + packed["pos_emb"][pos_ids][None, :, :]
    # additive mask bias (0 for keep, -1e9 for masked), broadcast to the
    # (B*H*S, S) layout used by the batched in-kernel softmax
    bias = (attention_mask.astype(jnp.float32) - 1.0) * 1e9                    # (B, S)
    mask_slab = jnp.broadcast_to(bias[:, None, :],
                                 (B, N_HEADS * S, S)).reshape(BHS, S)

    hid, attn = _fused_forward(emb.reshape(BS, D).astype(jnp.float32),
                               mask_slab, packed)

    hid = hid.reshape(N_LAYERS + 1, B, S, D)
    attn = attn.reshape(N_LAYERS, B, N_HEADS, S, S)
    all_hidden_states = tuple(hid[i] for i in range(N_LAYERS + 1))
    all_self_attentions = tuple(attn[l] for l in range(N_LAYERS))
    sequence_output = all_hidden_states[-1]   # wrapper dropout p=0.0 -> identity
    return sequence_output, all_hidden_states, all_self_attentions


# ---- pure-JAX reference for correctness ---------------------------------------
def _reference_forward(input_ids, attention_mask, params):
    emb = params["word_emb"][input_ids] + params["pos_emb"][jnp.arange(S)][None]
    x = _layer_norm(emb, params["emb_ln_g"], params["emb_ln_b"])
    hiddens, attns = [x], []
    masked = attention_mask[:, None, None, :] == 0                  # (B,1,1,S)
    for lp in params["layers"]:
        q = x @ lp["wq"] + lp["bq"]
        k = x @ lp["wk"] + lp["bk"]
        v = x @ lp["wv"] + lp["bv"]

        def split(t):
            return jnp.transpose(t.reshape(B, S, N_HEADS, HEAD_DIM), (0, 2, 1, 3))

        qh, kh, vh = split(q), split(k), split(v)
        scores = (qh / math.sqrt(HEAD_DIM)) @ jnp.swapaxes(kh, -1, -2)
        scores = jnp.where(masked, -1e9, scores)
        p = jax.nn.softmax(scores, axis=-1)
        attns.append(p)
        ctx = jnp.transpose(p @ vh, (0, 2, 1, 3)).reshape(B, S, D)
        sa = ctx @ lp["wo"] + lp["bo"]
        x = _layer_norm(sa + x, lp["ln1_g"], lp["ln1_b"])
        h1 = _gelu(x @ lp["w1"] + lp["b1"])
        ffn = h1 @ lp["w2"] + lp["b2"]
        x = _layer_norm(ffn + x, lp["ln2_g"], lp["ln2_b"])
        hiddens.append(x)
    return x, hiddens, attns


# ---- deterministic parameter init ---------------------------------------------
def init_params(key):
    def nrm(k, shape):
        return (0.02 * jax.random.normal(k, shape)).astype(jnp.float32)

    keys = iter(jax.random.split(key, 2 + N_LAYERS * 6))
    params = {
        "word_emb": nrm(next(keys), (VOCAB, D)),
        "pos_emb": nrm(next(keys), (MAX_POS, D)),
        "emb_ln_g": jnp.ones((D,), jnp.float32),
        "emb_ln_b": jnp.zeros((D,), jnp.float32),
        "layers": [],
    }
    for _ in range(N_LAYERS):
        lp = {
            "wq": nrm(next(keys), (D, D)), "bq": jnp.zeros((D,), jnp.float32),
            "wk": nrm(next(keys), (D, D)), "bk": jnp.zeros((D,), jnp.float32),
            "wv": nrm(next(keys), (D, D)), "bv": jnp.zeros((D,), jnp.float32),
            "wo": nrm(next(keys), (D, D)), "bo": jnp.zeros((D,), jnp.float32),
            "ln1_g": jnp.ones((D,), jnp.float32), "ln1_b": jnp.zeros((D,), jnp.float32),
            "w1": nrm(next(keys), (D, FFN_DIM)), "b1": jnp.zeros((FFN_DIM,), jnp.float32),
            "w2": nrm(next(keys), (FFN_DIM, D)), "b2": jnp.zeros((D,), jnp.float32),
            "ln2_g": jnp.ones((D,), jnp.float32), "ln2_b": jnp.zeros((D,), jnp.float32),
        }
        params["layers"].append(lp)
    return params


if __name__ == "__main__":
    root = jax.random.PRNGKey(0)
    k_params, k_ids = jax.random.split(root)

    params = init_params(k_params)
    packed = pack_params(params)
    input_ids = jax.random.randint(k_ids, (B, S), 0, VOCAB, dtype=jnp.int32)
    attention_mask = jnp.array(
        [[1, 1, 1, 1, 1, 1, 1, 1],
         [1, 1, 1, 1, 1, 0, 0, 0]], dtype=jnp.int32)

    seq_out, hidden_states, attentions = distil_bert_wrap_forward(
        input_ids, attention_mask, packed)
    jax.block_until_ready(seq_out)
    jax.block_until_ready(hidden_states)
    jax.block_until_ready(attentions)

    # shape contract (matches DistilBertWrap: seq_out, all_hidden_states, all_attentions)
    assert seq_out.shape == (B, S, D)
    assert len(hidden_states) == N_LAYERS + 1
    assert len(attentions) == N_LAYERS
    assert attentions[0].shape == (B, N_HEADS, S, S)

    # numerical check vs pure-JAX reference
    ref_seq, ref_hiddens, ref_attns = _reference_forward(input_ids, attention_mask, params)
    assert float(jnp.max(jnp.abs(seq_out - ref_seq))) < 1e-2
    for i in range(N_LAYERS + 1):
        assert float(jnp.max(jnp.abs(hidden_states[i] - ref_hiddens[i]))) < 1e-2
    for l in range(N_LAYERS):
        assert float(jnp.max(jnp.abs(attentions[l] - ref_attns[l]))) < 1e-2

    print("KERNEL_OK")
</pallas_src>

<mosaic_0001>
module attributes {stable_mosaic.version = 11 : i64} {
  func.func @fused_forward_kernel(%arg0: memref<16x32xf32, #tpu.memory_space<vmem>>, %arg1: memref<64x8xf32, #tpu.memory_space<vmem>>, %arg2: memref<2x1x32xf32, #tpu.memory_space<vmem>>, %arg3: memref<2x32x64xf32, #tpu.memory_space<vmem>>, %arg4: memref<2x1x64xf32, #tpu.memory_space<vmem>>, %arg5: memref<2x4x32x32xf32, #tpu.memory_space<vmem>>, %arg6: memref<2x4x1x32xf32, #tpu.memory_space<vmem>>, %arg7: memref<2x32x64xf32, #tpu.memory_space<vmem>>, %arg8: memref<2x1x64xf32, #tpu.memory_space<vmem>>, %arg9: memref<2x64x32xf32, #tpu.memory_space<vmem>>, %arg10: memref<2x6x1x32xf32, #tpu.memory_space<vmem>>, %arg11: memref<3x16x32xf32, #tpu.memory_space<vmem>>, %arg12: memref<2x64x8xf32, #tpu.memory_space<vmem>>, %arg13: memref<64x8xf32, #tpu.memory_space<vmem>>, %arg14: memref<16x32xf32, #tpu.memory_space<vmem>>) attributes {dimension_semantics = [], scalar_prefetch = 0 : i64, scratch_operands = 2 : i64, tpu.core_type = #tpu.core_type<tc>} {
    %c0 = arith.constant 0 : index
    %c0_0 = arith.constant 0 : index
    %0 = vector.load %arg1[%c0, %c0_0] : memref<64x8xf32, #tpu.memory_space<vmem>>, vector<64x8xf32>
    %c0_1 = arith.constant 0 : index
    %c0_2 = arith.constant 0 : index
    %1 = vector.load %arg0[%c0_1, %c0_2] : memref<16x32xf32, #tpu.memory_space<vmem>>, vector<16x32xf32>
    %c0_3 = arith.constant 0 : index
    %c0_4 = arith.constant 0 : index
    %c0_5 = arith.constant 0 : index
    %2 = vector.load %arg2[%c0_3, %c0_4, %c0_5] : memref<2x1x32xf32, #tpu.memory_space<vmem>>, vector<1x1x32xf32>
    %3 = vector.shape_cast %2 : vector<1x1x32xf32> to vector<1x32xf32>
    %c1 = arith.constant 1 : index
    %c0_6 = arith.constant 0 : index
    %c0_7 = arith.constant 0 : index
    %4 = vector.load %arg2[%c1, %c0_6, %c0_7] : memref<2x1x32xf32, #tpu.memory_space<vmem>>, vector<1x1x32xf32>
    %5 = vector.shape_cast %4 : vector<1x1x32xf32> to vector<1x32xf32>
    %cst = arith.constant dense<0.000000e+00> : vector<16xf32>
    %6 = vector.multi_reduction <add>, %1, %cst [1] : vector<16x32xf32> to vector<16xf32>
    %7 = vector.shape_cast %6 : vector<16xf32> to vector<16x1xf32>
    %cst_8 = arith.constant 3.200000e+01 : f32
    %8 = vector.broadcast %cst_8 : f32 to vector<16x1xf32>
    %9 = arith.divf %7, %8 : vector<16x1xf32>
    %10 = vector.broadcast %9 : vector<16x1xf32> to vector<16x32xf32>
    %11 = arith.subf %1, %10 : vector<16x32xf32>
    %12 = arith.mulf %11, %11 : vector<16x32xf32>
    %cst_9 = arith.constant dense<0.000000e+00> : vector<16xf32>
    %13 = vector.multi_reduction <add>, %12, %cst_9 [1] : vector<16x32xf32> to vector<16xf32>
    %14 = vector.shape_cast %13 : vector<16xf32> to vector<16x1xf32>
    %cst_10 = arith.constant 3.200000e+01 : f32
    %15 = vector.broadcast %cst_10 : f32 to vector<16x1xf32>
    %16 = arith.divf %14, %15 : vector<16x1xf32>
    %17 = vector.broadcast %9 : vector<16x1xf32> to vector<16x32xf32>
    %18 = arith.subf %1, %17 : vector<16x32xf32>
    %cst_11 = arith.constant 9.99999996E-13 : f32
    %19 = vector.broadcast %cst_11 : f32 to vector<16x1xf32>
    %20 = arith.addf %16, %19 : vector<16x1xf32>
    %21 = math.rsqrt %20 : vector<16x1xf32>
    %22 = vector.broadcast %21 : vector<16x1xf32> to vector<16x32xf32>
    %23 = arith.mulf %18, %22 : vector<16x32xf32>
    %24 = vector.broadcast %3 : vector<1x32xf32> to vector<16x32xf32>
    %25 = arith.mulf %23, %24 : vector<16x32xf32>
    %26 = vector.broadcast %5 : vector<1x32xf32> to vector<16x32xf32>
    %27 = arith.addf %25, %26 : vector<16x32xf32>
    %c0_12 = arith.constant 0 : index
    %c0_13 = arith.constant 0 : index
    %c0_14 = arith.constant 0 : index
    %28 = vector.load %arg11[%c0_12, %c0_13, %c0_14] : memref<3x16x32xf32, #tpu.memory_space<vmem>>, vector<1x16x32xf32>
    %29 = vector.shape_cast %28 : vector<1x16x32xf32> to vector<16x32xf32>
    %30 = vector.shape_cast %27 : vector<16x32xf32> to vector<1x16x32xf32>
    tpu.vector_store %arg11[%c0_12, %c0_13, %c0_14], %30 {strides = array<i32>} : memref<3x16x32xf32, #tpu.memory_space<vmem>>, vector<1x16x32xf32>,
    %c0_15 = arith.constant 0 : index
    %c0_16 = arith.constant 0 : index
    %c0_17 = arith.constant 0 : index
    %31 = vector.load %arg3[%c0_15, %c0_16, %c0_17] : memref<2x32x64xf32, #tpu.memory_space<vmem>>, vector<1x32x64xf32>
    %32 = vector.shape_cast %31 : vector<1x32x64xf32> to vector<32x64xf32>
    %cst_18 = arith.constant dense<0.000000e+00> : vector<16x64xf32>
    %33 = tpu.matmul %27, %32, %cst_18 {dimension_numbers = #tpu.dot_dimension_numbers<[1], [0], [0], [1], [0, 0, 1, 1], [], []>} : vector<16x32xf32>, vector<32x64xf32>, vector<16x64xf32> -> vector<16x64xf32>
    %c0_19 = arith.constant 0 : index
    %c0_20 = arith.constant 0 : index
    %c0_21 = arith.constant 0 : index
    %34 = vector.load %arg4[%c0_19, %c0_20, %c0_21] : memref<2x1x64xf32, #tpu.memory_space<vmem>>, vector<1x1x64xf32>
    %35 = vector.shape_cast %34 : vector<1x1x64xf32> to vector<1x64xf32>
    %36 = vector.broadcast %35 : vector<1x64xf32> to vector<16x64xf32>
    %37 = arith.addf %33, %36 : vector<16x64xf32>
    %38 = vector.extract_strided_slice %37 {offsets = [0, 0], sizes = [8, 32], strides = [1, 1]} : vector<16x64xf32> to vector<8x32xf32>
    %39 = vector.extract_strided_slice %37 {offsets = [0, 32], sizes = [8, 32], strides = [1, 1]} : vector<16x64xf32> to vector<8x32xf32>
    %40 = vector.extract_strided_slice %38 {offsets = [0, 0], sizes = [8, 8], strides = [1, 1]} : vector<8x32xf32> to vector<8x8xf32>
    %41 = vector.extract_strided_slice %39 {offsets = [0, 0], sizes = [8, 8], strides = [1, 1]} : vector<8x32xf32> to vector<8x8xf32>
    %cst_22 = arith.constant dense<0.000000e+00> : vector<8x8xf32>
    %42 = tpu.matmul %40, %41, %cst_22 {dimension_numbers = #tpu.dot_dimension_numbers<[1], [1], [0], [0], [0, 0, 1, 0], [], []>} : vector<8x8xf32>, vector<8x8xf32>, vector<8x8xf32> -> vector<8x8xf32>
    %c0_23 = arith.constant 0 : index
    %c0_24 = arith.constant 0 : index
    %43 = vector.load %arg13[%c0_23, %c0_24] : memref<64x8xf32, #tpu.memory_space<vmem>>, vector<8x8xf32>
    tpu.vector_store %arg13[%c0_23, %c0_24], %42 {strides = array<i32>} : memref<64x8xf32, #tpu.memory_space<vmem>>, vector<8x8xf32>,
    %44 = vector.extract_strided_slice %38 {offsets = [0, 8], sizes = [8, 8], strides = [1, 1]} : vector<8x32xf32> to vector<8x8xf32>
    %45 = vector.extract_strided_slice %39 {offsets = [0, 8], sizes = [8, 8], strides = [1, 1]} : vector<8x32xf32> to vector<8x8xf32>
    %cst_25 = arith.constant dense<0.000000e+00> : vector<8x8xf32>
    %46 = tpu.matmul %44, %45, %cst_25 {dimension_numbers = #tpu.dot_dimension_numbers<[1], [1], [0], [0], [0, 0, 1, 0], [], []>} : vector<8x8xf32>, vector<8x8xf32>, vector<8x8xf32> -> vector<8x8xf32>
    %c8 = arith.constant 8 : index
    %c0_26 = arith.constant 0 : index
    %47 = vector.load %arg13[%c8, %c0_26] : memref<64x8xf32, #tpu.memory_space<vmem>>, vector<8x8xf32>
    tpu.vector_store %arg13[%c8, %c0_26], %46 {strides = array<i32>} : memref<64x8xf32, #tpu.memory_space<vmem>>, vector<8x8xf32>,
    %48 = vector.extract_strided_slice %38 {offsets = [0, 16], sizes = [8, 8], strides = [1, 1]} : vector<8x32xf32> to vector<8x8xf32>
    %49 = vector.extract_strided_slice %39 {offsets = [0, 16], sizes = [8, 8], strides = [1, 1]} : vector<8x32xf32> to vector<8x8xf32>
    %cst_27 = arith.constant dense<0.000000e+00> : vector<8x8xf32>
    %50 = tpu.matmul %48, %49, %cst_27 {dimension_numbers = #tpu.dot_dimension_numbers<[1], [1], [0], [0], [0, 0, 1, 0], [], []>} : vector<8x8xf32>, vector<8x8xf32>, vector<8x8xf32> -> vector<8x8xf32>
    %c16 = arith.constant 16 : index
    %c0_28 = arith.constant 0 : index
    %51 = vector.load %arg13[%c16, %c0_28] : memref<64x8xf32, #tpu.memory_space<vmem>>, vector<8x8xf32>
    tpu.vector_store %arg13[%c16, %c0_28], %50 {strides = array<i32>} : memref<64x8xf32, #tpu.memory_space<vmem>>, vector<8x8xf32>,
    %52 = vector.extract_strided_slice %38 {offsets = [0, 24], sizes = [8, 8], strides = [1, 1]} : vector<8x32xf32> to vector<8x8xf32>
    %53 = vector.extract_strided_slice %39 {offsets = [0, 24], sizes = [8, 8], strides = [1, 1]} : vector<8x32xf32> to vector<8x8xf32>
    %cst_29 = arith.constant dense<0.000000e+00> : vector<8x8xf32>
    %54 = tpu.matmul %52, %53, %cst_29 {dimension_numbers = #tpu.dot_dimension_numbers<[1], [1], [0], [0], [0, 0, 1, 0], [], []>} : vector<8x8xf32>, vector<8x8xf32>, vector<8x8xf32> -> vector<8x8xf32>
    %c24 = arith.constant 24 : index
    %c0_30 = arith.constant 0 : index
    %55 = vector.load %arg13[%c24, %c0_30] : memref<64x8xf32, #tpu.memory_space<vmem>>, vector<8x8xf32>
    tpu.vector_store %arg13[%c24, %c0_30], %54 {strides = array<i32>} : memref<64x8xf32, #tpu.memory_space<vmem>>, vector<8x8xf32>,
    %56 = vector.extract_strided_slice %37 {offsets = [8, 0], sizes = [8, 32], strides = [1, 1]} : vector<16x64xf32> to vector<8x32xf32>
    %57 = vector.extract_strided_slice %37 {offsets = [8, 32], sizes = [8, 32], strides = [1, 1]} : vector<16x64xf32> to vector<8x32xf32>
    %58 = vector.extract_strided_slice %56 {offsets = [0, 0], sizes = [8, 8], strides = [1, 1]} : vector<8x32xf32> to vector<8x8xf32>
    %59 = vector.extract_strided_slice %57 {offsets = [0, 0], sizes = [8, 8], strides = [1, 1]} : vector<8x32xf32> to vector<8x8xf32>
    %cst_31 = arith.constant dense<0.000000e+00> : vector<8x8xf32>
    %60 = tpu.matmul %58, %59, %cst_31 {dimension_numbers = #tpu.dot_dimension_numbers<[1], [1], [0], [0], [0, 0, 1, 0], [], []>} : vector<8x8xf32>, vector<8x8xf32>, vector<8x8xf32> -> vector<8x8xf32>
    %c32 = arith.constant 32 : index
    %c0_32 = arith.constant 0 : index
    %61 = vector.load %arg13[%c32, %c0_32] : memref<64x8xf32, #tpu.memory_space<vmem>>, vector<8x8xf32>
    tpu.vector_store %arg13[%c32, %c0_32], %60 {strides = array<i32>} : memref<64x8xf32, #tpu.memory_space<vmem>>, vector<8x8xf32>,
    %62 = vector.extract_strided_slice %56 {offsets = [0, 8], sizes = [8, 8], strides = [1, 1]} : vector<8x32xf32> to vector<8x8xf32>
    %63 = vector.extract_strided_slice %57 {offsets = [0, 8], sizes = [8, 8], strides = [1, 1]} : vector<8x32xf32> to vector<8x8xf32>
    %cst_33 = arith.constant dense<0.000000e+00> : vector<8x8xf32>
    %64 = tpu.matmul %62, %63, %cst_33 {dimension_numbers = #tpu.dot_dimension_numbers<[1], [1], [0], [0], [0, 0, 1, 0], [], []>} : vector<8x8xf32>, vector<8x8xf32>, vector<8x8xf32> -> vector<8x8xf32>
    %c40 = arith.constant 40 : index
    %c0_34 = arith.constant 0 : index
    %65 = vector.load %arg13[%c40, %c0_34] : memref<64x8xf32, #tpu.memory_space<vmem>>, vector<8x8xf32>
    tpu.vector_store %arg13[%c40, %c0_34], %64 {strides = array<i32>} : memref<64x8xf32, #tpu.memory_space<vmem>>, vector<8x8xf32>,
    %66 = vector.extract_strided_slice %56 {offsets = [0, 16], sizes = [8, 8], strides = [1, 1]} : vector<8x32xf32> to vector<8x8xf32>
    %67 = vector.extract_strided_slice %57 {offsets = [0, 16], sizes = [8, 8], strides = [1, 1]} : vector<8x32xf32> to vector<8x8xf32>
    %cst_35 = arith.constant dense<0.000000e+00> : vector<8x8xf32>
    %68 = tpu.matmul %66, %67, %cst_35 {dimension_numbers = #tpu.dot_dimension_numbers<[1], [1], [0], [0], [0, 0, 1, 0], [], []>} : vector<8x8xf32>, vector<8x8xf32>, vector<8x8xf32> -> vector<8x8xf32>
    %c48 = arith.constant 48 : index
    %c0_36 = arith.constant 0 : index
    %69 = vector.load %arg13[%c48, %c0_36] : memref<64x8xf32, #tpu.memory_space<vmem>>, vector<8x8xf32>
    tpu.vector_store %arg13[%c48, %c0_36], %68 {strides = array<i32>} : memref<64x8xf32, #tpu.memory_space<vmem>>, vector<8x8xf32>,
    %70 = vector.extract_strided_slice %56 {offsets = [0, 24], sizes = [8, 8], strides = [1, 1]} : vector<8x32xf32> to vector<8x8xf32>
    %71 = vector.extract_strided_slice %57 {offsets = [0, 24], sizes = [8, 8], strides = [1, 1]} : vector<8x32xf32> to vector<8x8xf32>
    %cst_37 = arith.constant dense<0.000000e+00> : vector<8x8xf32>
    %72 = tpu.matmul %70, %71, %cst_37 {dimension_numbers = #tpu.dot_dimension_numbers<[1], [1], [0], [0], [0, 0, 1, 0], [], []>} : vector<8x8xf32>, vector<8x8xf32>, vector<8x8xf32> -> vector<8x8xf32>
    %c56 = arith.constant 56 : index
    %c0_38 = arith.constant 0 : index
    %73 = vector.load %arg13[%c56, %c0_38] : memref<64x8xf32, #tpu.memory_space<vmem>>, vector<8x8xf32>
    tpu.vector_store %arg13[%c56, %c0_38], %72 {strides = array<i32>} : memref<64x8xf32, #tpu.memory_space<vmem>>, vector<8x8xf32>,
    %c0_39 = arith.constant 0 : index
    %c0_40 = arith.constant 0 : index
    %74 = vector.load %arg13[%c0_39, %c0_40] : memref<64x8xf32, #tpu.memory_space<vmem>>, vector<64x8xf32>
    %75 = arith.addf %74, %0 : vector<64x8xf32>
    %cst_41 = arith.constant dense<0xFF800000> : vector<64xf32>
    %76 = vector.multi_reduction <maximumf>, %75, %cst_41 [1] : vector<64x8xf32> to vector<64xf32>
    %77 = vector.shape_cast %76 : vector<64xf32> to vector<64x1xf32>
    %78 = vector.broadcast %77 : vector<64x1xf32> to vector<64x8xf32>
    %79 = arith.subf %75, %78 : vector<64x8xf32>
    %80 = math.exp %79 : vector<64x8xf32>
    %cst_42 = arith.constant dense<0.000000e+00> : vector<64xf32>
    %81 = vector.multi_reduction <add>, %80, %cst_42 [1] : vector<64x8xf32> to vector<64xf32>
    %82 = vector.shape_cast %81 : vector<64xf32> to vector<64x1xf32>
    %83 = vector.broadcast %82 : vector<64x1xf32> to vector<64x8xf32>
    %84 = arith.divf %80, %83 : vector<64x8xf32>
    %c0_43 = arith.constant 0 : index
    %c0_44 = arith.constant 0 : index
    %c0_45 = arith.constant 0 : index
    %85 = vector.load %arg12[%c0_43, %c0_44, %c0_45] : memref<2x64x8xf32, #tpu.memory_space<vmem>>, vector<1x64x8xf32>
    %86 = vector.shape_cast %85 : vector<1x64x8xf32> to vector<64x8xf32>
    %87 = vector.shape_cast %84 : vector<64x8xf32> to vector<1x64x8xf32>
    tpu.vector_store %arg12[%c0_43, %c0_44, %c0_45], %87 {strides = array<i32>} : memref<2x64x8xf32, #tpu.memory_space<vmem>>, vector<1x64x8xf32>,
    %c0_46 = arith.constant 0 : index
    %c0_47 = arith.constant 0 : index
    %c0_48 = arith.constant 0 : index
    %c0_49 = arith.constant 0 : index
    %88 = vector.load %arg5[%c0_46, %c0_47, %c0_48, %c0_49] : memref<2x4x32x32xf32, #tpu.memory_space<vmem>>, vector<1x1x32x32xf32>
    %89 = vector.shape_cast %88 : vector<1x1x32x32xf32> to vector<32x32xf32>
    %cst_50 = arith.constant dense<0.000000e+00> : vector<16x32xf32>
    %90 = tpu.matmul %27, %89, %cst_50 {dimension_numbers = #tpu.dot_dimension_numbers<[1], [0], [0], [1], [0, 0, 1, 1], [], []>} : vector<16x32xf32>, vector<32x32xf32>, vector<16x32xf32> -> vector<16x32xf32>
    %c0_51 = arith.constant 0 : index
    %c0_52 = arith.constant 0 : index
    %c0_53 = arith.constant 0 : index
    %c0_54 = arith.constant 0 : index
    %91 = vector.load %arg6[%c0_51, %c0_52, %c0_53, %c0_54] : memref<2x4x1x32xf32, #tpu.memory_space<vmem>>, vector<1x1x1x32xf32>
    %92 = vector.shape_cast %91 : vector<1x1x1x32xf32> to vector<1x32xf32>
    %93 = vector.broadcast %92 : vector<1x32xf32> to vector<16x32xf32>
    %94 = arith.addf %90, %93 : vector<16x32xf32>
    %c0_55 = arith.constant 0 : index
    %c1_56 = arith.constant 1 : index
    %c0_57 = arith.constant 0 : index
    %c0_58 = arith.constant 0 : index
    %95 = vector.load %arg5[%c0_55, %c1_56, %c0_57, %c0_58] : memref<2x4x32x32xf32, #tpu.memory_space<vmem>>, vector<1x1x32x32xf32>
    %96 = vector.shape_cast %95 : vector<1x1x32x32xf32> to vector<32x32xf32>
    %cst_59 = arith.constant dense<0.000000e+00> : vector<16x32xf32>
    %97 = tpu.matmul %27, %96, %cst_59 {dimension_numbers = #tpu.dot_dimension_numbers<[1], [0], [0], [1], [0, 0, 1, 1], [], []>} : vector<16x32xf32>, vector<32x32xf32>, vector<16x32xf32> -> vector<16x32xf32>
    %c0_60 = arith.constant 0 : index
    %c1_61 = arith.constant 1 : index
    %c0_62 = arith.constant 0 : index
    %c0_63 = arith.constant 0 : index
    %98 = vector.load %arg6[%c0_60, %c1_61, %c0_62, %c0_63] : memref<2x4x1x32xf32, #tpu.memory_space<vmem>>, vector<1x1x1x32xf32>
    %99 = vector.shape_cast %98 : vector<1x1x1x32xf32> to vector<1x32xf32>
    %100 = vector.broadcast %99 : vector<1x32xf32> to vector<16x32xf32>
    %101 = arith.addf %97, %100 : vector<16x32xf32>
    %c0_64 = arith.constant 0 : index
    %c2 = arith.constant 2 : index
    %c0_65 = arith.constant 0 : index
    %c0_66 = arith.constant 0 : index
    %102 = vector.load %arg5[%c0_64, %c2, %c0_65, %c0_66] : memref<2x4x32x32xf32, #tpu.memory_space<vmem>>, vector<1x1x32x32xf32>
    %103 = vector.shape_cast %102 : vector<1x1x32x32xf32> to vector<32x32xf32>
    %cst_67 = arith.constant dense<0.000000e+00> : vector<16x32xf32>
    %104 = tpu.matmul %27, %103, %cst_67 {dimension_numbers = #tpu.dot_dimension_numbers<[1], [0], [0], [1], [0, 0, 1, 1], [], []>} : vector<16x32xf32>, vector<32x32xf32>, vector<16x32xf32> -> vector<16x32xf32>
    %c0_68 = arith.constant 0 : index
    %c2_69 = arith.constant 2 : index
    %c0_70 = arith.constant 0 : index
    %c0_71 = arith.constant 0 : index
    %105 = vector.load %arg6[%c0_68, %c2_69, %c0_70, %c0_71] : memref<2x4x1x32xf32, #tpu.memory_space<vmem>>, vector<1x1x1x32xf32>
    %106 = vector.shape_cast %105 : vector<1x1x1x32xf32> to vector<1x32xf32>
    %107 = vector.broadcast %106 : vector<1x32xf32> to vector<16x32xf32>
    %108 = arith.addf %104, %107 : vector<16x32xf32>
    %c0_72 = arith.constant 0 : index
    %c3 = arith.constant 3 : index
    %c0_73 = arith.constant 0 : index
    %c0_74 = arith.constant 0 : index
    %109 = vector.load %arg5[%c0_72, %c3, %c0_73, %c0_74] : memref<2x4x32x32xf32, #tpu.memory_space<vmem>>, vector<1x1x32x32xf32>
    %110 = vector.shape_cast %109 : vector<1x1x32x32xf32> to vector<32x32xf32>
    %cst_75 = arith.constant dense<0.000000e+00> : vector<16x32xf32>
    %111 = tpu.matmul %27, %110, %cst_75 {dimension_numbers = #tpu.dot_dimension_numbers<[1], [0], [0], [1], [0, 0, 1, 1], [], []>} : vector<16x32xf32>, vector<32x32xf32>, vector<16x32xf32> -> vector<16x32xf32>
    %c0_76 = arith.constant 0 : index
    %c3_77 = arith.constant 3 : index
    %c0_78 = arith.constant 0 : index
    %c0_79 = arith.constant 0 : index
    %112 = vector.load %arg6[%c0_76, %c3_77, %c0_78, %c0_79] : memref<2x4x1x32xf32, #tpu.memory_space<vmem>>, vector<1x1x1x32xf32>
    %113 = vector.shape_cast %112 : vector<1x1x1x32xf32> to vector<1x32xf32>
    %114 = vector.broadcast %113 : vector<1x32xf32> to vector<16x32xf32>
    %115 = arith.addf %111, %114 : vector<16x32xf32>
    %116 = vector.extract_strided_slice %27 {offsets = [0, 0], sizes = [8, 32], strides = [1, 1]} : vector<16x32xf32> to vector<8x32xf32>
    %c0_80 = arith.constant 0 : index
    %c0_81 = arith.constant 0 : index
    %c0_82 = arith.constant 0 : index
    %c0_83 = arith.constant 0 : index
    %117 = vector.load %arg10[%c0_80, %c0_81, %c0_82, %c0_83] : memref<2x6x1x32xf32, #tpu.memory_space<vmem>>, vector<1x1x1x32xf32>
    %118 = vector.shape_cast %117 : vector<1x1x1x32xf32> to vector<1x32xf32>
    %119 = vector.broadcast %118 : vector<1x32xf32> to vector<8x32xf32>
    %120 = arith.addf %116, %119 : vector<8x32xf32>
    %121 = vector.extract_strided_slice %84 {offsets = [0, 0], sizes = [8, 8], strides = [1, 1]} : vector<64x8xf32> to vector<8x8xf32>
    %122 = vector.extract_strided_slice %94 {offsets = [0, 0], sizes = [8, 32], strides = [1, 1]} : vector<16x32xf32> to vector<8x32xf32>
    %cst_84 = arith.constant dense<0.000000e+00> : vector<8x32xf32>
    %123 = tpu.matmul %121, %122, %cst_84 {dimension_numbers = #tpu.dot_dimension_numbers<[1], [0], [0], [1], [0, 0, 1, 1], [], []>} : vector<8x8xf32>, vector<8x32xf32>, vector<8x32xf32> -> vector<8x32xf32>
    %124 = arith.addf %120, %123 : vector<8x32xf32>
    %125 = vector.extract_strided_slice %84 {offsets = [8, 0], sizes = [8, 8], strides = [1, 1]} : vector<64x8xf32> to vector<8x8xf32>
    %126 = vector.extract_strided_slice %101 {offsets = [0, 0], sizes = [8, 32], strides = [1, 1]} : vector<16x32xf32> to vector<8x32xf32>
    %cst_85 = arith.constant dense<0.000000e+00> : vector<8x32xf32>
    %127 = tpu.matmul %125, %126, %cst_85 {dimension_numbers = #tpu.dot_dimension_numbers<[1], [0], [0], [1], [0, 0, 1, 1], [], []>} : vector<8x8xf32>, vector<8x32xf32>, vector<8x32xf32> -> vector<8x32xf32>
    %128 = arith.addf %124, %127 : vector<8x32xf32>
    %129 = vector.extract_strided_slice %84 {offsets = [16, 0], sizes = [8, 8], strides = [1, 1]} : vector<64x8xf32> to vector<8x8xf32>
    %130 = vector.extract_strided_slice %108 {offsets = [0, 0], sizes = [8, 32], strides = [1, 1]} : vector<16x32xf32> to vector<8x32xf32>
    %cst_86 = arith.constant dense<0.000000e+00> : vector<8x32xf32>
    %131 = tpu.matmul %129, %130, %cst_86 {dimension_numbers = #tpu.dot_dimension_numbers<[1], [0], [0], [1], [0, 0, 1, 1], [], []>} : vector<8x8xf32>, vector<8x32xf32>, vector<8x32xf32> -> vector<8x32xf32>
    %132 = arith.addf %128, %131 : vector<8x32xf32>
    %133 = vector.extract_strided_slice %84 {offsets = [24, 0], sizes = [8, 8], strides = [1, 1]} : vector<64x8xf32> to vector<8x8xf32>
    %134 = vector.extract_strided_slice %115 {offsets = [0, 0], sizes = [8, 32], strides = [1, 1]} : vector<16x32xf32> to vector<8x32xf32>
    %cst_87 = arith.constant dense<0.000000e+00> : vector<8x32xf32>
    %135 = tpu.matmul %133, %134, %cst_87 {dimension_numbers = #tpu.dot_dimension_numbers<[1], [0], [0], [1], [0, 0, 1, 1], [], []>} : vector<8x8xf32>, vector<8x32xf32>, vector<8x32xf32> -> vector<8x32xf32>
    %136 = arith.addf %132, %135 : vector<8x32xf32>
    %c0_88 = arith.constant 0 : index
    %c0_89 = arith.constant 0 : index
    %137 = vector.load %arg14[%c0_88, %c0_89] : memref<16x32xf32, #tpu.memory_space<vmem>>, vector<8x32xf32>
    tpu.vector_store %arg14[%c0_88, %c0_89], %136 {strides = array<i32>} : memref<16x32xf32, #tpu.memory_space<vmem>>, vector<8x32xf32>,
    %138 = vector.extract_strided_slice %27 {offsets = [8, 0], sizes = [8, 32], strides = [1, 1]} : vector<16x32xf32> to vector<8x32xf32>
    %c0_90 = arith.constant 0 : index
    %c0_91 = arith.constant 0 : index
    %c0_92 = arith.constant 0 : index
    %c0_93 = arith.constant 0 : index
    %139 = vector.load %arg10[%c0_90, %c0_91, %c0_92, %c0_93] : memref<2x6x1x32xf32, #tpu.memory_space<vmem>>, vector<1x1x1x32xf32>
    %140 = vector.shape_cast %139 : vector<1x1x1x32xf32> to vector<1x32xf32>
    %141 = vector.broadcast %140 : vector<1x32xf32> to vector<8x32xf32>
    %142 = arith.addf %138, %141 : vector<8x32xf32>
    %143 = vector.extract_strided_slice %84 {offsets = [32, 0], sizes = [8, 8], strides = [1, 1]} : vector<64x8xf32> to vector<8x8xf32>
    %144 = vector.extract_strided_slice %94 {offsets = [8, 0], sizes = [8, 32], strides = [1, 1]} : vector<16x32xf32> to vector<8x32xf32>
    %cst_94 = arith.constant dense<0.000000e+00> : vector<8x32xf32>
    %145 = tpu.matmul %143, %144, %cst_94 {dimension_numbers = #tpu.dot_dimension_numbers<[1], [0], [0], [1], [0, 0, 1, 1], [], []>} : vector<8x8xf32>, vector<8x32xf32>, vector<8x32xf32> -> vector<8x32xf32>
    %146 = arith.addf %142, %145 : vector<8x32xf32>
    %147 = vector.extract_strided_slice %84 {offsets = [40, 0], sizes = [8, 8], strides = [1, 1]} : vector<64x8xf32> to vector<8x8xf32>
    %148 = vector.extract_strided_slice %101 {offsets = [8, 0], sizes = [8, 32], strides = [1, 1]} : vector<16x32xf32> to vector<8x32xf32>
    %cst_95 = arith.constant dense<0.000000e+00> : vector<8x32xf32>
    %149 = tpu.matmul %147, %148, %cst_95 {dimension_numbers = #tpu.dot_dimension_numbers<[1], [0], [0], [1], [0, 0, 1, 1], [], []>} : vector<8x8xf32>, vector<8x32xf32>, vector<8x32xf32> -> vector<8x32xf32>
    %150 = arith.addf %146, %149 : vector<8x32xf32>
    %151 = vector.extract_strided_slice %84 {offsets = [48, 0], sizes = [8, 8], strides = [1, 1]} : vector<64x8xf32> to vector<8x8xf32>
    %152 = vector.extract_strided_slice %108 {offsets = [8, 0], sizes = [8, 32], strides = [1, 1]} : vector<16x32xf32> to vector<8x32xf32>
    %cst_96 = arith.constant dense<0.000000e+00> : vector<8x32xf32>
    %153 = tpu.matmul %151, %152, %cst_96 {dimension_numbers = #tpu.dot_dimension_numbers<[1], [0], [0], [1], [0, 0, 1, 1], [], []>} : vector<8x8xf32>, vector<8x32xf32>, vector<8x32xf32> -> vector<8x32xf32>
    %154 = arith.addf %150, %153 : vector<8x32xf32>
    %155 = vector.extract_strided_slice %84 {offsets = [56, 0], sizes = [8, 8], strides = [1, 1]} : vector<64x8xf32> to vector<8x8xf32>
    %156 = vector.extract_strided_slice %115 {offsets = [8, 0], sizes = [8, 32], strides = [1, 1]} : vector<16x32xf32> to vector<8x32xf32>
    %cst_97 = arith.constant dense<0.000000e+00> : vector<8x32xf32>
    %157 = tpu.matmul %155, %156, %cst_97 {dimension_numbers = #tpu.dot_dimension_numbers<[1], [0], [0], [1], [0, 0, 1, 1], [], []>} : vector<8x8xf32>, vector<8x32xf32>, vector<8x32xf32> -> vector<8x32xf32>
    %158 = arith.addf %154, %157 : vector<8x32xf32>
    %c8_98 = arith.constant 8 : index
    %c0_99 = arith.constant 0 : index
    %159 = vector.load %arg14[%c8_98, %c0_99] : memref<16x32xf32, #tpu.memory_space<vmem>>, vector<8x32xf32>
    tpu.vector_store %arg14[%c8_98, %c0_99], %158 {strides = array<i32>} : memref<16x32xf32, #tpu.memory_space<vmem>>, vector<8x32xf32>,
    %c0_100 = arith.constant 0 : index
    %c0_101 = arith.constant 0 : index
    %160 = vector.load %arg14[%c0_100, %c0_101] : memref<16x32xf32, #tpu.memory_space<vmem>>, vector<16x32xf32>
    %c0_102 = arith.constant 0 : index
    %c1_103 = arith.constant 1 : index
    %c0_104 = arith.constant 0 : index
    %c0_105 = arith.constant 0 : index
    %161 = vector.load %arg10[%c0_102, %c1_103, %c0_104, %c0_105] : memref<2x6x1x32xf32, #tpu.memory_space<vmem>>, vector<1x1x1x32xf32>
    %162 = vector.shape_cast %161 : vector<1x1x1x32xf32> to vector<1x32xf32>
    %c0_106 = arith.constant 0 : index
    %c2_107 = arith.constant 2 : index
    %c0_108 = arith.constant 0 : index
    %c0_109 = arith.constant 0 : index
    %163 = vector.load %arg10[%c0_106, %c2_107, %c0_108, %c0_109] : memref<2x6x1x32xf32, #tpu.memory_space<vmem>>, vector<1x1x1x32xf32>
    %164 = vector.shape_cast %163 : vector<1x1x1x32xf32> to vector<1x32xf32>
    %cst_110 = arith.constant dense<0.000000e+00> : vector<16xf32>
    %165 = vector.multi_reduction <add>, %160, %cst_110 [1] : vector<16x32xf32> to vector<16xf32>
    %166 = vector.shape_cast %165 : vector<16xf32> to vector<16x1xf32>
    %cst_111 = arith.constant 3.200000e+01 : f32
    %167 = vector.broadcast %cst_111 : f32 to vector<16x1xf32>
    %168 = arith.divf %166, %167 : vector<16x1xf32>
    %169 = vector.broadcast %168 : vector<16x1xf32> to vector<16x32xf32>
    %170 = arith.subf %160, %169 : vector<16x32xf32>
    %171 = arith.mulf %170, %170 : vector<16x32xf32>
    %cst_112 = arith.constant dense<0.000000e+00> : vector<16xf32>
    %172 = vector.multi_reduction <add>, %171, %cst_112 [1] : vector<16x32xf32> to vector<16xf32>
    %173 = vector.shape_cast %172 : vector<16xf32> to vector<16x1xf32>
    %cst_113 = arith.constant 3.200000e+01 : f32
    %174 = vector.broadcast %cst_113 : f32 to vector<16x1xf32>
    %175 = arith.divf %173, %174 : vector<16x1xf32>
    %176 = vector.broadcast %168 : vector<16x1xf32> to vector<16x32xf32>
    %177 = arith.subf %160, %176 : vector<16x32xf32>
    %cst_114 = arith.constant 9.99999996E-13 : f32
    %178 = vector.broadcast %cst_114 : f32 to vector<16x1xf32>
    %179 = arith.addf %175, %178 : vector<16x1xf32>
    %180 = math.rsqrt %179 : vector<16x1xf32>
    %181 = vector.broadcast %180 : vector<16x1xf32> to vector<16x32xf32>
    %182 = arith.mulf %177, %181 : vector<16x32xf32>
    %183 = vector.broadcast %162 : vector<1x32xf32> to vector<16x32xf32>
    %184 = arith.mulf %182, %183 : vector<16x32xf32>
    %185 = vector.broadcast %164 : vector<1x32xf32> to vector<16x32xf32>
    %186 = arith.addf %184, %185 : vector<16x32xf32>
    %c0_115 = arith.constant 0 : index
    %c0_116 = arith.constant 0 : index
    %c0_117 = arith.constant 0 : index
    %187 = vector.load %arg7[%c0_115, %c0_116, %c0_117] : memref<2x32x64xf32, #tpu.memory_space<vmem>>, vector<1x32x64xf32>
    %188 = vector.shape_cast %187 : vector<1x32x64xf32> to vector<32x64xf32>
    %cst_118 = arith.constant dense<0.000000e+00> : vector<16x64xf32>
    %189 = tpu.matmul %186, %188, %cst_118 {dimension_numbers = #tpu.dot_dimension_numbers<[1], [0], [0], [1], [0, 0, 1, 1], [], []>} : vector<16x32xf32>, vector<32x64xf32>, vector<16x64xf32> -> vector<16x64xf32>
    %c0_119 = arith.constant 0 : index
    %c0_120 = arith.constant 0 : index
    %c0_121 = arith.constant 0 : index
    %190 = vector.load %arg8[%c0_119, %c0_120, %c0_121] : memref<2x1x64xf32, #tpu.memory_space<vmem>>, vector<1x1x64xf32>
    %191 = vector.shape_cast %190 : vector<1x1x64xf32> to vector<1x64xf32>
    %192 = vector.broadcast %191 : vector<1x64xf32> to vector<16x64xf32>
    %193 = arith.addf %189, %192 : vector<16x64xf32>
    %cst_122 = arith.constant 5.000000e-01 : f32
    %194 = vector.broadcast %cst_122 : f32 to vector<16x64xf32>
    %195 = arith.mulf %194, %193 : vector<16x64xf32>
    %cst_123 = arith.constant 4.471500e-02 : f32
    %196 = vector.broadcast %cst_123 : f32 to vector<16x64xf32>
    %197 = arith.mulf %196, %193 : vector<16x64xf32>
    %198 = arith.mulf %197, %193 : vector<16x64xf32>
    %199 = arith.mulf %198, %193 : vector<16x64xf32>
    %200 = arith.addf %193, %199 : vector<16x64xf32>
    %cst_124 = arith.constant 0.797884583 : f32
    %201 = vector.broadcast %cst_124 : f32 to vector<16x64xf32>
    %202 = arith.mulf %201, %200 : vector<16x64xf32>
    %203 = math.tanh %202 : vector<16x64xf32>
    %cst_125 = arith.constant 1.000000e+00 : f32
    %204 = vector.broadcast %cst_125 : f32 to vector<16x64xf32>
    %205 = arith.addf %204, %203 : vector<16x64xf32>
    %206 = arith.mulf %195, %205 : vector<16x64xf32>
    %c0_126 = arith.constant 0 : index
    %c0_127 = arith.constant 0 : index
    %c0_128 = arith.constant 0 : index
    %207 = vector.load %arg9[%c0_126, %c0_127, %c0_128] : memref<2x64x32xf32, #tpu.memory_space<vmem>>, vector<1x64x32xf32>
    %208 = vector.shape_cast %207 : vector<1x64x32xf32> to vector<64x32xf32>
    %cst_129 = arith.constant dense<0.000000e+00> : vector<16x32xf32>
    %209 = tpu.matmul %206, %208, %cst_129 {dimension_numbers = #tpu.dot_dimension_numbers<[1], [0], [0], [1], [0, 0, 1, 1], [], []>} : vector<16x64xf32>, vector<64x32xf32>, vector<16x32xf32> -> vector<16x32xf32>
    %c0_130 = arith.constant 0 : index
    %c3_131 = arith.constant 3 : index
    %c0_132 = arith.constant 0 : index
    %c0_133 = arith.constant 0 : index
    %210 = vector.load %arg10[%c0_130, %c3_131, %c0_132, %c0_133] : memref<2x6x1x32xf32, #tpu.memory_space<vmem>>, vector<1x1x1x32xf32>
    %211 = vector.shape_cast %210 : vector<1x1x1x32xf32> to vector<1x32xf32>
    %212 = vector.broadcast %211 : vector<1x32xf32> to vector<16x32xf32>
    %213 = arith.addf %209, %212 : vector<16x32xf32>
    %214 = arith.addf %213, %186 : vector<16x32xf32>
    %c0_134 = arith.constant 0 : index
    %c4 = arith.constant 4 : index
    %c0_135 = arith.constant 0 : index
    %c0_136 = arith.constant 0 : index
    %215 = vector.load %arg10[%c0_134, %c4, %c0_135, %c0_136] : memref<2x6x1x32xf32, #tpu.memory_space<vmem>>, vector<1x1x1x32xf32>
    %216 = vector.shape_cast %215 : vector<1x1x1x32xf32> to vector<1x32xf32>
    %c0_137 = arith.constant 0 : index
    %c5 = arith.constant 5 : index
    %c0_138 = arith.constant 0 : index
    %c0_139 = arith.constant 0 : index
    %217 = vector.load %arg10[%c0_137, %c5, %c0_138, %c0_139] : memref<2x6x1x32xf32, #tpu.memory_space<vmem>>, vector<1x1x1x32xf32>
    %218 = vector.shape_cast %217 : vector<1x1x1x32xf32> to vector<1x32xf32>
    %cst_140 = arith.constant dense<0.000000e+00> : vector<16xf32>
    %219 = vector.multi_reduction <add>, %214, %cst_140 [1] : vector<16x32xf32> to vector<16xf32>
    %220 = vector.shape_cast %219 : vector<16xf32> to vector<16x1xf32>
    %cst_141 = arith.constant 3.200000e+01 : f32
    %221 = vector.broadcast %cst_141 : f32 to vector<16x1xf32>
    %222 = arith.divf %220, %221 : vector<16x1xf32>
    %223 = vector.broadcast %222 : vector<16x1xf32> to vector<16x32xf32>
    %224 = arith.subf %214, %223 : vector<16x32xf32>
    %225 = arith.mulf %224, %224 : vector<16x32xf32>
    %cst_142 = arith.constant dense<0.000000e+00> : vector<16xf32>
    %226 = vector.multi_reduction <add>, %225, %cst_142 [1] : vector<16x32xf32> to vector<16xf32>
    %227 = vector.shape_cast %226 : vector<16xf32> to vector<16x1xf32>
    %cst_143 = arith.constant 3.200000e+01 : f32
    %228 = vector.broadcast %cst_143 : f32 to vector<16x1xf32>
    %229 = arith.divf %227, %228 : vector<16x1xf32>
    %230 = vector.broadcast %222 : vector<16x1xf32> to vector<16x32xf32>
    %231 = arith.subf %214, %230 : vector<16x32xf32>
    %cst_144 = arith.constant 9.99999996E-13 : f32
    %232 = vector.broadcast %cst_144 : f32 to vector<16x1xf32>
    %233 = arith.addf %229, %232 : vector<16x1xf32>
    %234 = math.rsqrt %233 : vector<16x1xf32>
    %235 = vector.broadcast %234 : vector<16x1xf32> to vector<16x32xf32>
    %236 = arith.mulf %231, %235 : vector<16x32xf32>
    %237 = vector.broadcast %216 : vector<1x32xf32> to vector<16x32xf32>
    %238 = arith.mulf %236, %237 : vector<16x32xf32>
    %239 = vector.broadcast %218 : vector<1x32xf32> to vector<16x32xf32>
    %240 = arith.addf %238, %239 : vector<16x32xf32>
    %c1_145 = arith.constant 1 : index
    %c0_146 = arith.constant 0 : index
    %c0_147 = arith.constant 0 : index
    %241 = vector.load %arg11[%c1_145, %c0_146, %c0_147] : memref<3x16x32xf32, #tpu.memory_space<vmem>>, vector<1x16x32xf32>
    %242 = vector.shape_cast %241 : vector<1x16x32xf32> to vector<16x32xf32>
    %243 = vector.shape_cast %240 : vector<16x32xf32> to vector<1x16x32xf32>
    tpu.vector_store %arg11[%c1_145, %c0_146, %c0_147], %243 {strides = array<i32>} : memref<3x16x32xf32, #tpu.memory_space<vmem>>, vector<1x16x32xf32>,
    %c1_148 = arith.constant 1 : index
    %c0_149 = arith.constant 0 : index
    %c0_150 = arith.constant 0 : index
    %244 = vector.load %arg3[%c1_148, %c0_149, %c0_150] : memref<2x32x64xf32, #tpu.memory_space<vmem>>, vector<1x32x64xf32>
    %245 = vector.shape_cast %244 : vector<1x32x64xf32> to vector<32x64xf32>
    %cst_151 = arith.constant dense<0.000000e+00> : vector<16x64xf32>
    %246 = tpu.matmul %240, %245, %cst_151 {dimension_numbers = #tpu.dot_dimension_numbers<[1], [0], [0], [1], [0, 0, 1, 1], [], []>} : vector<16x32xf32>, vector<32x64xf32>, vector<16x64xf32> -> vector<16x64xf32>
    %c1_152 = arith.constant 1 : index
    %c0_153 = arith.constant 0 : index
    %c0_154 = arith.constant 0 : index
    %247 = vector.load %arg4[%c1_152, %c0_153, %c0_154] : memref<2x1x64xf32, #tpu.memory_space<vmem>>, vector<1x1x64xf32>
    %248 = vector.shape_cast %247 : vector<1x1x64xf32> to vector<1x64xf32>
    %249 = vector.broadcast %248 : vector<1x64xf32> to vector<16x64xf32>
    %250 = arith.addf %246, %249 : vector<16x64xf32>
    %251 = vector.extract_strided_slice %250 {offsets = [0, 0], sizes = [8, 32], strides = [1, 1]} : vector<16x64xf32> to vector<8x32xf32>
    %252 = vector.extract_strided_slice %250 {offsets = [0, 32], sizes = [8, 32], strides = [1, 1]} : vector<16x64xf32> to vector<8x32xf32>
    %253 = vector.extract_strided_slice %251 {offsets = [0, 0], sizes = [8, 8], strides = [1, 1]} : vector<8x32xf32> to vector<8x8xf32>
    %254 = vector.extract_strided_slice %252 {offsets = [0, 0], sizes = [8, 8], strides = [1, 1]} : vector<8x32xf32> to vector<8x8xf32>
    %cst_155 = arith.constant dense<0.000000e+00> : vector<8x8xf32>
    %255 = tpu.matmul %253, %254, %cst_155 {dimension_numbers = #tpu.dot_dimension_numbers<[1], [1], [0], [0], [0, 0, 1, 0], [], []>} : vector<8x8xf32>, vector<8x8xf32>, vector<8x8xf32> -> vector<8x8xf32>
    %c0_156 = arith.constant 0 : index
    %c0_157 = arith.constant 0 : index
    %256 = vector.load %arg13[%c0_156, %c0_157] : memref<64x8xf32, #tpu.memory_space<vmem>>, vector<8x8xf32>
    tpu.vector_store %arg13[%c0_156, %c0_157], %255 {strides = array<i32>} : memref<64x8xf32, #tpu.memory_space<vmem>>, vector<8x8xf32>,
    %257 = vector.extract_strided_slice %251 {offsets = [0, 8], sizes = [8, 8], strides = [1, 1]} : vector<8x32xf32> to vector<8x8xf32>
    %258 = vector.extract_strided_slice %252 {offsets = [0, 8], sizes = [8, 8], strides = [1, 1]} : vector<8x32xf32> to vector<8x8xf32>
    %cst_158 = arith.constant dense<0.000000e+00> : vector<8x8xf32>
    %259 = tpu.matmul %257, %258, %cst_158 {dimension_numbers = #tpu.dot_dimension_numbers<[1], [1], [0], [0], [0, 0, 1, 0], [], []>} : vector<8x8xf32>, vector<8x8xf32>, vector<8x8xf32> -> vector<8x8xf32>
    %c8_159 = arith.constant 8 : index
    %c0_160 = arith.constant 0 : index
    %260 = vector.load %arg13[%c8_159, %c0_160] : memref<64x8xf32, #tpu.memory_space<vmem>>, vector<8x8xf32>
    tpu.vector_store %arg13[%c8_159, %c0_160], %259 {strides = array<i32>} : memref<64x8xf32, #tpu.memory_space<vmem>>, vector<8x8xf32>,
    %261 = vector.extract_strided_slice %251 {offsets = [0, 16], sizes = [8, 8], strides = [1, 1]} : vector<8x32xf32> to vector<8x8xf32>
    %262 = vector.extract_strided_slice %252 {offsets = [0, 16], sizes = [8, 8], strides = [1, 1]} : vector<8x32xf32> to vector<8x8xf32>
    %cst_161 = arith.constant dense<0.000000e+00> : vector<8x8xf32>
    %263 = tpu.matmul %261, %262, %cst_161 {dimension_numbers = #tpu.dot_dimension_numbers<[1], [1], [0], [0], [0, 0, 1, 0], [], []>} : vector<8x8xf32>, vector<8x8xf32>, vector<8x8xf32> -> vector<8x8xf32>
    %c16_162 = arith.constant 16 : index
    %c0_163 = arith.constant 0 : index
    %264 = vector.load %arg13[%c16_162, %c0_163] : memref<64x8xf32, #tpu.memory_space<vmem>>, vector<8x8xf32>
    tpu.vector_store %arg13[%c16_162, %c0_163], %263 {strides = array<i32>} : memref<64x8xf32, #tpu.memory_space<vmem>>, vector<8x8xf32>,
    %265 = vector.extract_strided_slice %251 {offsets = [0, 24], sizes = [8, 8], strides = [1, 1]} : vector<8x32xf32> to vector<8x8xf32>
    %266 = vector.extract_strided_slice %252 {offsets = [0, 24], sizes = [8, 8], strides = [1, 1]} : vector<8x32xf32> to vector<8x8xf32>
    %cst_164 = arith.constant dense<0.000000e+00> : vector<8x8xf32>
    %267 = tpu.matmul %265, %266, %cst_164 {dimension_numbers = #tpu.dot_dimension_numbers<[1], [1], [0], [0], [0, 0, 1, 0], [], []>} : vector<8x8xf32>, vector<8x8xf32>, vector<8x8xf32> -> vector<8x8xf32>
    %c24_165 = arith.constant 24 : index
    %c0_166 = arith.constant 0 : index
    %268 = vector.load %arg13[%c24_165, %c0_166] : memref<64x8xf32, #tpu.memory_space<vmem>>, vector<8x8xf32>
    tpu.vector_store %arg13[%c24_165, %c0_166], %267 {strides = array<i32>} : memref<64x8xf32, #tpu.memory_space<vmem>>, vector<8x8xf32>,
    %269 = vector.extract_strided_slice %250 {offsets = [8, 0], sizes = [8, 32], strides = [1, 1]} : vector<16x64xf32> to vector<8x32xf32>
    %270 = vector.extract_strided_slice %250 {offsets = [8, 32], sizes = [8, 32], strides = [1, 1]} : vector<16x64xf32> to vector<8x32xf32>
    %271 = vector.extract_strided_slice %269 {offsets = [0, 0], sizes = [8, 8], strides = [1, 1]} : vector<8x32xf32> to vector<8x8xf32>
    %272 = vector.extract_strided_slice %270 {offsets = [0, 0], sizes = [8, 8], strides = [1, 1]} : vector<8x32xf32> to vector<8x8xf32>
    %cst_167 = arith.constant dense<0.000000e+00> : vector<8x8xf32>
    %273 = tpu.matmul %271, %272, %cst_167 {dimension_numbers = #tpu.dot_dimension_numbers<[1], [1], [0], [0], [0, 0, 1, 0], [], []>} : vector<8x8xf32>, vector<8x8xf32>, vector<8x8xf32> -> vector<8x8xf32>
    %c32_168 = arith.constant 32 : index
    %c0_169 = arith.constant 0 : index
    %274 = vector.load %arg13[%c32_168, %c0_169] : memref<64x8xf32, #tpu.memory_space<vmem>>, vector<8x8xf32>
    tpu.vector_store %arg13[%c32_168, %c0_169], %273 {strides = array<i32>} : memref<64x8xf32, #tpu.memory_space<vmem>>, vector<8x8xf32>,
    %275 = vector.extract_strided_slice %269 {offsets = [0, 8], sizes = [8, 8], strides = [1, 1]} : vector<8x32xf32> to vector<8x8xf32>
    %276 = vector.extract_strided_slice %270 {offsets = [0, 8], sizes = [8, 8], strides = [1, 1]} : vector<8x32xf32> to vector<8x8xf32>
    %cst_170 = arith.constant dense<0.000000e+00> : vector<8x8xf32>
    %277 = tpu.matmul %275, %276, %cst_170 {dimension_numbers = #tpu.dot_dimension_numbers<[1], [1], [0], [0], [0, 0, 1, 0], [], []>} : vector<8x8xf32>, vector<8x8xf32>, vector<8x8xf32> -> vector<8x8xf32>
    %c40_171 = arith.constant 40 : index
    %c0_172 = arith.constant 0 : index
    %278 = vector.load %arg13[%c40_171, %c0_172] : memref<64x8xf32, #tpu.memory_space<vmem>>, vector<8x8xf32>
    tpu.vector_store %arg13[%c40_171, %c0_172], %277 {strides = array<i32>} : memref<64x8xf32, #tpu.memory_space<vmem>>, vector<8x8xf32>,
    %279 = vector.extract_strided_slice %269 {offsets = [0, 16], sizes = [8, 8], strides = [1, 1]} : vector<8x32xf32> to vector<8x8xf32>
    %280 = vector.extract_strided_slice %270 {offsets = [0, 16], sizes = [8, 8], strides = [1, 1]} : vector<8x32xf32> to vector<8x8xf32>
    %cst_173 = arith.constant dense<0.000000e+00> : vector<8x8xf32>
    %281 = tpu.matmul %279, %280, %cst_173 {dimension_numbers = #tpu.dot_dimension_numbers<[1], [1], [0], [0], [0, 0, 1, 0], [], []>} : vector<8x8xf32>, vector<8x8xf32>, vector<8x8xf32> -> vector<8x8xf32>
    %c48_174 = arith.constant 48 : index
    %c0_175 = arith.constant 0 : index
    %282 = vector.load %arg13[%c48_174, %c0_175] : memref<64x8xf32, #tpu.memory_space<vmem>>, vector<8x8xf32>
    tpu.vector_store %arg13[%c48_174, %c0_175], %281 {strides = array<i32>} : memref<64x8xf32, #tpu.memory_space<vmem>>, vector<8x8xf32>,
    %283 = vector.extract_strided_slice %269 {offsets = [0, 24], sizes = [8, 8], strides = [1, 1]} : vector<8x32xf32> to vector<8x8xf32>
    %284 = vector.extract_strided_slice %270 {offsets = [0, 24], sizes = [8, 8], strides = [1, 1]} : vector<8x32xf32> to vector<8x8xf32>
    %cst_176 = arith.constant dense<0.000000e+00> : vector<8x8xf32>
    %285 = tpu.matmul %283, %284, %cst_176 {dimension_numbers = #tpu.dot_dimension_numbers<[1], [1], [0], [0], [0, 0, 1, 0], [], []>} : vector<8x8xf32>, vector<8x8xf32>, vector<8x8xf32> -> vector<8x8xf32>
    %c56_177 = arith.constant 56 : index
    %c0_178 = arith.constant 0 : index
    %286 = vector.load %arg13[%c56_177, %c0_178] : memref<64x8xf32, #tpu.memory_space<vmem>>, vector<8x8xf32>
    tpu.vector_store %arg13[%c56_177, %c0_178], %285 {strides = array<i32>} : memref<64x8xf32, #tpu.memory_space<vmem>>, vector<8x8xf32>,
    %c0_179 = arith.constant 0 : index
    %c0_180 = arith.constant 0 : index
    %287 = vector.load %arg13[%c0_179, %c0_180] : memref<64x8xf32, #tpu.memory_space<vmem>>, vector<64x8xf32>
    %288 = arith.addf %287, %0 : vector<64x8xf32>
    %cst_181 = arith.constant dense<0xFF800000> : vector<64xf32>
    %289 = vector.multi_reduction <maximumf>, %288, %cst_181 [1] : vector<64x8xf32> to vector<64xf32>
    %290 = vector.shape_cast %289 : vector<64xf32> to vector<64x1xf32>
    %291 = vector.broadcast %290 : vector<64x1xf32> to vector<64x8xf32>
    %292 = arith.subf %288, %291 : vector<64x8xf32>
    %293 = math.exp %292 : vector<64x8xf32>
    %cst_182 = arith.constant dense<0.000000e+00> : vector<64xf32>
    %294 = vector.multi_reduction <add>, %293, %cst_182 [1] : vector<64x8xf32> to vector<64xf32>
    %295 = vector.shape_cast %294 : vector<64xf32> to vector<64x1xf32>
    %296 = vector.broadcast %295 : vector<64x1xf32> to vector<64x8xf32>
    %297 = arith.divf %293, %296 : vector<64x8xf32>
    %c1_183 = arith.constant 1 : index
    %c0_184 = arith.constant 0 : index
    %c0_185 = arith.constant 0 : index
    %298 = vector.load %arg12[%c1_183, %c0_184, %c0_185] : memref<2x64x8xf32, #tpu.memory_space<vmem>>, vector<1x64x8xf32>
    %299 = vector.shape_cast %298 : vector<1x64x8xf32> to vector<64x8xf32>
    %300 = vector.shape_cast %297 : vector<64x8xf32> to vector<1x64x8xf32>
    tpu.vector_store %arg12[%c1_183, %c0_184, %c0_185], %300 {strides = array<i32>} : memref<2x64x8xf32, #tpu.memory_space<vmem>>, vector<1x64x8xf32>,
    %c1_186 = arith.constant 1 : index
    %c0_187 = arith.constant 0 : index
    %c0_188 = arith.constant 0 : index
    %c0_189 = arith.constant 0 : index
    %301 = vector.load %arg5[%c1_186, %c0_187, %c0_188, %c0_189] : memref<2x4x32x32xf32, #tpu.memory_space<vmem>>, vector<1x1x32x32xf32>
    %302 = vector.shape_cast %301 : vector<1x1x32x32xf32> to vector<32x32xf32>
    %cst_190 = arith.constant dense<0.000000e+00> : vector<16x32xf32>
    %303 = tpu.matmul %240, %302, %cst_190 {dimension_numbers = #tpu.dot_dimension_numbers<[1], [0], [0], [1], [0, 0, 1, 1], [], []>} : vector<16x32xf32>, vector<32x32xf32>, vector<16x32xf32> -> vector<16x32xf32>
    %c1_191 = arith.constant 1 : index
    %c0_192 = arith.constant 0 : index
    %c0_193 = arith.constant 0 : index
    %c0_194 = arith.constant 0 : index
    %304 = vector.load %arg6[%c1_191, %c0_192, %c0_193, %c0_194] : memref<2x4x1x32xf32, #tpu.memory_space<vmem>>, vector<1x1x1x32xf32>
    %305 = vector.shape_cast %304 : vector<1x1x1x32xf32> to vector<1x32xf32>
    %306 = vector.broadcast %305 : vector<1x32xf32> to vector<16x32xf32>
    %307 = arith.addf %303, %306 : vector<16x32xf32>
    %c1_195 = arith.constant 1 : index
    %c1_196 = arith.constant 1 : index
    %c0_197 = arith.constant 0 : index
    %c0_198 = arith.constant 0 : index
    %308 = vector.load %arg5[%c1_195, %c1_196, %c0_197, %c0_198] : memref<2x4x32x32xf32, #tpu.memory_space<vmem>>, vector<1x1x32x32xf32>
    %309 = vector.shape_cast %308 : vector<1x1x32x32xf32> to vector<32x32xf32>
    %cst_199 = arith.constant dense<0.000000e+00> : vector<16x32xf32>
    %310 = tpu.matmul %240, %309, %cst_199 {dimension_numbers = #tpu.dot_dimension_numbers<[1], [0], [0], [1], [0, 0, 1, 1], [], []>} : vector<16x32xf32>, vector<32x32xf32>, vector<16x32xf32> -> vector<16x32xf32>
    %c1_200 = arith.constant 1 : index
    %c1_201 = arith.constant 1 : index
    %c0_202 = arith.constant 0 : index
    %c0_203 = arith.constant 0 : index
    %311 = vector.load %arg6[%c1_200, %c1_201, %c0_202, %c0_203] : memref<2x4x1x32xf32, #tpu.memory_space<vmem>>, vector<1x1x1x32xf32>
    %312 = vector.shape_cast %311 : vector<1x1x1x32xf32> to vector<1x32xf32>
    %313 = vector.broadcast %312 : vector<1x32xf32> to vector<16x32xf32>
    %314 = arith.addf %310, %313 : vector<16x32xf32>
    %c1_204 = arith.constant 1 : index
    %c2_205 = arith.constant 2 : index
    %c0_206 = arith.constant 0 : index
    %c0_207 = arith.constant 0 : index
    %315 = vector.load %arg5[%c1_204, %c2_205, %c0_206, %c0_207] : memref<2x4x32x32xf32, #tpu.memory_space<vmem>>, vector<1x1x32x32xf32>
    %316 = vector.shape_cast %315 : vector<1x1x32x32xf32> to vector<32x32xf32>
    %cst_208 = arith.constant dense<0.000000e+00> : vector<16x32xf32>
    %317 = tpu.matmul %240, %316, %cst_208 {dimension_numbers = #tpu.dot_dimension_numbers<[1], [0], [0], [1], [0, 0, 1, 1], [], []>} : vector<16x32xf32>, vector<32x32xf32>, vector<16x32xf32> -> vector<16x32xf32>
    %c1_209 = arith.constant 1 : index
    %c2_210 = arith.constant 2 : index
    %c0_211 = arith.constant 0 : index
    %c0_212 = arith.constant 0 : index
    %318 = vector.load %arg6[%c1_209, %c2_210, %c0_211, %c0_212] : memref<2x4x1x32xf32, #tpu.memory_space<vmem>>, vector<1x1x1x32xf32>
    %319 = vector.shape_cast %318 : vector<1x1x1x32xf32> to vector<1x32xf32>
    %320 = vector.broadcast %319 : vector<1x32xf32> to vector<16x32xf32>
    %321 = arith.addf %317, %320 : vector<16x32xf32>
    %c1_213 = arith.constant 1 : index
    %c3_214 = arith.constant 3 : index
    %c0_215 = arith.constant 0 : index
    %c0_216 = arith.constant 0 : index
    %322 = vector.load %arg5[%c1_213, %c3_214, %c0_215, %c0_216] : memref<2x4x32x32xf32, #tpu.memory_space<vmem>>, vector<1x1x32x32xf32>
    %323 = vector.shape_cast %322 : vector<1x1x32x32xf32> to vector<32x32xf32>
    %cst_217 = arith.constant dense<0.000000e+00> : vector<16x32xf32>
    %324 = tpu.matmul %240, %323, %cst_217 {dimension_numbers = #tpu.dot_dimension_numbers<[1], [0], [0], [1], [0, 0, 1, 1], [], []>} : vector<16x32xf32>, vector<32x32xf32>, vector<16x32xf32> -> vector<16x32xf32>
    %c1_218 = arith.constant 1 : index
    %c3_219 = arith.constant 3 : index
    %c0_220 = arith.constant 0 : index
    %c0_221 = arith.constant 0 : index
    %325 = vector.load %arg6[%c1_218, %c3_219, %c0_220, %c0_221] : memref<2x4x1x32xf32, #tpu.memory_space<vmem>>, vector<1x1x1x32xf32>
    %326 = vector.shape_cast %325 : vector<1x1x1x32xf32> to vector<1x32xf32>
    %327 = vector.broadcast %326 : vector<1x32xf32> to vector<16x32xf32>
    %328 = arith.addf %324, %327 : vector<16x32xf32>
    %329 = vector.extract_strided_slice %240 {offsets = [0, 0], sizes = [8, 32], strides = [1, 1]} : vector<16x32xf32> to vector<8x32xf32>
    %c1_222 = arith.constant 1 : index
    %c0_223 = arith.constant 0 : index
    %c0_224 = arith.constant 0 : index
    %c0_225 = arith.constant 0 : index
    %330 = vector.load %arg10[%c1_222, %c0_223, %c0_224, %c0_225] : memref<2x6x1x32xf32, #tpu.memory_space<vmem>>, vector<1x1x1x32xf32>
    %331 = vector.shape_cast %330 : vector<1x1x1x32xf32> to vector<1x32xf32>
    %332 = vector.broadcast %331 : vector<1x32xf32> to vector<8x32xf32>
    %333 = arith.addf %329, %332 : vector<8x32xf32>
    %334 = vector.extract_strided_slice %297 {offsets = [0, 0], sizes = [8, 8], strides = [1, 1]} : vector<64x8xf32> to vector<8x8xf32>
    %335 = vector.extract_strided_slice %307 {offsets = [0, 0], sizes = [8, 32], strides = [1, 1]} : vector<16x32xf32> to vector<8x32xf32>
    %cst_226 = arith.constant dense<0.000000e+00> : vector<8x32xf32>
    %336 = tpu.matmul %334, %335, %cst_226 {dimension_numbers = #tpu.dot_dimension_numbers<[1], [0], [0], [1], [0, 0, 1, 1], [], []>} : vector<8x8xf32>, vector<8x32xf32>, vector<8x32xf32> -> vector<8x32xf32>
    %337 = arith.addf %333, %336 : vector<8x32xf32>
    %338 = vector.extract_strided_slice %297 {offsets = [8, 0], sizes = [8, 8], strides = [1, 1]} : vector<64x8xf32> to vector<8x8xf32>
    %339 = vector.extract_strided_slice %314 {offsets = [0, 0], sizes = [8, 32], strides = [1, 1]} : vector<16x32xf32> to vector<8x32xf32>
    %cst_227 = arith.constant dense<0.000000e+00> : vector<8x32xf32>
    %340 = tpu.matmul %338, %339, %cst_227 {dimension_numbers = #tpu.dot_dimension_numbers<[1], [0], [0], [1], [0, 0, 1, 1], [], []>} : vector<8x8xf32>, vector<8x32xf32>, vector<8x32xf32> -> vector<8x32xf32>
    %341 = arith.addf %337, %340 : vector<8x32xf32>
    %342 = vector.extract_strided_slice %297 {offsets = [16, 0], sizes = [8, 8], strides = [1, 1]} : vector<64x8xf32> to vector<8x8xf32>
    %343 = vector.extract_strided_slice %321 {offsets = [0, 0], sizes = [8, 32], strides = [1, 1]} : vector<16x32xf32> to vector<8x32xf32>
    %cst_228 = arith.constant dense<0.000000e+00> : vector<8x32xf32>
    %344 = tpu.matmul %342, %343, %cst_228 {dimension_numbers = #tpu.dot_dimension_numbers<[1], [0], [0], [1], [0, 0, 1, 1], [], []>} : vector<8x8xf32>, vector<8x32xf32>, vector<8x32xf32> -> vector<8x32xf32>
    %345 = arith.addf %341, %344 : vector<8x32xf32>
    %346 = vector.extract_strided_slice %297 {offsets = [24, 0], sizes = [8, 8], strides = [1, 1]} : vector<64x8xf32> to vector<8x8xf32>
    %347 = vector.extract_strided_slice %328 {offsets = [0, 0], sizes = [8, 32], strides = [1, 1]} : vector<16x32xf32> to vector<8x32xf32>
    %cst_229 = arith.constant dense<0.000000e+00> : vector<8x32xf32>
    %348 = tpu.matmul %346, %347, %cst_229 {dimension_numbers = #tpu.dot_dimension_numbers<[1], [0], [0], [1], [0, 0, 1, 1], [], []>} : vector<8x8xf32>, vector<8x32xf32>, vector<8x32xf32> -> vector<8x32xf32>
    %349 = arith.addf %345, %348 : vector<8x32xf32>
    %c0_230 = arith.constant 0 : index
    %c0_231 = arith.constant 0 : index
    %350 = vector.load %arg14[%c0_230, %c0_231] : memref<16x32xf32, #tpu.memory_space<vmem>>, vector<8x32xf32>
    tpu.vector_store %arg14[%c0_230, %c0_231], %349 {strides = array<i32>} : memref<16x32xf32, #tpu.memory_space<vmem>>, vector<8x32xf32>,
    %351 = vector.extract_strided_slice %240 {offsets = [8, 0], sizes = [8, 32], strides = [1, 1]} : vector<16x32xf32> to vector<8x32xf32>
    %c1_232 = arith.constant 1 : index
    %c0_233 = arith.constant 0 : index
    %c0_234 = arith.constant 0 : index
    %c0_235 = arith.constant 0 : index
    %352 = vector.load %arg10[%c1_232, %c0_233, %c0_234, %c0_235] : memref<2x6x1x32xf32, #tpu.memory_space<vmem>>, vector<1x1x1x32xf32>
    %353 = vector.shape_cast %352 : vector<1x1x1x32xf32> to vector<1x32xf32>
    %354 = vector.broadcast %353 : vector<1x32xf32> to vector<8x32xf32>
    %355 = arith.addf %351, %354 : vector<8x32xf32>
    %356 = vector.extract_strided_slice %297 {offsets = [32, 0], sizes = [8, 8], strides = [1, 1]} : vector<64x8xf32> to vector<8x8xf32>
    %357 = vector.extract_strided_slice %307 {offsets = [8, 0], sizes = [8, 32], strides = [1, 1]} : vector<16x32xf32> to vector<8x32xf32>
    %cst_236 = arith.constant dense<0.000000e+00> : vector<8x32xf32>
    %358 = tpu.matmul %356, %357, %cst_236 {dimension_numbers = #tpu.dot_dimension_numbers<[1], [0], [0], [1], [0, 0, 1, 1], [], []>} : vector<8x8xf32>, vector<8x32xf32>, vector<8x32xf32> -> vector<8x32xf32>
    %359 = arith.addf %355, %358 : vector<8x32xf32>
    %360 = vector.extract_strided_slice %297 {offsets = [40, 0], sizes = [8, 8], strides = [1, 1]} : vector<64x8xf32> to vector<8x8xf32>
    %361 = vector.extract_strided_slice %314 {offsets = [8, 0], sizes = [8, 32], strides = [1, 1]} : vector<16x32xf32> to vector<8x32xf32>
    %cst_237 = arith.constant dense<0.000000e+00> : vector<8x32xf32>
    %362 = tpu.matmul %360, %361, %cst_237 {dimension_numbers = #tpu.dot_dimension_numbers<[1], [0], [0], [1], [0, 0, 1, 1], [], []>} : vector<8x8xf32>, vector<8x32xf32>, vector<8x32xf32> -> vector<8x32xf32>
    %363 = arith.addf %359, %362 : vector<8x32xf32>
    %364 = vector.extract_strided_slice %297 {offsets = [48, 0], sizes = [8, 8], strides = [1, 1]} : vector<64x8xf32> to vector<8x8xf32>
    %365 = vector.extract_strided_slice %321 {offsets = [8, 0], sizes = [8, 32], strides = [1, 1]} : vector<16x32xf32> to vector<8x32xf32>
    %cst_238 = arith.constant dense<0.000000e+00> : vector<8x32xf32>
    %366 = tpu.matmul %364, %365, %cst_238 {dimension_numbers = #tpu.dot_dimension_numbers<[1], [0], [0], [1], [0, 0, 1, 1], [], []>} : vector<8x8xf32>, vector<8x32xf32>, vector<8x32xf32> -> vector<8x32xf32>
    %367 = arith.addf %363, %366 : vector<8x32xf32>
    %368 = vector.extract_strided_slice %297 {offsets = [56, 0], sizes = [8, 8], strides = [1, 1]} : vector<64x8xf32> to vector<8x8xf32>
    %369 = vector.extract_strided_slice %328 {offsets = [8, 0], sizes = [8, 32], strides = [1, 1]} : vector<16x32xf32> to vector<8x32xf32>
    %cst_239 = arith.constant dense<0.000000e+00> : vector<8x32xf32>
    %370 = tpu.matmul %368, %369, %cst_239 {dimension_numbers = #tpu.dot_dimension_numbers<[1], [0], [0], [1], [0, 0, 1, 1], [], []>} : vector<8x8xf32>, vector<8x32xf32>, vector<8x32xf32> -> vector<8x32xf32>
    %371 = arith.addf %367, %370 : vector<8x32xf32>
    %c8_240 = arith.constant 8 : index
    %c0_241 = arith.constant 0 : index
    %372 = vector.load %arg14[%c8_240, %c0_241] : memref<16x32xf32, #tpu.memory_space<vmem>>, vector<8x32xf32>
    tpu.vector_store %arg14[%c8_240, %c0_241], %371 {strides = array<i32>} : memref<16x32xf32, #tpu.memory_space<vmem>>, vector<8x32xf32>,
    %c0_242 = arith.constant 0 : index
    %c0_243 = arith.constant 0 : index
    %373 = vector.load %arg14[%c0_242, %c0_243] : memref<16x32xf32, #tpu.memory_space<vmem>>, vector<16x32xf32>
    %c1_244 = arith.constant 1 : index
    %c1_245 = arith.constant 1 : index
    %c0_246 = arith.constant 0 : index
    %c0_247 = arith.constant 0 : index
    %374 = vector.load %arg10[%c1_244, %c1_245, %c0_246, %c0_247] : memref<2x6x1x32xf32, #tpu.memory_space<vmem>>, vector<1x1x1x32xf32>
    %375 = vector.shape_cast %374 : vector<1x1x1x32xf32> to vector<1x32xf32>
    %c1_248 = arith.constant 1 : index
    %c2_249 = arith.constant 2 : index
    %c0_250 = arith.constant 0 : index
    %c0_251 = arith.constant 0 : index
    %376 = vector.load %arg10[%c1_248, %c2_249, %c0_250, %c0_251] : memref<2x6x1x32xf32, #tpu.memory_space<vmem>>, vector<1x1x1x32xf32>
    %377 = vector.shape_cast %376 : vector<1x1x1x32xf32> to vector<1x32xf32>
    %cst_252 = arith.constant dense<0.000000e+00> : vector<16xf32>
    %378 = vector.multi_reduction <add>, %373, %cst_252 [1] : vector<16x32xf32> to vector<16xf32>
    %379 = vector.shape_cast %378 : vector<16xf32> to vector<16x1xf32>
    %cst_253 = arith.constant 3.200000e+01 : f32
    %380 = vector.broadcast %cst_253 : f32 to vector<16x1xf32>
    %381 = arith.divf %379, %380 : vector<16x1xf32>
    %382 = vector.broadcast %381 : vector<16x1xf32> to vector<16x32xf32>
    %383 = arith.subf %373, %382 : vector<16x32xf32>
    %384 = arith.mulf %383, %383 : vector<16x32xf32>
    %cst_254 = arith.constant dense<0.000000e+00> : vector<16xf32>
    %385 = vector.multi_reduction <add>, %384, %cst_254 [1] : vector<16x32xf32> to vector<16xf32>
    %386 = vector.shape_cast %385 : vector<16xf32> to vector<16x1xf32>
    %cst_255 = arith.constant 3.200000e+01 : f32
    %387 = vector.broadcast %cst_255 : f32 to vector<16x1xf32>
    %388 = arith.divf %386, %387 : vector<16x1xf32>
    %389 = vector.broadcast %381 : vector<16x1xf32> to vector<16x32xf32>
    %390 = arith.subf %373, %389 : vector<16x32xf32>
    %cst_256 = arith.constant 9.99999996E-13 : f32
    %391 = vector.broadcast %cst_256 : f32 to vector<16x1xf32>
    %392 = arith.addf %388, %391 : vector<16x1xf32>
    %393 = math.rsqrt %392 : vector<16x1xf32>
    %394 = vector.broadcast %393 : vector<16x1xf32> to vector<16x32xf32>
    %395 = arith.mulf %390, %394 : vector<16x32xf32>
    %396 = vector.broadcast %375 : vector<1x32xf32> to vector<16x32xf32>
    %397 = arith.mulf %395, %396 : vector<16x32xf32>
    %398 = vector.broadcast %377 : vector<1x32xf32> to vector<16x32xf32>
    %399 = arith.addf %397, %398 : vector<16x32xf32>
    %c1_257 = arith.constant 1 : index
    %c0_258 = arith.constant 0 : index
    %c0_259 = arith.constant 0 : index
    %400 = vector.load %arg7[%c1_257, %c0_258, %c0_259] : memref<2x32x64xf32, #tpu.memory_space<vmem>>, vector<1x32x64xf32>
    %401 = vector.shape_cast %400 : vector<1x32x64xf32> to vector<32x64xf32>
    %cst_260 = arith.constant dense<0.000000e+00> : vector<16x64xf32>
    %402 = tpu.matmul %399, %401, %cst_260 {dimension_numbers = #tpu.dot_dimension_numbers<[1], [0], [0], [1], [0, 0, 1, 1], [], []>} : vector<16x32xf32>, vector<32x64xf32>, vector<16x64xf32> -> vector<16x64xf32>
    %c1_261 = arith.constant 1 : index
    %c0_262 = arith.constant 0 : index
    %c0_263 = arith.constant 0 : index
    %403 = vector.load %arg8[%c1_261, %c0_262, %c0_263] : memref<2x1x64xf32, #tpu.memory_space<vmem>>, vector<1x1x64xf32>
    %404 = vector.shape_cast %403 : vector<1x1x64xf32> to vector<1x64xf32>
    %405 = vector.broadcast %404 : vector<1x64xf32> to vector<16x64xf32>
    %406 = arith.addf %402, %405 : vector<16x64xf32>
    %cst_264 = arith.constant 5.000000e-01 : f32
    %407 = vector.broadcast %cst_264 : f32 to vector<16x64xf32>
    %408 = arith.mulf %407, %406 : vector<16x64xf32>
    %cst_265 = arith.constant 4.471500e-02 : f32
    %409 = vector.broadcast %cst_265 : f32 to vector<16x64xf32>
    %410 = arith.mulf %409, %406 : vector<16x64xf32>
    %411 = arith.mulf %410, %406 : vector<16x64xf32>
    %412 = arith.mulf %411, %406 : vector<16x64xf32>
    %413 = arith.addf %406, %412 : vector<16x64xf32>
    %cst_266 = arith.constant 0.797884583 : f32
    %414 = vector.broadcast %cst_266 : f32 to vector<16x64xf32>
    %415 = arith.mulf %414, %413 : vector<16x64xf32>
    %416 = math.tanh %415 : vector<16x64xf32>
    %cst_267 = arith.constant 1.000000e+00 : f32
    %417 = vector.broadcast %cst_267 : f32 to vector<16x64xf32>
    %418 = arith.addf %417, %416 : vector<16x64xf32>
    %419 = arith.mulf %408, %418 : vector<16x64xf32>
    %c1_268 = arith.constant 1 : index
    %c0_269 = arith.constant 0 : index
    %c0_270 = arith.constant 0 : index
    %420 = vector.load %arg9[%c1_268, %c0_269, %c0_270] : memref<2x64x32xf32, #tpu.memory_space<vmem>>, vector<1x64x32xf32>
    %421 = vector.shape_cast %420 : vector<1x64x32xf32> to vector<64x32xf32>
    %cst_271 = arith.constant dense<0.000000e+00> : vector<16x32xf32>
    %422 = tpu.matmul %419, %421, %cst_271 {dimension_numbers = #tpu.dot_dimension_numbers<[1], [0], [0], [1], [0, 0, 1, 1], [], []>} : vector<16x64xf32>, vector<64x32xf32>, vector<16x32xf32> -> vector<16x32xf32>
    %c1_272 = arith.constant 1 : index
    %c3_273 = arith.constant 3 : index
    %c0_274 = arith.constant 0 : index
    %c0_275 = arith.constant 0 : index
    %423 = vector.load %arg10[%c1_272, %c3_273, %c0_274, %c0_275] : memref<2x6x1x32xf32, #tpu.memory_space<vmem>>, vector<1x1x1x32xf32>
    %424 = vector.shape_cast %423 : vector<1x1x1x32xf32> to vector<1x32xf32>
    %425 = vector.broadcast %424 : vector<1x32xf32> to vector<16x32xf32>
    %426 = arith.addf %422, %425 : vector<16x32xf32>
    %427 = arith.addf %426, %399 : vector<16x32xf32>
    %c1_276 = arith.constant 1 : index
    %c4_277 = arith.constant 4 : index
    %c0_278 = arith.constant 0 : index
    %c0_279 = arith.constant 0 : index
    %428 = vector.load %arg10[%c1_276, %c4_277, %c0_278, %c0_279] : memref<2x6x1x32xf32, #tpu.memory_space<vmem>>, vector<1x1x1x32xf32>
    %429 = vector.shape_cast %428 : vector<1x1x1x32xf32> to vector<1x32xf32>
    %c1_280 = arith.constant 1 : index
    %c5_281 = arith.constant 5 : index
    %c0_282 = arith.constant 0 : index
    %c0_283 = arith.constant 0 : index
    %430 = vector.load %arg10[%c1_280, %c5_281, %c0_282, %c0_283] : memref<2x6x1x32xf32, #tpu.memory_space<vmem>>, vector<1x1x1x32xf32>
    %431 = vector.shape_cast %430 : vector<1x1x1x32xf32> to vector<1x32xf32>
    %cst_284 = arith.constant dense<0.000000e+00> : vector<16xf32>
    %432 = vector.multi_reduction <add>, %427, %cst_284 [1] : vector<16x32xf32> to vector<16xf32>
    %433 = vector.shape_cast %432 : vector<16xf32> to vector<16x1xf32>
    %cst_285 = arith.constant 3.200000e+01 : f32
    %434 = vector.broadcast %cst_285 : f32 to vector<16x1xf32>
    %435 = arith.divf %433, %434 : vector<16x1xf32>
    %436 = vector.broadcast %435 : vector<16x1xf32> to vector<16x32xf32>
    %437 = arith.subf %427, %436 : vector<16x32xf32>
    %438 = arith.mulf %437, %437 : vector<16x32xf32>
    %cst_286 = arith.constant dense<0.000000e+00> : vector<16xf32>
    %439 = vector.multi_reduction <add>, %438, %cst_286 [1] : vector<16x32xf32> to vector<16xf32>
    %440 = vector.shape_cast %439 : vector<16xf32> to vector<16x1xf32>
    %cst_287 = arith.constant 3.200000e+01 : f32
    %441 = vector.broadcast %cst_287 : f32 to vector<16x1xf32>
    %442 = arith.divf %440, %441 : vector<16x1xf32>
    %443 = vector.broadcast %435 : vector<16x1xf32> to vector<16x32xf32>
    %444 = arith.subf %427, %443 : vector<16x32xf32>
    %cst_288 = arith.constant 9.99999996E-13 : f32
    %445 = vector.broadcast %cst_288 : f32 to vector<16x1xf32>
    %446 = arith.addf %442, %445 : vector<16x1xf32>
    %447 = math.rsqrt %446 : vector<16x1xf32>
    %448 = vector.broadcast %447 : vector<16x1xf32> to vector<16x32xf32>
    %449 = arith.mulf %444, %448 : vector<16x32xf32>
    %450 = vector.broadcast %429 : vector<1x32xf32> to vector<16x32xf32>
    %451 = arith.mulf %449, %450 : vector<16x32xf32>
    %452 = vector.broadcast %431 : vector<1x32xf32> to vector<16x32xf32>
    %453 = arith.addf %451, %452 : vector<16x32xf32>
    %c2_289 = arith.constant 2 : index
    %c0_290 = arith.constant 0 : index
    %c0_291 = arith.constant 0 : index
    %454 = vector.load %arg11[%c2_289, %c0_290, %c0_291] : memref<3x16x32xf32, #tpu.memory_space<vmem>>, vector<1x16x32xf32>
    %455 = vector.shape_cast %454 : vector<1x16x32xf32> to vector<16x32xf32>
    %456 = vector.shape_cast %453 : vector<16x32xf32> to vector<1x16x32xf32>
    tpu.vector_store %arg11[%c2_289, %c0_290, %c0_291], %456 {strides = array<i32>} : memref<3x16x32xf32, #tpu.memory_space<vmem>>, vector<1x16x32xf32>,
    return
  }
}

</mosaic_0001>

<llo_original>
// kernel: distil_bert_wrap_forward.1
$region0: #{distil_bert_wrap_forward.1}
  #allocation0 [shape = 'u32[]', space=smem, size = 0x4, offset = 0x4, fixed_abs, tag = 'smem constant byte address 0x4 - core index']
  #allocation1 [shape = 'u32[144,128]{1,0:T(1,128)}', space=vmem, size = 0x12000, scoped, tag = 'internal scratch']
  #allocation2 [shape = 'f32[64,8]{1,0:T(8,128)}', space=vmem, size = 0x8000, scoped, tag = 'scratch operand']
  #allocation3 [shape = 'f32[16,32]{1,0:T(8,128)}', space=vmem, size = 0x2000, scoped, tag = 'scratch operand']
  %s0 = inlined_call_operand.vmem [shape: f32[16,32], index: 0, kind: input, shape index: {}]
  %s1 = inlined_call_operand.vmem [shape: f32[64,8], index: 1, kind: input, shape index: {}]
  %s2 = inlined_call_operand.vmem [shape: f32[2,1,32], index: 2, kind: input, shape index: {}]
  %s3 = inlined_call_operand.vmem [shape: f32[2,32,64], index: 3, kind: input, shape index: {}]
  %s4 = inlined_call_operand.vmem [shape: f32[2,1,64], index: 4, kind: input, shape index: {}]
  %s5 = inlined_call_operand.vmem [shape: f32[2,4,32,32], index: 5, kind: input, shape index: {}]
  %s6 = inlined_call_operand.vmem [shape: f32[2,4,1,32], index: 6, kind: input, shape index: {}]
  %s7 = inlined_call_operand.vmem [shape: f32[2,32,64], index: 7, kind: input, shape index: {}]
  %s8 = inlined_call_operand.vmem [shape: f32[2,1,64], index: 8, kind: input, shape index: {}]
  %s9 = inlined_call_operand.vmem [shape: f32[2,64,32], index: 9, kind: input, shape index: {}]
  %s10 = inlined_call_operand.vmem [shape: f32[2,6,1,32], index: 10, kind: input, shape index: {}]
  %s11 = inlined_call_operand.vmem [shape: f32[3,16,32], index: 11, kind: output, shape index: {0}]
  %s12 = inlined_call_operand.vmem [shape: f32[2,64,8], index: 12, kind: output, shape index: {1}]
  %13 = xla_tuple %s11, %s12
  %s14 = sld [smem:[#allocation0]]
  $region62: #{distil_bert_wrap_forward.1} parent=0
    _
  %s16 = ssub.s32 1, %s14
  %s17 = scalar_select 0, %s16, %s14
  // Predicated region
  $region2: #{distil_bert_wrap_forward.1} parent=0 // pred_check
    _
  $region3: #{distil_bert_wrap_forward.1} parent=0 // pred_check_branch
    %19 = sbr.rel (0) target = $region5
  $region4: #{distil_bert_wrap_forward.1} parent=0 // pred_region
    _
  $region5: #{distil_bert_wrap_forward.1} parent=0 // pred_fallthru
    _
  // Predicated region
  $region6: #{distil_bert_wrap_forward.1} parent=0 // pred_check
    _
  $region7: #{distil_bert_wrap_forward.1} parent=0 // pred_check_branch
    %21 = sbr.rel (0) target = $region9
  $region8: #{distil_bert_wrap_forward.1} parent=0 // pred_region
    _
  $region9: #{distil_bert_wrap_forward.1} parent=0 // pred_fallthru
    _
  // Predicated region
  $region10: #{distil_bert_wrap_forward.1} parent=0 // pred_check
    _
  $region11: #{distil_bert_wrap_forward.1} parent=0 // pred_check_branch
    %23 = sbr.rel (0) target = $region13
  $region12: #{distil_bert_wrap_forward.1} parent=0 // pred_region
    _
  $region13: #{distil_bert_wrap_forward.1} parent=0 // pred_fallthru
    _
  // Predicated region
  $region14: #{distil_bert_wrap_forward.1} parent=0 // pred_check
    _
  $region15: #{distil_bert_wrap_forward.1} parent=0 // pred_check_branch
    %25 = sbr.rel (0) target = $region17
  $region16: #{distil_bert_wrap_forward.1} parent=0 // pred_region
    _
  $region17: #{distil_bert_wrap_forward.1} parent=0 // pred_fallthru
    _
  // Predicated region
  $region18: #{distil_bert_wrap_forward.1} parent=0 // pred_check
    _
  $region19: #{distil_bert_wrap_forward.1} parent=0 // pred_check_branch
    %27 = sbr.rel (0) target = $region21
  $region20: #{distil_bert_wrap_forward.1} parent=0 // pred_region
    _
  $region21: #{distil_bert_wrap_forward.1} parent=0 // pred_fallthru
    _
  // Predicated region
  $region22: #{distil_bert_wrap_forward.1} parent=0 // pred_check
    _
  $region23: #{distil_bert_wrap_forward.1} parent=0 // pred_check_branch
    %29 = sbr.rel (0) target = $region25
  $region24: #{distil_bert_wrap_forward.1} parent=0 // pred_region
    _
  $region25: #{distil_bert_wrap_forward.1} parent=0 // pred_fallthru
    _
  // Predicated region
  $region26: #{distil_bert_wrap_forward.1} parent=0 // pred_check
    _
  $region27: #{distil_bert_wrap_forward.1} parent=0 // pred_check_branch
    %31 = sbr.rel (0) target = $region29
  $region28: #{distil_bert_wrap_forward.1} parent=0 // pred_region
    _
  $region29: #{distil_bert_wrap_forward.1} parent=0 // pred_fallthru
    _
  // Predicated region
  $region30: #{distil_bert_wrap_forward.1} parent=0 // pred_check
    _
  $region31: #{distil_bert_wrap_forward.1} parent=0 // pred_check_branch
    %33 = sbr.rel (0) target = $region33
  $region32: #{distil_bert_wrap_forward.1} parent=0 // pred_region
    _
  $region33: #{distil_bert_wrap_forward.1} parent=0 // pred_fallthru
    _
  // Predicated region
  $region34: #{distil_bert_wrap_forward.1} parent=0 // pred_check
    _
  $region35: #{distil_bert_wrap_forward.1} parent=0 // pred_check_branch
    %35 = sbr.rel (0) target = $region37
  $region36: #{distil_bert_wrap_forward.1} parent=0 // pred_region
    _
  $region37: #{distil_bert_wrap_forward.1} parent=0 // pred_fallthru
    _
  // Predicated region
  $region38: #{distil_bert_wrap_forward.1} parent=0 // pred_check
    _
  $region39: #{distil_bert_wrap_forward.1} parent=0 // pred_check_branch
    %37 = sbr.rel (0) target = $region41
  $region40: #{distil_bert_wrap_forward.1} parent=0 // pred_region
    _
  $region41: #{distil_bert_wrap_forward.1} parent=0 // pred_fallthru
    _
  // Predicated region
  $region42: #{distil_bert_wrap_forward.1} parent=0 // pred_check
    _
  $region43: #{distil_bert_wrap_forward.1} parent=0 // pred_check_branch
    %39 = sbr.rel (0) target = $region45
  $region44: #{distil_bert_wrap_forward.1} parent=0 // pred_region
    _
  $region45: #{distil_bert_wrap_forward.1} parent=0 // pred_fallthru
    _
  %v40 = vld [vmem:[%s1] sm:$0xff]
  %v41 = vld [vmem:[%s1 + $0x8] sm:$0xff]
  %v42 = vld [vmem:[%s1 + $0x10] sm:$0xff]
  %v43 = vld [vmem:[%s1 + $0x18] sm:$0xff]
  %v44 = vld [vmem:[%s1 + $0x20] sm:$0xff]
  %v45 = vld [vmem:[%s1 + $0x28] sm:$0xff]
  %v46 = vld [vmem:[%s1 + $0x30] sm:$0xff]
  %v47 = vld [vmem:[%s1 + $0x38] sm:$0xff]
  %v48 = vld [vmem:[%s0] sm:$0xff]
  %v49 = vld [vmem:[%s0 + $0x8] sm:$0xff]
  %v50 = vld [vmem:[%s2] sm:$0x1]
  %s51 = scalar_lea.vmem %s2, 1
  %v52 = vld [vmem:[%s51] sm:$0x1]
  %vm53 = vcmask 261120
  %v54 = vsel %vm53, %v48, 0.0
  %55 = vadd.xlane.f32.xlu0 %v54
  %v56 = vpop.xlane.xlu0 %55
  %v57 = vsel %vm53, %v49, 0.0
  %58 = vadd.xlane.f32.xlu0 %v57
  %v59 = vpop.xlane.xlu0 %58
  %v60 = vrcp.pop 32.0
  %v61 = vmul.f32 %v56, %v60
  %v62 = vmul.f32 %v59, %v60
  %v63 = vsub.f32 %v48, %v61
  %v64 = vsub.f32 %v49, %v62
  %v65 = vmul.f32 %v63, %v63
  %v66 = vmul.f32 %v64, %v64
  %v67 = vsel %vm53, %v65, 0.0
  %68 = vadd.xlane.f32.xlu0 %v67
  %v69 = vpop.xlane.xlu0 %68
  %v70 = vsel %vm53, %v66, 0.0
  %71 = vadd.xlane.f32.xlu0 %v70
  %v72 = vpop.xlane.xlu0 %71
  %v73 = vmul.f32 %v69, %v60
  %v74 = vmul.f32 %v72, %v60
  %v75 = vadd.f32 %v73, 1e-12
  %v76 = vadd.f32 %v74, 1e-12
  %v77 = vrsqrt.pop %v75
  %v78 = vrsqrt.pop %v76
  %v79 = vmul.f32 %v63, %v77
  %v80 = vmul.f32 %v64, %v78
  %v82 = vlaneseq
  %v83 = vshrl.u32 %v82, 7
  %v84 = vsub.s32 0, %v83
  %v85 = vrot.slane %v50, %v84
  %v87 = vmul.f32 %v79, %v85
  %v88 = vmul.f32 %v80, %v85
  %v90 = vlaneseq
  %v91 = vshrl.u32 %v90, 7
  %v92 = vsub.s32 0, %v91
  %v93 = vrot.slane %v52, %v92
  %v95 = vadd.f32 %v87, %v93
  %v96 = vadd.f32 %v88, %v93
  %97 = vst.msk [vmem:[%s11] sm:$0xff] %vm53, %v95
  %98 = vst.msk [vmem:[%s11 + $0x8] sm:$0xff] %vm53, %v96
  %v99 = vld [vmem:[%s3] sm:$0xff]
  %v100 = vld [vmem:[%s3 + $0x8] sm:$0xff]
  %v101 = vld [vmem:[%s3 + $0x10] sm:$0xff]
  %v102 = vld [vmem:[%s3 + $0x18] sm:$0xff]
  %v103 = vld [vmem:[%s4] sm:$0x1]
  %v105 = vlaneseq
  %v106 = vshrl.u32 %v105, 7
  %v107 = vsub.s32 0, %v106
  %v108 = vrot.slane %v103, %v107
  %v111 = vsel %vm53, %v95, 0
  %v114 = vsel %vm53, %v96, 0
  %116 = vmatprep.subr.mxu0 0.0
  %117 = vmatpush1.msra.mxu0 %v99
  %118 = vmatprep.subr.mxu0 0.0
  %119 = vmatpush1.msra.mxu0 %v100
  %120 = vmatprep.subr.mxu0 0.0
  %121 = vmatpush1.msra.mxu0 %v101
  %122 = vmatprep.subr.mxu0 0.0
  %123 = vmatpush1.msra.mxu0 %v102
  %124 = vmatprep.subr.mxu0 0.0
  %125 = vmatpush1.msra.mxu0 0.0
  %126 = vmatprep.subr.mxu0 0.0
  %127 = vmatpush1.msra.mxu0 0.0
  %128 = vmatprep.subr.mxu0 0.0
  %129 = vmatpush1.msra.mxu0 0.0
  %130 = vmatprep.subr.mxu0 0.0
  %131 = vmatpush1.msra.mxu0 0.0
  %132 = vmatprep.subr.mxu0 0.0
  %133 = vmatpush1.msra.mxu0 0.0
  %134 = vmatprep.subr.mxu0 0.0
  %135 = vmatpush1.msra.mxu0 0.0
  %136 = vmatprep.subr.mxu0 0.0
  %137 = vmatpush1.msra.mxu0 0.0
  %138 = vmatprep.subr.mxu0 0.0
  %139 = vmatpush1.msra.mxu0 0.0
  %140 = vmatprep.subr.mxu0 0.0
  %141 = vmatpush1.msra.mxu0 0.0
  %142 = vmatprep.subr.mxu0 0.0
  %143 = vmatpush1.msra.mxu0 0.0
  %144 = vmatprep.subr.mxu0 0.0
  %145 = vmatpush1.msra.mxu0 0.0
  %146 = vmatprep.subr.mxu0 0.0
  %147 = vmatpush1.msra.mxu0 0.0
  %148 = vmatprep.subr.mxu0 0.0
  %149 = vmatpush1.msra.mxu0 0.0
  %150 = vmatprep.subr.mxu0 0.0
  %151 = vmatpush1.msra.mxu0 0.0
  %152 = vmatprep.subr.mxu0 0.0
  %153 = vmatpush1.msra.mxu0 0.0
  %154 = vmatprep.subr.mxu0 0.0
  %155 = vmatpush1.msra.mxu0 0.0
  %156 = vmatprep.subr.mxu0 0.0
  %157 = vmatpush1.msra.mxu0 0.0
  %158 = vmatprep.subr.mxu0 0.0
  %159 = vmatpush1.msra.mxu0 0.0
  %160 = vmatprep.subr.mxu0 0.0
  %161 = vmatpush1.msra.mxu0 0.0
  %162 = vmatprep.subr.mxu0 0.0
  %163 = vmatpush1.msra.mxu0 0.0
  %164 = vmatprep.subr.mxu0 0.0
  %165 = vmatpush1.msra.mxu0 0.0
  %166 = vmatprep.subr.mxu0 0.0
  %167 = vmatpush1.msra.mxu0 0.0
  %168 = vmatprep.subr.mxu0 0.0
  %169 = vmatpush1.msra.mxu0 0.0
  %170 = vmatprep.subr.mxu0 0.0
  %171 = vmatpush1.msra.mxu0 0.0
  %172 = vmatprep.subr.mxu0 0.0
  %173 = vmatpush1.msra.mxu0 0.0
  %174 = vmatprep.subr.mxu0 0.0
  %175 = vmatpush1.msra.mxu0 0.0
  %176 = vmatprep.subr.mxu0 0.0
  %177 = vmatpush1.msra.mxu0 0.0
  %178 = vmatprep.subr.mxu0 0.0
  %179 = vmatpush1.msra.mxu0 0.0
  %180 = vmatprep.mubr.f32.mxu0 0.0
  %181 = vmatmul.mubr.f32.gmra.mrb[0].mxu0 %v111
  %v182 = vpop.f32.mrb[0].mxu0
  %v183 = vadd.f32 %v108, %v182
  %v184 = vpop.f32.mrb[0].mxu0
  %185 = vmatprep.mubr.f32.mxu0 0.0
  %186 = vmatmul.mubr.f32.gmra.mrb[0].mxu0 %v114
  %v187 = vpop.f32.mrb[0].mxu0
  %v188 = vadd.f32 %v108, %v187
  %v189 = vpop.f32.mrb[0].mxu0
  %190 = vdwg.mxu0
  %192 = vrot.lane.b32.xlu0 %v183, 96
  %v193 = vpop.permute.xlu0 %192
  %vm194 = vcmask 64512
  %v195 = vsel %vm194, %v183, 0
  %v197 = vsel %vm194, %v193, 0
  %199 = vmatprep.subr.mxu0 0.0
  %200 = vmatpush1.xpose.msra.mxu0 %v197
  %201 = vmatprep.subr.mxu0 0.0
  %202 = vmatpush1.xpose.msra.mxu0 0.0
  %203 = vmatprep.subr.mxu0 0.0
  %204 = vmatpush1.xpose.msra.mxu0 0.0
  %205 = vmatprep.subr.mxu0 0.0
  %206 = vmatpush1.xpose.msra.mxu0 0.0
  %207 = vmatprep.subr.mxu0 0.0
  %208 = vmatpush1.xpose.msra.mxu0 0.0
  %209 = vmatprep.subr.mxu0 0.0
  %210 = vmatpush1.xpose.msra.mxu0 0.0
  %211 = vmatprep.subr.mxu0 0.0
  %212 = vmatpush1.xpose.msra.mxu0 0.0
  %213 = vmatprep.subr.mxu0 0.0
  %214 = vmatpush1.xpose.msra.mxu0 0.0
  %215 = vmatprep.subr.mxu0 0.0
  %216 = vmatpush1.xpose.msra.mxu0 0.0
  %217 = vmatprep.subr.mxu0 0.0
  %218 = vmatpush1.xpose.msra.mxu0 0.0
  %219 = vmatprep.subr.mxu0 0.0
  %220 = vmatpush1.xpose.msra.mxu0 0.0
  %221 = vmatprep.subr.mxu0 0.0
  %222 = vmatpush1.xpose.msra.mxu0 0.0
  %223 = vmatprep.subr.mxu0 0.0
  %224 = vmatpush1.xpose.msra.mxu0 0.0
  %225 = vmatprep.subr.mxu0 0.0
  %226 = vmatpush1.xpose.msra.mxu0 0.0
  %227 = vmatprep.subr.mxu0 0.0
  %228 = vmatpush1.xpose.msra.mxu0 0.0
  %229 = vmatprep.subr.mxu0 0.0
  %230 = vmatpush1.xpose.msra.mxu0 0.0
  %231 = vmatprep.subr.mxu0 0.0
  %232 = vmatpush1.xpose.msra.mxu0 0.0
  %233 = vmatprep.subr.mxu0 0.0
  %234 = vmatpush1.xpose.msra.mxu0 0.0
  %235 = vmatprep.subr.mxu0 0.0
  %236 = vmatpush1.xpose.msra.mxu0 0.0
  %237 = vmatprep.subr.mxu0 0.0
  %238 = vmatpush1.xpose.msra.mxu0 0.0
  %239 = vmatprep.subr.mxu0 0.0
  %240 = vmatpush1.xpose.msra.mxu0 0.0
  %241 = vmatprep.subr.mxu0 0.0
  %242 = vmatpush1.xpose.msra.mxu0 0.0
  %243 = vmatprep.subr.mxu0 0.0
  %244 = vmatpush1.xpose.msra.mxu0 0.0
  %245 = vmatprep.subr.mxu0 0.0
  %246 = vmatpush1.xpose.msra.mxu0 0.0
  %247 = vmatprep.subr.mxu0 0.0
  %248 = vmatpush1.xpose.msra.mxu0 0.0
  %249 = vmatprep.subr.mxu0 0.0
  %250 = vmatpush1.xpose.msra.mxu0 0.0
  %251 = vmatprep.subr.mxu0 0.0
  %252 = vmatpush1.xpose.msra.mxu0 0.0
  %253 = vmatprep.subr.mxu0 0.0
  %254 = vmatpush1.xpose.msra.mxu0 0.0
  %255 = vmatprep.subr.mxu0 0.0
  %256 = vmatpush1.xpose.msra.mxu0 0.0
  %257 = vmatprep.subr.mxu0 0.0
  %258 = vmatpush1.xpose.msra.mxu0 0.0
  %259 = vmatprep.subr.mxu0 0.0
  %260 = vmatpush1.xpose.msra.mxu0 0.0
  %261 = vmatprep.subr.mxu0 0.0
  %262 = vmatpush1.xpose.msra.mxu0 0.0
  %263 = vmatprep.mubr.f32.mxu0 0.0
  %264 = vmatmul.mubr.f32.gmra.mrb[0].mxu0 %v195
  %v265 = vpop.f32.mrb[0].mxu0
  %v266 = vadd.f32 0.0, %v265
  %v267 = vpop.f32.mrb[0].mxu0
  %268 = vdwg.mxu0
  %269 = vst.msk [vmem:[#allocation2] sm:$0xff] %vm194, %v266
  %270 = vrot.lane.b32.xlu0 %v183, 120
  %v271 = vpop.permute.xlu0 %270
  %272 = vrot.lane.b32.xlu0 %v183, 88
  %v273 = vpop.permute.xlu0 %272
  %v274 = vsel %vm194, %v271, 0
  %v276 = vsel %vm194, %v273, 0
  %278 = vmatprep.subr.mxu0 0.0
  %279 = vmatpush1.xpose.msra.mxu0 %v276
  %280 = vmatprep.subr.mxu0 0.0
  %281 = vmatpush1.xpose.msra.mxu0 0.0
  %282 = vmatprep.subr.mxu0 0.0
  %283 = vmatpush1.xpose.msra.mxu0 0.0
  %284 = vmatprep.subr.mxu0 0.0
  %285 = vmatpush1.xpose.msra.mxu0 0.0
  %286 = vmatprep.subr.mxu0 0.0
  %287 = vmatpush1.xpose.msra.mxu0 0.0
  %288 = vmatprep.subr.mxu0 0.0
  %289 = vmatpush1.xpose.msra.mxu0 0.0
  %290 = vmatprep.subr.mxu0 0.0
  %291 = vmatpush1.xpose.msra.mxu0 0.0
  %292 = vmatprep.subr.mxu0 0.0
  %293 = vmatpush1.xpose.msra.mxu0 0.0
  %294 = vmatprep.subr.mxu0 0.0
  %295 = vmatpush1.xpose.msra.mxu0 0.0
  %296 = vmatprep.subr.mxu0 0.0
  %297 = vmatpush1.xpose.msra.mxu0 0.0
  %298 = vmatprep.subr.mxu0 0.0
  %299 = vmatpush1.xpose.msra.mxu0 0.0
  %300 = vmatprep.subr.mxu0 0.0
  %301 = vmatpush1.xpose.msra.mxu0 0.0
  %302 = vmatprep.subr.mxu0 0.0
  %303 = vmatpush1.xpose.msra.mxu0 0.0
  %304 = vmatprep.subr.mxu0 0.0
  %305 = vmatpush1.xpose.msra.mxu0 0.0
  %306 = vmatprep.subr.mxu0 0.0
  %307 = vmatpush1.xpose.msra.mxu0 0.0
  %308 = vmatprep.subr.mxu0 0.0
  %309 = vmatpush1.xpose.msra.mxu0 0.0
  %310 = vmatprep.subr.mxu0 0.0
  %311 = vmatpush1.xpose.msra.mxu0 0.0
  %312 = vmatprep.subr.mxu0 0.0
  %313 = vmatpush1.xpose.msra.mxu0 0.0
  %314 = vmatprep.subr.mxu0 0.0
  %315 = vmatpush1.xpose.msra.mxu0 0.0
  %316 = vmatprep.subr.mxu0 0.0
  %317 = vmatpush1.xpose.msra.mxu0 0.0
  %318 = vmatprep.subr.mxu0 0.0
  %319 = vmatpush1.xpose.msra.mxu0 0.0
  %320 = vmatprep.subr.mxu0 0.0
  %321 = vmatpush1.xpose.msra.mxu0 0.0
  %322 = vmatprep.subr.mxu0 0.0
  %323 = vmatpush1.xpose.msra.mxu0 0.0
  %324 = vmatprep.subr.mxu0 0.0
  %325 = vmatpush1.xpose.msra.mxu0 0.0
  %326 = vmatprep.subr.mxu0 0.0
  %327 = vmatpush1.xpose.msra.mxu0 0.0
  %328 = vmatprep.subr.mxu0 0.0
  %329 = vmatpush1.xpose.msra.mxu0 0.0
  %330 = vmatprep.subr.mxu0 0.0
  %331 = vmatpush1.xpose.msra.mxu0 0.0
  %332 = vmatprep.subr.mxu0 0.0
  %333 = vmatpush1.xpose.msra.mxu0 0.0
  %334 = vmatprep.subr.mxu0 0.0
  %335 = vmatpush1.xpose.msra.mxu0 0.0
  %336 = vmatprep.subr.mxu0 0.0
  %337 = vmatpush1.xpose.msra.mxu0 0.0
  %338 = vmatprep.subr.mxu0 0.0
  %339 = vmatpush1.xpose.msra.mxu0 0.0
  %340 = vmatprep.subr.mxu0 0.0
  %341 = vmatpush1.xpose.msra.mxu0 0.0
  %342 = vmatprep.mubr.f32.mxu0 0.0
  %343 = vmatmul.mubr.f32.gmra.mrb[0].mxu0 %v274
  %v344 = vpop.f32.mrb[0].mxu0
  %v345 = vadd.f32 0.0, %v344
  %v346 = vpop.f32.mrb[0].mxu0
  %347 = vdwg.mxu0
  %348 = vst.msk [vmem:[#allocation2 + $0x8] sm:$0xff] %vm194, %v345
  %349 = vrot.lane.b32.xlu0 %v183, 112
  %v350 = vpop.permute.xlu0 %349
  %351 = vrot.lane.b32.xlu0 %v183, 80
  %v352 = vpop.permute.xlu0 %351
  %v353 = vsel %vm194, %v350, 0
  %v355 = vsel %vm194, %v352, 0
  %357 = vmatprep.subr.mxu0 0.0
  %358 = vmatpush1.xpose.msra.mxu0 %v355
  %359 = vmatprep.subr.mxu0 0.0
  %360 = vmatpush1.xpose.msra.mxu0 0.0
  %361 = vmatprep.subr.mxu0 0.0
  %362 = vmatpush1.xpose.msra.mxu0 0.0
  %363 = vmatprep.subr.mxu0 0.0
  %364 = vmatpush1.xpose.msra.mxu0 0.0
  %365 = vmatprep.subr.mxu0 0.0
  %366 = vmatpush1.xpose.msra.mxu0 0.0
  %367 = vmatprep.subr.mxu0 0.0
  %368 = vmatpush1.xpose.msra.mxu0 0.0
  %369 = vmatprep.subr.mxu0 0.0
  %370 = vmatpush1.xpose.msra.mxu0 0.0
  %371 = vmatprep.subr.mxu0 0.0
  %372 = vmatpush1.xpose.msra.mxu0 0.0
  %373 = vmatprep.subr.mxu0 0.0
  %374 = vmatpush1.xpose.msra.mxu0 0.0
  %375 = vmatprep.subr.mxu0 0.0
  %376 = vmatpush1.xpose.msra.mxu0 0.0
  %377 = vmatprep.subr.mxu0 0.0
  %378 = vmatpush1.xpose.msra.mxu0 0.0
  %379 = vmatprep.subr.mxu0 0.0
  %380 = vmatpush1.xpose.msra.mxu0 0.0
  %381 = vmatprep.subr.mxu0 0.0
  %382 = vmatpush1.xpose.msra.mxu0 0.0
  %383 = vmatprep.subr.mxu0 0.0
  %384 = vmatpush1.xpose.msra.mxu0 0.0
  %385 = vmatprep.subr.mxu0 0.0
  %386 = vmatpush1.xpose.msra.mxu0 0.0
  %387 = vmatprep.subr.mxu0 0.0
  %388 = vmatpush1.xpose.msra.mxu0 0.0
  %389 = vmatprep.subr.mxu0 0.0
  %390 = vmatpush1.xpose.msra.mxu0 0.0
  %391 = vmatprep.subr.mxu0 0.0
  %392 = vmatpush1.xpose.msra.mxu0 0.0
  %393 = vmatprep.subr.mxu0 0.0
  %394 = vmatpush1.xpose.msra.mxu0 0.0
  %395 = vmatprep.subr.mxu0 0.0
  %396 = vmatpush1.xpose.msra.mxu0 0.0
  %397 = vmatprep.subr.mxu0 0.0
  %398 = vmatpush1.xpose.msra.mxu0 0.0
  %399 = vmatprep.subr.mxu0 0.0
  %400 = vmatpush1.xpose.msra.mxu0 0.0
  %401 = vmatprep.subr.mxu0 0.0
  %402 = vmatpush1.xpose.msra.mxu0 0.0
  %403 = vmatprep.subr.mxu0 0.0
  %404 = vmatpush1.xpose.msra.mxu0 0.0
  %405 = vmatprep.subr.mxu0 0.0
  %406 = vmatpush1.xpose.msra.mxu0 0.0
  %407 = vmatprep.subr.mxu0 0.0
  %408 = vmatpush1.xpose.msra.mxu0 0.0
  %409 = vmatprep.subr.mxu0 0.0
  %410 = vmatpush1.xpose.msra.mxu0 0.0
  %411 = vmatprep.subr.mxu0 0.0
  %412 = vmatpush1.xpose.msra.mxu0 0.0
  %413 = vmatprep.subr.mxu0 0.0
  %414 = vmatpush1.xpose.msra.mxu0 0.0
  %415 = vmatprep.subr.mxu0 0.0
  %416 = vmatpush1.xpose.msra.mxu0 0.0
  %417 = vmatprep.subr.mxu0 0.0
  %418 = vmatpush1.xpose.msra.mxu0 0.0
  %419 = vmatprep.subr.mxu0 0.0
  %420 = vmatpush1.xpose.msra.mxu0 0.0
  %421 = vmatprep.mubr.f32.mxu0 0.0
  %422 = vmatmul.mubr.f32.gmra.mrb[0].mxu0 %v353
  %v423 = vpop.f32.mrb[0].mxu0
  %v424 = vadd.f32 0.0, %v423
  %v425 = vpop.f32.mrb[0].mxu0
  %426 = vdwg.mxu0
  %427 = vst.msk [vmem:[#allocation2 + $0x10] sm:$0xff] %vm194, %v424
  %428 = vrot.lane.b32.xlu0 %v183, 104
  %v429 = vpop.permute.xlu0 %428
  %430 = vrot.lane.b32.xlu0 %v183, 72
  %v431 = vpop.permute.xlu0 %430
  %v432 = vsel %vm194, %v429, 0
  %v434 = vsel %vm194, %v431, 0
  %436 = vmatprep.subr.mxu0 0.0
  %437 = vmatpush1.xpose.msra.mxu0 %v434
  %438 = vmatprep.subr.mxu0 0.0
  %439 = vmatpush1.xpose.msra.mxu0 0.0
  %440 = vmatprep.subr.mxu0 0.0
  %441 = vmatpush1.xpose.msra.mxu0 0.0
  %442 = vmatprep.subr.mxu0 0.0
  %443 = vmatpush1.xpose.msra.mxu0 0.0
  %444 = vmatprep.subr.mxu0 0.0
  %445 = vmatpush1.xpose.msra.mxu0 0.0
  %446 = vmatprep.subr.mxu0 0.0
  %447 = vmatpush1.xpose.msra.mxu0 0.0
  %448 = vmatprep.subr.mxu0 0.0
  %449 = vmatpush1.xpose.msra.mxu0 0.0
  %450 = vmatprep.subr.mxu0 0.0
  %451 = vmatpush1.xpose.msra.mxu0 0.0
  %452 = vmatprep.subr.mxu0 0.0
  %453 = vmatpush1.xpose.msra.mxu0 0.0
  %454 = vmatprep.subr.mxu0 0.0
  %455 = vmatpush1.xpose.msra.mxu0 0.0
  %456 = vmatprep.subr.mxu0 0.0
  %457 = vmatpush1.xpose.msra.mxu0 0.0
  %458 = vmatprep.subr.mxu0 0.0
  %459 = vmatpush1.xpose.msra.mxu0 0.0
  %460 = vmatprep.subr.mxu0 0.0
  %461 = vmatpush1.xpose.msra.mxu0 0.0
  %462 = vmatprep.subr.mxu0 0.0
  %463 = vmatpush1.xpose.msra.mxu0 0.0
  %464 = vmatprep.subr.mxu0 0.0
  %465 = vmatpush1.xpose.msra.mxu0 0.0
  %466 = vmatprep.subr.mxu0 0.0
  %467 = vmatpush1.xpose.msra.mxu0 0.0
  %468 = vmatprep.subr.mxu0 0.0
  %469 = vmatpush1.xpose.msra.mxu0 0.0
  %470 = vmatprep.subr.mxu0 0.0
  %471 = vmatpush1.xpose.msra.mxu0 0.0
  %472 = vmatprep.subr.mxu0 0.0
  %473 = vmatpush1.xpose.msra.mxu0 0.0
  %474 = vmatprep.subr.mxu0 0.0
  %475 = vmatpush1.xpose.msra.mxu0 0.0
  %476 = vmatprep.subr.mxu0 0.0
  %477 = vmatpush1.xpose.msra.mxu0 0.0
  %478 = vmatprep.subr.mxu0 0.0
  %479 = vmatpush1.xpose.msra.mxu0 0.0
  %480 = vmatprep.subr.mxu0 0.0
  %481 = vmatpush1.xpose.msra.mxu0 0.0
  %482 = vmatprep.subr.mxu0 0.0
  %483 = vmatpush1.xpose.msra.mxu0 0.0
  %484 = vmatprep.subr.mxu0 0.0
  %485 = vmatpush1.xpose.msra.mxu0 0.0
  %486 = vmatprep.subr.mxu0 0.0
  %487 = vmatpush1.xpose.msra.mxu0 0.0
  %488 = vmatprep.subr.mxu0 0.0
  %489 = vmatpush1.xpose.msra.mxu0 0.0
  %490 = vmatprep.subr.mxu0 0.0
  %491 = vmatpush1.xpose.msra.mxu0 0.0
  %492 = vmatprep.subr.mxu0 0.0
  %493 = vmatpush1.xpose.msra.mxu0 0.0
  %494 = vmatprep.subr.mxu0 0.0
  %495 = vmatpush1.xpose.msra.mxu0 0.0
  %496 = vmatprep.subr.mxu0 0.0
  %497 = vmatpush1.xpose.msra.mxu0 0.0
  %498 = vmatprep.subr.mxu0 0.0
  %499 = vmatpush1.xpose.msra.mxu0 0.0
  %500 = vmatprep.mubr.f32.mxu0 0.0
  %501 = vmatmul.mubr.f32.gmra.mrb[0].mxu0 %v432
  %v502 = vpop.f32.mrb[0].mxu0
  %v503 = vadd.f32 0.0, %v502
  %v504 = vpop.f32.mrb[0].mxu0
  %505 = vdwg.mxu0
  %506 = vst.msk [vmem:[#allocation2 + $0x18] sm:$0xff] %vm194, %v503
  %508 = vrot.lane.b32.xlu0 %v188, 96
  %v509 = vpop.permute.xlu0 %508
  %v510 = vsel %vm194, %v188, 0
  %v512 = vsel %vm194, %v509, 0
  %514 = vmatprep.subr.mxu0 0.0
  %515 = vmatpush1.xpose.msra.mxu0 %v512
  %516 = vmatprep.subr.mxu0 0.0
  %517 = vmatpush1.xpose.msra.mxu0 0.0
  %518 = vmatprep.subr.mxu0 0.0
  %519 = vmatpush1.xpose.msra.mxu0 0.0
  %520 = vmatprep.subr.mxu0 0.0
  %521 = vmatpush1.xpose.msra.mxu0 0.0
  %522 = vmatprep.subr.mxu0 0.0
  %523 = vmatpush1.xpose.msra.mxu0 0.0
  %524 = vmatprep.subr.mxu0 0.0
  %525 = vmatpush1.xpose.msra.mxu0 0.0
  %526 = vmatprep.subr.mxu0 0.0
  %527 = vmatpush1.xpose.msra.mxu0 0.0
  %528 = vmatprep.subr.mxu0 0.0
  %529 = vmatpush1.xpose.msra.mxu0 0.0
  %530 = vmatprep.subr.mxu0 0.0
  %531 = vmatpush1.xpose.msra.mxu0 0.0
  %532 = vmatprep.subr.mxu0 0.0
  %533 = vmatpush1.xpose.msra.mxu0 0.0
  %534 = vmatprep.subr.mxu0 0.0
  %535 = vmatpush1.xpose.msra.mxu0 0.0
  %536 = vmatprep.subr.mxu0 0.0
  %537 = vmatpush1.xpose.msra.mxu0 0.0
  %538 = vmatprep.subr.mxu0 0.0
  %539 = vmatpush1.xpose.msra.mxu0 0.0
  %540 = vmatprep.subr.mxu0 0.0
  %541 = vmatpush1.xpose.msra.mxu0 0.0
  %542 = vmatprep.subr.mxu0 0.0
  %543 = vmatpush1.xpose.msra.mxu0 0.0
  %544 = vmatprep.subr.mxu0 0.0
  %545 = vmatpush1.xpose.msra.mxu0 0.0
  %546 = vmatprep.subr.mxu0 0.0
  %547 = vmatpush1.xpose.msra.mxu0 0.0
  %548 = vmatprep.subr.mxu0 0.0
  %549 = vmatpush1.xpose.msra.mxu0 0.0
  %550 = vmatprep.subr.mxu0 0.0
  %551 = vmatpush1.xpose.msra.mxu0 0.0
  %552 = vmatprep.subr.mxu0 0.0
  %553 = vmatpush1.xpose.msra.mxu0 0.0
  %554 = vmatprep.subr.mxu0 0.0
  %555 = vmatpush1.xpose.msra.mxu0 0.0
  %556 = vmatprep.subr.mxu0 0.0
  %557 = vmatpush1.xpose.msra.mxu0 0.0
  %558 = vmatprep.subr.mxu0 0.0
  %559 = vmatpush1.xpose.msra.mxu0 0.0
  %560 = vmatprep.subr.mxu0 0.0
  %561 = vmatpush1.xpose.msra.mxu0 0.0
  %562 = vmatprep.subr.mxu0 0.0
  %563 = vmatpush1.xpose.msra.mxu0 0.0
  %564 = vmatprep.subr.mxu0 0.0
  %565 = vmatpush1.xpose.msra.mxu0 0.0
  %566 = vmatprep.subr.mxu0 0.0
  %567 = vmatpush1.xpose.msra.mxu0 0.0
  %568 = vmatprep.subr.mxu0 0.0
  %569 = vmatpush1.xpose.msra.mxu0 0.0
  %570 = vmatprep.subr.mxu0 0.0
  %571 = vmatpush1.xpose.msra.mxu0 0.0
  %572 = vmatprep.subr.mxu0 0.0
  %573 = vmatpush1.xpose.msra.mxu0 0.0
  %574 = vmatprep.subr.mxu0 0.0
  %575 = vmatpush1.xpose.msra.mxu0 0.0
  %576 = vmatprep.subr.mxu0 0.0
  %577 = vmatpush1.xpose.msra.mxu0 0.0
  %578 = vmatprep.mubr.f32.mxu0 0.0
  %579 = vmatmul.mubr.f32.gmra.mrb[0].mxu0 %v510
  %v580 = vpop.f32.mrb[0].mxu0
  %v581 = vadd.f32 0.0, %v580
  %v582 = vpop.f32.mrb[0].mxu0
  %583 = vdwg.mxu0
  %584 = vst.msk [vmem:[#allocation2 + $0x20] sm:$0xff] %vm194, %v581
  %585 = vrot.lane.b32.xlu0 %v188, 120
  %v586 = vpop.permute.xlu0 %585
  %587 = vrot.lane.b32.xlu0 %v188, 88
  %v588 = vpop.permute.xlu0 %587
  %v589 = vsel %vm194, %v586, 0
  %v591 = vsel %vm194, %v588, 0
  %593 = vmatprep.subr.mxu0 0.0
  %594 = vmatpush1.xpose.msra.mxu0 %v591
  %595 = vmatprep.subr.mxu0 0.0
  %596 = vmatpush1.xpose.msra.mxu0 0.0
  %597 = vmatprep.subr.mxu0 0.0
  %598 = vmatpush1.xpose.msra.mxu0 0.0
  %599 = vmatprep.subr.mxu0 0.0
  %600 = vmatpush1.xpose.msra.mxu0 0.0
  %601 = vmatprep.subr.mxu0 0.0
  %602 = vmatpush1.xpose.msra.mxu0 0.0
  %603 = vmatprep.subr.mxu0 0.0
  %604 = vmatpush1.xpose.msra.mxu0 0.0
  %605 = vmatprep.subr.mxu0 0.0
  %606 = vmatpush1.xpose.msra.mxu0 0.0
  %607 = vmatprep.subr.mxu0 0.0
  %608 = vmatpush1.xpose.msra.mxu0 0.0
  %609 = vmatprep.subr.mxu0 0.0
  %610 = vmatpush1.xpose.msra.mxu0 0.0
  %611 = vmatprep.subr.mxu0 0.0
  %612 = vmatpush1.xpose.msra.mxu0 0.0
  %613 = vmatprep.subr.mxu0 0.0
  %614 = vmatpush1.xpose.msra.mxu0 0.0
  %615 = vmatprep.subr.mxu0 0.0
  %616 = vmatpush1.xpose.msra.mxu0 0.0
  %617 = vmatprep.subr.mxu0 0.0
  %618 = vmatpush1.xpose.msra.mxu0 0.0
  %619 = vmatprep.subr.mxu0 0.0
  %620 = vmatpush1.xpose.msra.mxu0 0.0
  %621 = vmatprep.subr.mxu0 0.0
  %622 = vmatpush1.xpose.msra.mxu0 0.0
  %623 = vmatprep.subr.mxu0 0.0
  %624 = vmatpush1.xpose.msra.mxu0 0.0
  %625 = vmatprep.subr.mxu0 0.0
  %626 = vmatpush1.xpose.msra.mxu0 0.0
  %627 = vmatprep.subr.mxu0 0.0
  %628 = vmatpush1.xpose.msra.mxu0 0.0
  %629 = vmatprep.subr.mxu0 0.0
  %630 = vmatpush1.xpose.msra.mxu0 0.0
  %631 = vmatprep.subr.mxu0 0.0
  %632 = vmatpush1.xpose.msra.mxu0 0.0
  %633 = vmatprep.subr.mxu0 0.0
  %634 = vmatpush1.xpose.msra.mxu0 0.0
  %635 = vmatprep.subr.mxu0 0.0
  %636 = vmatpush1.xpose.msra.mxu0 0.0
  %637 = vmatprep.subr.mxu0 0.0
  %638 = vmatpush1.xpose.msra.mxu0 0.0
  %639 = vmatprep.subr.mxu0 0.0
  %640 = vmatpush1.xpose.msra.mxu0 0.0
  %641 = vmatprep.subr.mxu0 0.0
  %642 = vmatpush1.xpose.msra.mxu0 0.0
  %643 = vmatprep.subr.mxu0 0.0
  %644 = vmatpush1.xpose.msra.mxu0 0.0
  %645 = vmatprep.subr.mxu0 0.0
  %646 = vmatpush1.xpose.msra.mxu0 0.0
  %647 = vmatprep.subr.mxu0 0.0
  %648 = vmatpush1.xpose.msra.mxu0 0.0
  %649 = vmatprep.subr.mxu0 0.0
  %650 = vmatpush1.xpose.msra.mxu0 0.0
  %651 = vmatprep.subr.mxu0 0.0
  %652 = vmatpush1.xpose.msra.mxu0 0.0
  %653 = vmatprep.subr.mxu0 0.0
  %654 = vmatpush1.xpose.msra.mxu0 0.0
  %655 = vmatprep.subr.mxu0 0.0
  %656 = vmatpush1.xpose.msra.mxu0 0.0
  %657 = vmatprep.mubr.f32.mxu0 0.0
  %658 = vmatmul.mubr.f32.gmra.mrb[0].mxu0 %v589
  %v659 = vpop.f32.mrb[0].mxu0
  %v660 = vadd.f32 0.0, %v659
  %v661 = vpop.f32.mrb[0].mxu0
  %662 = vdwg.mxu0
  %663 = vst.msk [vmem:[#allocation2 + $0x28] sm:$0xff] %vm194, %v660
  %664 = vrot.lane.b32.xlu0 %v188, 112
  %v665 = vpop.permute.xlu0 %664
  %666 = vrot.lane.b32.xlu0 %v188, 80
  %v667 = vpop.permute.xlu0 %666
  %v668 = vsel %vm194, %v665, 0
  %v670 = vsel %vm194, %v667, 0
  %672 = vmatprep.subr.mxu0 0.0
  %673 = vmatpush1.xpose.msra.mxu0 %v670
  %674 = vmatprep.subr.mxu0 0.0
  %675 = vmatpush1.xpose.msra.mxu0 0.0
  %676 = vmatprep.subr.mxu0 0.0
  %677 = vmatpush1.xpose.msra.mxu0 0.0
  %678 = vmatprep.subr.mxu0 0.0
  %679 = vmatpush1.xpose.msra.mxu0 0.0
  %680 = vmatprep.subr.mxu0 0.0
  %681 = vmatpush1.xpose.msra.mxu0 0.0
  %682 = vmatprep.subr.mxu0 0.0
  %683 = vmatpush1.xpose.msra.mxu0 0.0
  %684 = vmatprep.subr.mxu0 0.0
  %685 = vmatpush1.xpose.msra.mxu0 0.0
  %686 = vmatprep.subr.mxu0 0.0
  %687 = vmatpush1.xpose.msra.mxu0 0.0
  %688 = vmatprep.subr.mxu0 0.0
  %689 = vmatpush1.xpose.msra.mxu0 0.0
  %690 = vmatprep.subr.mxu0 0.0
  %691 = vmatpush1.xpose.msra.mxu0 0.0
  %692 = vmatprep.subr.mxu0 0.0
  %693 = vmatpush1.xpose.msra.mxu0 0.0
  %694 = vmatprep.subr.mxu0 0.0
  %695 = vmatpush1.xpose.msra.mxu0 0.0
  %696 = vmatprep.subr.mxu0 0.0
  %697 = vmatpush1.xpose.msra.mxu0 0.0
  %698 = vmatprep.subr.mxu0 0.0
  %699 = vmatpush1.xpose.msra.mxu0 0.0
  %700 = vmatprep.subr.mxu0 0.0
  %701 = vmatpush1.xpose.msra.mxu0 0.0
  %702 = vmatprep.subr.mxu0 0.0
  %703 = vmatpush1.xpose.msra.mxu0 0.0
  %704 = vmatprep.subr.mxu0 0.0
  %705 = vmatpush1.xpose.msra.mxu0 0.0
  %706 = vmatprep.subr.mxu0 0.0
  %707 = vmatpush1.xpose.msra.mxu0 0.0
  %708 = vmatprep.subr.mxu0 0.0
  %709 = vmatpush1.xpose.msra.mxu0 0.0
  %710 = vmatprep.subr.mxu0 0.0
  %711 = vmatpush1.xpose.msra.mxu0 0.0
  %712 = vmatprep.subr.mxu0 0.0
  %713 = vmatpush1.xpose.msra.mxu0 0.0
  %714 = vmatprep.subr.mxu0 0.0
  %715 = vmatpush1.xpose.msra.mxu0 0.0
  %716 = vmatprep.subr.mxu0 0.0
  %717 = vmatpush1.xpose.msra.mxu0 0.0
  %718 = vmatprep.subr.mxu0 0.0
  %719 = vmatpush1.xpose.msra.mxu0 0.0
  %720 = vmatprep.subr.mxu0 0.0
  %721 = vmatpush1.xpose.msra.mxu0 0.0
  %722 = vmatprep.subr.mxu0 0.0
  %723 = vmatpush1.xpose.msra.mxu0 0.0
  %724 = vmatprep.subr.mxu0 0.0
  %725 = vmatpush1.xpose.msra.mxu0 0.0
  %726 = vmatprep.subr.mxu0 0.0
  %727 = vmatpush1.xpose.msra.mxu0 0.0
  %728 = vmatprep.subr.mxu0 0.0
  %729 = vmatpush1.xpose.msra.mxu0 0.0
  %730 = vmatprep.subr.mxu0 0.0
  %731 = vmatpush1.xpose.msra.mxu0 0.0
  %732 = vmatprep.subr.mxu0 0.0
  %733 = vmatpush1.xpose.msra.mxu0 0.0
  %734 = vmatprep.subr.mxu0 0.0
  %735 = vmatpush1.xpose.msra.mxu0 0.0
  %736 = vmatprep.mubr.f32.mxu0 0.0
  %737 = vmatmul.mubr.f32.gmra.mrb[0].mxu0 %v668
  %v738 = vpop.f32.mrb[0].mxu0
  %v739 = vadd.f32 0.0, %v738
  %v740 = vpop.f32.mrb[0].mxu0
  %741 = vdwg.mxu0
  %742 = vst.msk [vmem:[#allocation2 + $0x30] sm:$0xff] %vm194, %v739
  %743 = vrot.lane.b32.xlu0 %v188, 104
  %v744 = vpop.permute.xlu0 %743
  %745 = vrot.lane.b32.xlu0 %v188, 72
  %v746 = vpop.permute.xlu0 %745
  %v747 = vsel %vm194, %v744, 0
  %v749 = vsel %vm194, %v746, 0
  %751 = vmatprep.subr.mxu0 0.0
  %752 = vmatpush1.xpose.msra.mxu0 %v749
  %753 = vmatprep.subr.mxu0 0.0
  %754 = vmatpush1.xpose.msra.mxu0 0.0
  %755 = vmatprep.subr.mxu0 0.0
  %756 = vmatpush1.xpose.msra.mxu0 0.0
  %757 = vmatprep.subr.mxu0 0.0
  %758 = vmatpush1.xpose.msra.mxu0 0.0
  %759 = vmatprep.subr.mxu0 0.0
  %760 = vmatpush1.xpose.msra.mxu0 0.0
  %761 = vmatprep.subr.mxu0 0.0
  %762 = vmatpush1.xpose.msra.mxu0 0.0
  %763 = vmatprep.subr.mxu0 0.0
  %764 = vmatpush1.xpose.msra.mxu0 0.0
  %765 = vmatprep.subr.mxu0 0.0
  %766 = vmatpush1.xpose.msra.mxu0 0.0
  %767 = vmatprep.subr.mxu0 0.0
  %768 = vmatpush1.xpose.msra.mxu0 0.0
  %769 = vmatprep.subr.mxu0 0.0
  %770 = vmatpush1.xpose.msra.mxu0 0.0
  %771 = vmatprep.subr.mxu0 0.0
  %772 = vmatpush1.xpose.msra.mxu0 0.0
  %773 = vmatprep.subr.mxu0 0.0
  %774 = vmatpush1.xpose.msra.mxu0 0.0
  %775 = vmatprep.subr.mxu0 0.0
  %776 = vmatpush1.xpose.msra.mxu0 0.0
  %777 = vmatprep.subr.mxu0 0.0
  %778 = vmatpush1.xpose.msra.mxu0 0.0
  %779 = vmatprep.subr.mxu0 0.0
  %780 = vmatpush1.xpose.msra.mxu0 0.0
  %781 = vmatprep.subr.mxu0 0.0
  %782 = vmatpush1.xpose.msra.mxu0 0.0
  %783 = vmatprep.subr.mxu0 0.0
  %784 = vmatpush1.xpose.msra.mxu0 0.0
  %785 = vmatprep.subr.mxu0 0.0
  %786 = vmatpush1.xpose.msra.mxu0 0.0
  %787 = vmatprep.subr.mxu0 0.0
  %788 = vmatpush1.xpose.msra.mxu0 0.0
  %789 = vmatprep.subr.mxu0 0.0
  %790 = vmatpush1.xpose.msra.mxu0 0.0
  %791 = vmatprep.subr.mxu0 0.0
  %792 = vmatpush1.xpose.msra.mxu0 0.0
  %793 = vmatprep.subr.mxu0 0.0
  %794 = vmatpush1.xpose.msra.mxu0 0.0
  %795 = vmatprep.subr.mxu0 0.0
  %796 = vmatpush1.xpose.msra.mxu0 0.0
  %797 = vmatprep.subr.mxu0 0.0
  %798 = vmatpush1.xpose.msra.mxu0 0.0
  %799 = vmatprep.subr.mxu0 0.0
  %800 = vmatpush1.xpose.msra.mxu0 0.0
  %801 = vmatprep.subr.mxu0 0.0
  %802 = vmatpush1.xpose.msra.mxu0 0.0
  %803 = vmatprep.subr.mxu0 0.0
  %804 = vmatpush1.xpose.msra.mxu0 0.0
  %805 = vmatprep.subr.mxu0 0.0
  %806 = vmatpush1.xpose.msra.mxu0 0.0
  %807 = vmatprep.subr.mxu0 0.0
  %808 = vmatpush1.xpose.msra.mxu0 0.0
  %809 = vmatprep.subr.mxu0 0.0
  %810 = vmatpush1.xpose.msra.mxu0 0.0
  %811 = vmatprep.subr.mxu0 0.0
  %812 = vmatpush1.xpose.msra.mxu0 0.0
  %813 = vmatprep.subr.mxu0 0.0
  %814 = vmatpush1.xpose.msra.mxu0 0.0
  %815 = vmatprep.mubr.f32.mxu0 0.0
  %816 = vmatmul.mubr.f32.gmra.mrb[0].mxu0 %v747
  %v817 = vpop.f32.mrb[0].mxu0
  %v818 = vadd.f32 0.0, %v817
  %v819 = vpop.f32.mrb[0].mxu0
  %820 = vdwg.mxu0
  %821 = vst.msk [vmem:[#allocation2 + $0x38] sm:$0xff] %vm194, %v818
  %v822 = vld [vmem:[#allocation2] sm:$0xff]
  %v823 = vld [vmem:[#allocation2 + $0x8] sm:$0xff]
  %v824 = vld [vmem:[#allocation2 + $0x10] sm:$0xff]
  %v825 = vld [vmem:[#allocation2 + $0x18] sm:$0xff]
  %v826 = vld [vmem:[#allocation2 + $0x20] sm:$0xff]
  %v827 = vld [vmem:[#allocation2 + $0x28] sm:$0xff]
  %v828 = vld [vmem:[#allocation2 + $0x30] sm:$0xff]
  %v829 = vld [vmem:[#allocation2 + $0x38] sm:$0xff]
  %v830 = vadd.f32 %v822, %v40
  %v831 = vadd.f32 %v823, %v41
  %v832 = vadd.f32 %v824, %v42
  %v833 = vadd.f32 %v825, %v43
  %v834 = vadd.f32 %v826, %v44
  %v835 = vadd.f32 %v827, %v45
  %v836 = vadd.f32 %v828, %v46
  %v837 = vadd.f32 %v829, %v47
  %v838 = vsel %vm194, %v830, -inf
  %839 = vmax.xlane.f32.xlu0 %v838
  %v840 = vpop.xlane.xlu0 %839
  %v841 = vsel %vm194, %v831, -inf
  %842 = vmax.xlane.f32.xlu0 %v841
  %v843 = vpop.xlane.xlu0 %842
  %v844 = vsel %vm194, %v832, -inf
  %845 = vmax.xlane.f32.xlu0 %v844
  %v846 = vpop.xlane.xlu0 %845
  %v847 = vsel %vm194, %v833, -inf
  %848 = vmax.xlane.f32.xlu0 %v847
  %v849 = vpop.xlane.xlu0 %848
  %v850 = vsel %vm194, %v834, -inf
  %851 = vmax.xlane.f32.xlu0 %v850
  %v852 = vpop.xlane.xlu0 %851
  %v853 = vsel %vm194, %v835, -inf
  %854 = vmax.xlane.f32.xlu0 %v853
  %v855 = vpop.xlane.xlu0 %854
  %v856 = vsel %vm194, %v836, -inf
  %857 = vmax.xlane.f32.xlu0 %v856
  %v858 = vpop.xlane.xlu0 %857
  %v859 = vsel %vm194, %v837, -inf
  %860 = vmax.xlane.f32.xlu0 %v859
  %v861 = vpop.xlane.xlu0 %860
  %v862 = vsub.f32 %v830, %v840
  %v863 = vsub.f32 %v831, %v843
  %v864 = vsub.f32 %v832, %v846
  %v865 = vsub.f32 %v833, %v849
  %v866 = vsub.f32 %v834, %v852
  %v867 = vsub.f32 %v835, %v855
  %v868 = vsub.f32 %v836, %v858
  %v869 = vsub.f32 %v837, %v861
  %v870 = vmul.f32 %v862, 1.442695
  %v871 = vpow.pop %v870
  %v872 = vmul.f32 %v863, 1.442695
  %v873 = vpow.pop %v872
  %v874 = vmul.f32 %v864, 1.442695
  %v875 = vpow.pop %v874
  %v876 = vmul.f32 %v865, 1.442695
  %v877 = vpow.pop %v876
  %v878 = vmul.f32 %v866, 1.442695
  %v879 = vpow.pop %v878
  %v880 = vmul.f32 %v867, 1.442695
  %v881 = vpow.pop %v880
  %v882 = vmul.f32 %v868, 1.442695
  %v883 = vpow.pop %v882
  %v884 = vmul.f32 %v869, 1.442695
  %v885 = vpow.pop %v884
  %v886 = vsel %vm194, %v871, 0.0
  %887 = vadd.xlane.f32.xlu0 %v886
  %v888 = vpop.xlane.xlu0 %887
  %v889 = vsel %vm194, %v873, 0.0
  %890 = vadd.xlane.f32.xlu0 %v889
  %v891 = vpop.xlane.xlu0 %890
  %v892 = vsel %vm194, %v875, 0.0
  %893 = vadd.xlane.f32.xlu0 %v892
  %v894 = vpop.xlane.xlu0 %893
  %v895 = vsel %vm194, %v877, 0.0
  %896 = vadd.xlane.f32.xlu0 %v895
  %v897 = vpop.xlane.xlu0 %896
  %v898 = vsel %vm194, %v879, 0.0
  %899 = vadd.xlane.f32.xlu0 %v898
  %v900 = vpop.xlane.xlu0 %899
  %v901 = vsel %vm194, %v881, 0.0
  %902 = vadd.xlane.f32.xlu0 %v901
  %v903 = vpop.xlane.xlu0 %902
  %v904 = vsel %vm194, %v883, 0.0
  %905 = vadd.xlane.f32.xlu0 %v904
  %v906 = vpop.xlane.xlu0 %905
  %v907 = vsel %vm194, %v885, 0.0
  %908 = vadd.xlane.f32.xlu0 %v907
  %v909 = vpop.xlane.xlu0 %908
  %v910 = vrcp.pop %v888
  %v911 = vmul.f32 %v871, %v910
  %v912 = vrcp.pop %v891
  %v913 = vmul.f32 %v873, %v912
  %v914 = vrcp.pop %v894
  %v915 = vmul.f32 %v875, %v914
  %v916 = vrcp.pop %v897
  %v917 = vmul.f32 %v877, %v916
  %v918 = vrcp.pop %v900
  %v919 = vmul.f32 %v879, %v918
  %v920 = vrcp.pop %v903
  %v921 = vmul.f32 %v881, %v920
  %v922 = vrcp.pop %v906
  %v923 = vmul.f32 %v883, %v922
  %v924 = vrcp.pop %v909
  %v925 = vmul.f32 %v885, %v924
  %926 = vst.msk [vmem:[%s12] sm:$0xff] %vm194, %v911
  %927 = vst.msk [vmem:[%s12 + $0x8] sm:$0xff] %vm194, %v913
  %928 = vst.msk [vmem:[%s12 + $0x10] sm:$0xff] %vm194, %v915
  %929 = vst.msk [vmem:[%s12 + $0x18] sm:$0xff] %vm194, %v917
  %930 = vst.msk [vmem:[%s12 + $0x20] sm:$0xff] %vm194, %v919
  %931 = vst.msk [vmem:[%s12 + $0x28] sm:$0xff] %vm194, %v921
  %932 = vst.msk [vmem:[%s12 + $0x30] sm:$0xff] %vm194, %v923
  %933 = vst.msk [vmem:[%s12 + $0x38] sm:$0xff] %vm194, %v925
  %v934 = vld [vmem:[%s5] sm:$0xff]
  %v935 = vld [vmem:[%s5 + $0x8] sm:$0xff]
  %v936 = vld [vmem:[%s5 + $0x10] sm:$0xff]
  %v937 = vld [vmem:[%s5 + $0x18] sm:$0xff]
  %v938 = vld [vmem:[%s6] sm:$0x1]
  %v940 = vlaneseq
  %v941 = vshrl.u32 %v940, 7
  %v942 = vsub.s32 0, %v941
  %v943 = vrot.slane %v938, %v942
  %945 = vmatprep.subr.mxu0 0.0
  %946 = vmatpush1.msra.mxu0 %v934
  %947 = vmatprep.subr.mxu0 0.0
  %948 = vmatpush1.msra.mxu0 %v935
  %949 = vmatprep.subr.mxu0 0.0
  %950 = vmatpush1.msra.mxu0 %v936
  %951 = vmatprep.subr.mxu0 0.0
  %952 = vmatpush1.msra.mxu0 %v937
  %953 = vmatprep.subr.mxu0 0.0
  %954 = vmatpush1.msra.mxu0 0.0
  %955 = vmatprep.subr.mxu0 0.0
  %956 = vmatpush1.msra.mxu0 0.0
  %957 = vmatprep.subr.mxu0 0.0
  %958 = vmatpush1.msra.mxu0 0.0
  %959 = vmatprep.subr.mxu0 0.0
  %960 = vmatpush1.msra.mxu0 0.0
  %961 = vmatprep.subr.mxu0 0.0
  %962 = vmatpush1.msra.mxu0 0.0
  %963 = vmatprep.subr.mxu0 0.0
  %964 = vmatpush1.msra.mxu0 0.0
  %965 = vmatprep.subr.mxu0 0.0
  %966 = vmatpush1.msra.mxu0 0.0
  %967 = vmatprep.subr.mxu0 0.0
  %968 = vmatpush1.msra.mxu0 0.0
  %969 = vmatprep.subr.mxu0 0.0
  %970 = vmatpush1.msra.mxu0 0.0
  %971 = vmatprep.subr.mxu0 0.0
  %972 = vmatpush1.msra.mxu0 0.0
  %973 = vmatprep.subr.mxu0 0.0
  %974 = vmatpush1.msra.mxu0 0.0
  %975 = vmatprep.subr.mxu0 0.0
  %976 = vmatpush1.msra.mxu0 0.0
  %977 = vmatprep.subr.mxu0 0.0
  %978 = vmatpush1.msra.mxu0 0.0
  %979 = vmatprep.subr.mxu0 0.0
  %980 = vmatpush1.msra.mxu0 0.0
  %981 = vmatprep.subr.mxu0 0.0
  %982 = vmatpush1.msra.mxu0 0.0
  %983 = vmatprep.subr.mxu0 0.0
  %984 = vmatpush1.msra.mxu0 0.0
  %985 = vmatprep.subr.mxu0 0.0
  %986 = vmatpush1.msra.mxu0 0.0
  %987 = vmatprep.subr.mxu0 0.0
  %988 = vmatpush1.msra.mxu0 0.0
  %989 = vmatprep.subr.mxu0 0.0
  %990 = vmatpush1.msra.mxu0 0.0
  %991 = vmatprep.subr.mxu0 0.0
  %992 = vmatpush1.msra.mxu0 0.0
  %993 = vmatprep.subr.mxu0 0.0
  %994 = vmatpush1.msra.mxu0 0.0
  %995 = vmatprep.subr.mxu0 0.0
  %996 = vmatpush1.msra.mxu0 0.0
  %997 = vmatprep.subr.mxu0 0.0
  %998 = vmatpush1.msra.mxu0 0.0
  %999 = vmatprep.subr.mxu0 0.0
  %1000 = vmatpush1.msra.mxu0 0.0
  %1001 = vmatprep.subr.mxu0 0.0
  %1002 = vmatpush1.msra.mxu0 0.0
  %1003 = vmatprep.subr.mxu0 0.0
  %1004 = vmatpush1.msra.mxu0 0.0
  %1005 = vmatprep.subr.mxu0 0.0
  %1006 = vmatpush1.msra.mxu0 0.0
  %1007 = vmatprep.subr.mxu0 0.0
  %1008 = vmatpush1.msra.mxu0 0.0
  %1009 = vmatprep.mubr.f32.mxu0 0.0
  %1010 = vmatmul.mubr.f32.gmra.mrb[0].mxu0 %v111
  %v1011 = vpop.f32.mrb[0].mxu0
  %v1012 = vadd.f32 %v943, %v1011
  %v1013 = vpop.f32.mrb[0].mxu0
  %1014 = vmatprep.mubr.f32.mxu0 0.0
  %1015 = vmatmul.mubr.f32.gmra.mrb[0].mxu0 %v114
  %v1016 = vpop.f32.mrb[0].mxu0
  %v1017 = vadd.f32 %v943, %v1016
  %v1018 = vpop.f32.mrb[0].mxu0
  %1019 = vdwg.mxu0
  %s1020 = scalar_lea.vmem %s5, 32
  %v1021 = vld [vmem:[%s1020] sm:$0xff]
  %v1022 = vld [vmem:[%s1020 + $0x8] sm:$0xff]
  %v1023 = vld [vmem:[%s1020 + $0x10] sm:$0xff]
  %v1024 = vld [vmem:[%s1020 + $0x18] sm:$0xff]
  %s1025 = scalar_lea.vmem %s6, 1
  %v1026 = vld [vmem:[%s1025] sm:$0x1]
  %v1028 = vlaneseq
  %v1029 = vshrl.u32 %v1028, 7
  %v1030 = vsub.s32 0, %v1029
  %v1031 = vrot.slane %v1026, %v1030
  %1033 = vmatprep.subr.mxu0 0.0
  %1034 = vmatpush1.msra.mxu0 %v1021
  %1035 = vmatprep.subr.mxu0 0.0
  %1036 = vmatpush1.msra.mxu0 %v1022
  %1037 = vmatprep.subr.mxu0 0.0
  %1038 = vmatpush1.msra.mxu0 %v1023
  %1039 = vmatprep.subr.mxu0 0.0
  %1040 = vmatpush1.msra.mxu0 %v1024
  %1041 = vmatprep.subr.mxu0 0.0
  %1042 = vmatpush1.msra.mxu0 0.0
  %1043 = vmatprep.subr.mxu0 0.0
  %1044 = vmatpush1.msra.mxu0 0.0
  %1045 = vmatprep.subr.mxu0 0.0
  %1046 = vmatpush1.msra.mxu0 0.0
  %1047 = vmatprep.subr.mxu0 0.0
  %1048 = vmatpush1.msra.mxu0 0.0
  %1049 = vmatprep.subr.mxu0 0.0
  %1050 = vmatpush1.msra.mxu0 0.0
  %1051 = vmatprep.subr.mxu0 0.0
  %1052 = vmatpush1.msra.mxu0 0.0
  %1053 = vmatprep.subr.mxu0 0.0
  %1054 = vmatpush1.msra.mxu0 0.0
  %1055 = vmatprep.subr.mxu0 0.0
  %1056 = vmatpush1.msra.mxu0 0.0
  %1057 = vmatprep.subr.mxu0 0.0
  %1058 = vmatpush1.msra.mxu0 0.0
  %1059 = vmatprep.subr.mxu0 0.0
  %1060 = vmatpush1.msra.mxu0 0.0
  %1061 = vmatprep.subr.mxu0 0.0
  %1062 = vmatpush1.msra.mxu0 0.0
  %1063 = vmatprep.subr.mxu0 0.0
  %1064 = vmatpush1.msra.mxu0 0.0
  %1065 = vmatprep.subr.mxu0 0.0
  %1066 = vmatpush1.msra.mxu0 0.0
  %1067 = vmatprep.subr.mxu0 0.0
  %1068 = vmatpush1.msra.mxu0 0.0
  %1069 = vmatprep.subr.mxu0 0.0
  %1070 = vmatpush1.msra.mxu0 0.0
  %1071 = vmatprep.subr.mxu0 0.0
  %1072 = vmatpush1.msra.mxu0 0.0
  %1073 = vmatprep.subr.mxu0 0.0
  %1074 = vmatpush1.msra.mxu0 0.0
  %1075 = vmatprep.subr.mxu0 0.0
  %1076 = vmatpush1.msra.mxu0 0.0
  %1077 = vmatprep.subr.mxu0 0.0
  %1078 = vmatpush1.msra.mxu0 0.0
  %1079 = vmatprep.subr.mxu0 0.0
  %1080 = vmatpush1.msra.mxu0 0.0
  %1081 = vmatprep.subr.mxu0 0.0
  %1082 = vmatpush1.msra.mxu0 0.0
  %1083 = vmatprep.subr.mxu0 0.0
  %1084 = vmatpush1.msra.mxu0 0.0
  %1085 = vmatprep.subr.mxu0 0.0
  %1086 = vmatpush1.msra.mxu0 0.0
  %1087 = vmatprep.subr.mxu0 0.0
  %1088 = vmatpush1.msra.mxu0 0.0
  %1089 = vmatprep.subr.mxu0 0.0
  %1090 = vmatpush1.msra.mxu0 0.0
  %1091 = vmatprep.subr.mxu0 0.0
  %1092 = vmatpush1.msra.mxu0 0.0
  %1093 = vmatprep.subr.mxu0 0.0
  %1094 = vmatpush1.msra.mxu0 0.0
  %1095 = vmatprep.subr.mxu0 0.0
  %1096 = vmatpush1.msra.mxu0 0.0
  %1097 = vmatprep.mubr.f32.mxu0 0.0
  %1098 = vmatmul.mubr.f32.gmra.mrb[0].mxu0 %v111
  %v1099 = vpop.f32.mrb[0].mxu0
  %v1100 = vadd.f32 %v1031, %v1099
  %v1101 = vpop.f32.mrb[0].mxu0
  %1102 = vmatprep.mubr.f32.mxu0 0.0
  %1103 = vmatmul.mubr.f32.gmra.mrb[0].mxu0 %v114
  %v1104 = vpop.f32.mrb[0].mxu0
  %v1105 = vadd.f32 %v1031, %v1104
  %v1106 = vpop.f32.mrb[0].mxu0
  %1107 = vdwg.mxu0
  %s1108 = scalar_lea.vmem %s5, 64
  %v1109 = vld [vmem:[%s1108] sm:$0xff]
  %v1110 = vld [vmem:[%s1108 + $0x8] sm:$0xff]
  %v1111 = vld [vmem:[%s1108 + $0x10] sm:$0xff]
  %v1112 = vld [vmem:[%s1108 + $0x18] sm:$0xff]
  %s1113 = scalar_lea.vmem %s6, 2
  %v1114 = vld [vmem:[%s1113] sm:$0x1]
  %v1116 = vlaneseq
  %v1117 = vshrl.u32 %v1116, 7
  %v1118 = vsub.s32 0, %v1117
  %v1119 = vrot.slane %v1114, %v1118
  %1121 = vmatprep.subr.mxu0 0.0
  %1122 = vmatpush1.msra.mxu0 %v1109
  %1123 = vmatprep.subr.mxu0 0.0
  %1124 = vmatpush1.msra.mxu0 %v1110
  %1125 = vmatprep.subr.mxu0 0.0
  %1126 = vmatpush1.msra.mxu0 %v1111
  %1127 = vmatprep.subr.mxu0 0.0
  %1128 = vmatpush1.msra.mxu0 %v1112
  %1129 = vmatprep.subr.mxu0 0.0
  %1130 = vmatpush1.msra.mxu0 0.0
  %1131 = vmatprep.subr.mxu0 0.0
  %1132 = vmatpush1.msra.mxu0 0.0
  %1133 = vmatprep.subr.mxu0 0.0
  %1134 = vmatpush1.msra.mxu0 0.0
  %1135 = vmatprep.subr.mxu0 0.0
  %1136 = vmatpush1.msra.mxu0 0.0
  %1137 = vmatprep.subr.mxu0 0.0
  %1138 = vmatpush1.msra.mxu0 0.0
  %1139 = vmatprep.subr.mxu0 0.0
  %1140 = vmatpush1.msra.mxu0 0.0
  %1141 = vmatprep.subr.mxu0 0.0
  %1142 = vmatpush1.msra.mxu0 0.0
  %1143 = vmatprep.subr.mxu0 0.0
  %1144 = vmatpush1.msra.mxu0 0.0
  %1145 = vmatprep.subr.mxu0 0.0
  %1146 = vmatpush1.msra.mxu0 0.0
  %1147 = vmatprep.subr.mxu0 0.0
  %1148 = vmatpush1.msra.mxu0 0.0
  %1149 = vmatprep.subr.mxu0 0.0
  %1150 = vmatpush1.msra.mxu0 0.0
  %1151 = vmatprep.subr.mxu0 0.0
  %1152 = vmatpush1.msra.mxu0 0.0
  %1153 = vmatprep.subr.mxu0 0.0
  %1154 = vmatpush1.msra.mxu0 0.0
  %1155 = vmatprep.subr.mxu0 0.0
  %1156 = vmatpush1.msra.mxu0 0.0
  %1157 = vmatprep.subr.mxu0 0.0
  %1158 = vmatpush1.msra.mxu0 0.0
  %1159 = vmatprep.subr.mxu0 0.0
  %1160 = vmatpush1.msra.mxu0 0.0
  %1161 = vmatprep.subr.mxu0 0.0
  %1162 = vmatpush1.msra.mxu0 0.0
  %1163 = vmatprep.subr.mxu0 0.0
  %1164 = vmatpush1.msra.mxu0 0.0
  %1165 = vmatprep.subr.mxu0 0.0
  %1166 = vmatpush1.msra.mxu0 0.0
  %1167 = vmatprep.subr.mxu0 0.0
  %1168 = vmatpush1.msra.mxu0 0.0
  %1169 = vmatprep.subr.mxu0 0.0
  %1170 = vmatpush1.msra.mxu0 0.0
  %1171 = vmatprep.subr.mxu0 0.0
  %1172 = vmatpush1.msra.mxu0 0.0
  %1173 = vmatprep.subr.mxu0 0.0
  %1174 = vmatpush1.msra.mxu0 0.0
  %1175 = vmatprep.subr.mxu0 0.0
  %1176 = vmatpush1.msra.mxu0 0.0
  %1177 = vmatprep.subr.mxu0 0.0
  %1178 = vmatpush1.msra.mxu0 0.0
  %1179 = vmatprep.subr.mxu0 0.0
  %1180 = vmatpush1.msra.mxu0 0.0
  %1181 = vmatprep.subr.mxu0 0.0
  %1182 = vmatpush1.msra.mxu0 0.0
  %1183 = vmatprep.subr.mxu0 0.0
  %1184 = vmatpush1.msra.mxu0 0.0
  %1185 = vmatprep.mubr.f32.mxu0 0.0
  %1186 = vmatmul.mubr.f32.gmra.mrb[0].mxu0 %v111
  %v1187 = vpop.f32.mrb[0].mxu0
  %v1188 = vadd.f32 %v1119, %v1187
  %v1189 = vpop.f32.mrb[0].mxu0
  %1190 = vmatprep.mubr.f32.mxu0 0.0
  %1191 = vmatmul.mubr.f32.gmra.mrb[0].mxu0 %v114
  %v1192 = vpop.f32.mrb[0].mxu0
  %v1193 = vadd.f32 %v1119, %v1192
  %v1194 = vpop.f32.mrb[0].mxu0
  %1195 = vdwg.mxu0
  %s1196 = scalar_lea.vmem %s5, 96
  %v1197 = vld [vmem:[%s1196] sm:$0xff]
  %v1198 = vld [vmem:[%s1196 + $0x8] sm:$0xff]
  %v1199 = vld [vmem:[%s1196 + $0x10] sm:$0xff]
  %v1200 = vld [vmem:[%s1196 + $0x18] sm:$0xff]
  %s1201 = scalar_lea.vmem %s6, 3
  %v1202 = vld [vmem:[%s1201] sm:$0x1]
  %v1204 = vlaneseq
  %v1205 = vshrl.u32 %v1204, 7
  %v1206 = vsub.s32 0, %v1205
  %v1207 = vrot.slane %v1202, %v1206
  %1209 = vmatprep.subr.mxu0 0.0
  %1210 = vmatpush1.msra.mxu0 %v1197
  %1211 = vmatprep.subr.mxu0 0.0
  %1212 = vmatpush1.msra.mxu0 %v1198
  %1213 = vmatprep.subr.mxu0 0.0
  %1214 = vmatpush1.msra.mxu0 %v1199
  %1215 = vmatprep.subr.mxu0 0.0
  %1216 = vmatpush1.msra.mxu0 %v1200
  %1217 = vmatprep.subr.mxu0 0.0
  %1218 = vmatpush1.msra.mxu0 0.0
  %1219 = vmatprep.subr.mxu0 0.0
  %1220 = vmatpush1.msra.mxu0 0.0
  %1221 = vmatprep.subr.mxu0 0.0
  %1222 = vmatpush1.msra.mxu0 0.0
  %1223 = vmatprep.subr.mxu0 0.0
  %1224 = vmatpush1.msra.mxu0 0.0
  %1225 = vmatprep.subr.mxu0 0.0
  %1226 = vmatpush1.msra.mxu0 0.0
  %1227 = vmatprep.subr.mxu0 0.0
  %1228 = vmatpush1.msra.mxu0 0.0
  %1229 = vmatprep.subr.mxu0 0.0
  %1230 = vmatpush1.msra.mxu0 0.0
  %1231 = vmatprep.subr.mxu0 0.0
  %1232 = vmatpush1.msra.mxu0 0.0
  %1233 = vmatprep.subr.mxu0 0.0
  %1234 = vmatpush1.msra.mxu0 0.0
  %1235 = vmatprep.subr.mxu0 0.0
  %1236 = vmatpush1.msra.mxu0 0.0
  %1237 = vmatprep.subr.mxu0 0.0
  %1238 = vmatpush1.msra.mxu0 0.0
  %1239 = vmatprep.subr.mxu0 0.0
  %1240 = vmatpush1.msra.mxu0 0.0
  %1241 = vmatprep.subr.mxu0 0.0
  %1242 = vmatpush1.msra.mxu0 0.0
  %1243 = vmatprep.subr.mxu0 0.0
  %1244 = vmatpush1.msra.mxu0 0.0
  %1245 = vmatprep.subr.mxu0 0.0
  %1246 = vmatpush1.msra.mxu0 0.0
  %1247 = vmatprep.subr.mxu0 0.0
  %1248 = vmatpush1.msra.mxu0 0.0
  %1249 = vmatprep.subr.mxu0 0.0
  %1250 = vmatpush1.msra.mxu0 0.0
  %1251 = vmatprep.subr.mxu0 0.0
  %1252 = vmatpush1.msra.mxu0 0.0
  %1253 = vmatprep.subr.mxu0 0.0
  %1254 = vmatpush1.msra.mxu0 0.0
  %1255 = vmatprep.subr.mxu0 0.0
  %1256 = vmatpush1.msra.mxu0 0.0
  %1257 = vmatprep.subr.mxu0 0.0
  %1258 = vmatpush1.msra.mxu0 0.0
  %1259 = vmatprep.subr.mxu0 0.0
  %1260 = vmatpush1.msra.mxu0 0.0
  %1261 = vmatprep.subr.mxu0 0.0
  %1262 = vmatpush1.msra.mxu0 0.0
  %1263 = vmatprep.subr.mxu0 0.0
  %1264 = vmatpush1.msra.mxu0 0.0
  %1265 = vmatprep.subr.mxu0 0.0
  %1266 = vmatpush1.msra.mxu0 0.0
  %1267 = vmatprep.subr.mxu0 0.0
  %1268 = vmatpush1.msra.mxu0 0.0
  %1269 = vmatprep.subr.mxu0 0.0
  %1270 = vmatpush1.msra.mxu0 0.0
  %1271 = vmatprep.subr.mxu0 0.0
  %1272 = vmatpush1.msra.mxu0 0.0
  %1273 = vmatprep.mubr.f32.mxu0 0.0
  %1274 = vmatmul.mubr.f32.gmra.mrb[0].mxu0 %v111
  %v1275 = vpop.f32.mrb[0].mxu0
  %v1276 = vadd.f32 %v1207, %v1275
  %v1277 = vpop.f32.mrb[0].mxu0
  %1278 = vmatprep.mubr.f32.mxu0 0.0
  %1279 = vmatmul.mubr.f32.gmra.mrb[0].mxu0 %v114
  %v1280 = vpop.f32.mrb[0].mxu0
  %v1281 = vadd.f32 %v1207, %v1280
  %v1282 = vpop.f32.mrb[0].mxu0
  %1283 = vdwg.mxu0
  %v1284 = vld [vmem:[%s10] sm:$0x1]
  %v1286 = vlaneseq
  %v1287 = vshrl.u32 %v1286, 7
  %v1288 = vsub.s32 0, %v1287
  %v1289 = vrot.slane %v1284, %v1288
  %v1291 = vadd.f32 %v95, %v1289
  %v1293 = vsel %vm194, %v911, 0
  %1295 = vmatprep.subr.mxu0 0.0
  %1296 = vmatpush1.msra.mxu0 %v1012
  %1297 = vmatprep.subr.mxu0 0.0
  %1298 = vmatpush1.msra.mxu0 0.0
  %1299 = vmatprep.subr.mxu0 0.0
  %1300 = vmatpush1.msra.mxu0 0.0
  %1301 = vmatprep.subr.mxu0 0.0
  %1302 = vmatpush1.msra.mxu0 0.0
  %1303 = vmatprep.subr.mxu0 0.0
  %1304 = vmatpush1.msra.mxu0 0.0
  %1305 = vmatprep.subr.mxu0 0.0
  %1306 = vmatpush1.msra.mxu0 0.0
  %1307 = vmatprep.subr.mxu0 0.0
  %1308 = vmatpush1.msra.mxu0 0.0
  %1309 = vmatprep.subr.mxu0 0.0
  %1310 = vmatpush1.msra.mxu0 0.0
  %1311 = vmatprep.subr.mxu0 0.0
  %1312 = vmatpush1.msra.mxu0 0.0
  %1313 = vmatprep.subr.mxu0 0.0
  %1314 = vmatpush1.msra.mxu0 0.0
  %1315 = vmatprep.subr.mxu0 0.0
  %1316 = vmatpush1.msra.mxu0 0.0
  %1317 = vmatprep.subr.mxu0 0.0
  %1318 = vmatpush1.msra.mxu0 0.0
  %1319 = vmatprep.subr.mxu0 0.0
  %1320 = vmatpush1.msra.mxu0 0.0
  %1321 = vmatprep.subr.mxu0 0.0
  %1322 = vmatpush1.msra.mxu0 0.0
  %1323 = vmatprep.subr.mxu0 0.0
  %1324 = vmatpush1.msra.mxu0 0.0
  %1325 = vmatprep.subr.mxu0 0.0
  %1326 = vmatpush1.msra.mxu0 0.0
  %1327 = vmatprep.subr.mxu0 0.0
  %1328 = vmatpush1.msra.mxu0 0.0
  %1329 = vmatprep.subr.mxu0 0.0
  %1330 = vmatpush1.msra.mxu0 0.0
  %1331 = vmatprep.subr.mxu0 0.0
  %1332 = vmatpush1.msra.mxu0 0.0
  %1333 = vmatprep.subr.mxu0 0.0
  %1334 = vmatpush1.msra.mxu0 0.0
  %1335 = vmatprep.subr.mxu0 0.0
  %1336 = vmatpush1.msra.mxu0 0.0
  %1337 = vmatprep.subr.mxu0 0.0
  %1338 = vmatpush1.msra.mxu0 0.0
  %1339 = vmatprep.subr.mxu0 0.0
  %1340 = vmatpush1.msra.mxu0 0.0
  %1341 = vmatprep.subr.mxu0 0.0
  %1342 = vmatpush1.msra.mxu0 0.0
  %1343 = vmatprep.subr.mxu0 0.0
  %1344 = vmatpush1.msra.mxu0 0.0
  %1345 = vmatprep.subr.mxu0 0.0
  %1346 = vmatpush1.msra.mxu0 0.0
  %1347 = vmatprep.subr.mxu0 0.0
  %1348 = vmatpush1.msra.mxu0 0.0
  %1349 = vmatprep.subr.mxu0 0.0
  %1350 = vmatpush1.msra.mxu0 0.0
  %1351 = vmatprep.subr.mxu0 0.0
  %1352 = vmatpush1.msra.mxu0 0.0
  %1353 = vmatprep.subr.mxu0 0.0
  %1354 = vmatpush1.msra.mxu0 0.0
  %1355 = vmatprep.subr.mxu0 0.0
  %1356 = vmatpush1.msra.mxu0 0.0
  %1357 = vmatprep.subr.mxu0 0.0
  %1358 = vmatpush1.msra.mxu0 0.0
  %1359 = vmatprep.mubr.f32.mxu0 0.0
  %1360 = vmatmul.mubr.f32.gmra.mrb[0].mxu0 %v1293
  %v1361 = vpop.f32.mrb[0].mxu0
  %v1362 = vadd.f32 0.0, %v1361
  %v1363 = vpop.f32.mrb[0].mxu0
  %1364 = vdwg.mxu0
  %v1365 = vadd.f32 %v1291, %v1362
  %v1367 = vsel %vm194, %v913, 0
  %1369 = vmatprep.subr.mxu0 0.0
  %1370 = vmatpush1.msra.mxu0 %v1100
  %1371 = vmatprep.subr.mxu0 0.0
  %1372 = vmatpush1.msra.mxu0 0.0
  %1373 = vmatprep.subr.mxu0 0.0
  %1374 = vmatpush1.msra.mxu0 0.0
  %1375 = vmatprep.subr.mxu0 0.0
  %1376 = vmatpush1.msra.mxu0 0.0
  %1377 = vmatprep.subr.mxu0 0.0
  %1378 = vmatpush1.msra.mxu0 0.0
  %1379 = vmatprep.subr.mxu0 0.0
  %1380 = vmatpush1.msra.mxu0 0.0
  %1381 = vmatprep.subr.mxu0 0.0
  %1382 = vmatpush1.msra.mxu0 0.0
  %1383 = vmatprep.subr.mxu0 0.0
  %1384 = vmatpush1.msra.mxu0 0.0
  %1385 = vmatprep.subr.mxu0 0.0
  %1386 = vmatpush1.msra.mxu0 0.0
  %1387 = vmatprep.subr.mxu0 0.0
  %1388 = vmatpush1.msra.mxu0 0.0
  %1389 = vmatprep.subr.mxu0 0.0
  %1390 = vmatpush1.msra.mxu0 0.0
  %1391 = vmatprep.subr.mxu0 0.0
  %1392 = vmatpush1.msra.mxu0 0.0
  %1393 = vmatprep.subr.mxu0 0.0
  %1394 = vmatpush1.msra.mxu0 0.0
  %1395 = vmatprep.subr.mxu0 0.0
  %1396 = vmatpush1.msra.mxu0 0.0
  %1397 = vmatprep.subr.mxu0 0.0
  %1398 = vmatpush1.msra.mxu0 0.0
  %1399 = vmatprep.subr.mxu0 0.0
  %1400 = vmatpush1.msra.mxu0 0.0
  %1401 = vmatprep.subr.mxu0 0.0
  %1402 = vmatpush1.msra.mxu0 0.0
  %1403 = vmatprep.subr.mxu0 0.0
  %1404 = vmatpush1.msra.mxu0 0.0
  %1405 = vmatprep.subr.mxu0 0.0
  %1406 = vmatpush1.msra.mxu0 0.0
  %1407 = vmatprep.subr.mxu0 0.0
  %1408 = vmatpush1.msra.mxu0 0.0
  %1409 = vmatprep.subr.mxu0 0.0
  %1410 = vmatpush1.msra.mxu0 0.0
  %1411 = vmatprep.subr.mxu0 0.0
  %1412 = vmatpush1.msra.mxu0 0.0
  %1413 = vmatprep.subr.mxu0 0.0
  %1414 = vmatpush1.msra.mxu0 0.0
  %1415 = vmatprep.subr.mxu0 0.0
  %1416 = vmatpush1.msra.mxu0 0.0
  %1417 = vmatprep.subr.mxu0 0.0
  %1418 = vmatpush1.msra.mxu0 0.0
  %1419 = vmatprep.subr.mxu0 0.0
  %1420 = vmatpush1.msra.mxu0 0.0
  %1421 = vmatprep.subr.mxu0 0.0
  %1422 = vmatpush1.msra.mxu0 0.0
  %1423 = vmatprep.subr.mxu0 0.0
  %1424 = vmatpush1.msra.mxu0 0.0
  %1425 = vmatprep.subr.mxu0 0.0
  %1426 = vmatpush1.msra.mxu0 0.0
  %1427 = vmatprep.subr.mxu0 0.0
  %1428 = vmatpush1.msra.mxu0 0.0
  %1429 = vmatprep.subr.mxu0 0.0
  %1430 = vmatpush1.msra.mxu0 0.0
  %1431 = vmatprep.subr.mxu0 0.0
  %1432 = vmatpush1.msra.mxu0 0.0
  %1433 = vmatprep.mubr.f32.mxu0 0.0
  %1434 = vmatmul.mubr.f32.gmra.mrb[0].mxu0 %v1367
  %v1435 = vpop.f32.mrb[0].mxu0
  %v1436 = vadd.f32 0.0, %v1435
  %v1437 = vpop.f32.mrb[0].mxu0
  %1438 = vdwg.mxu0
  %v1439 = vadd.f32 %v1365, %v1436
  %v1441 = vsel %vm194, %v915, 0
  %1443 = vmatprep.subr.mxu0 0.0
  %1444 = vmatpush1.msra.mxu0 %v1188
  %1445 = vmatprep.subr.mxu0 0.0
  %1446 = vmatpush1.msra.mxu0 0.0
  %1447 = vmatprep.subr.mxu0 0.0
  %1448 = vmatpush1.msra.mxu0 0.0
  %1449 = vmatprep.subr.mxu0 0.0
  %1450 = vmatpush1.msra.mxu0 0.0
  %1451 = vmatprep.subr.mxu0 0.0
  %1452 = vmatpush1.msra.mxu0 0.0
  %1453 = vmatprep.subr.mxu0 0.0
  %1454 = vmatpush1.msra.mxu0 0.0
  %1455 = vmatprep.subr.mxu0 0.0
  %1456 = vmatpush1.msra.mxu0 0.0
  %1457 = vmatprep.subr.mxu0 0.0
  %1458 = vmatpush1.msra.mxu0 0.0
  %1459 = vmatprep.subr.mxu0 0.0
  %1460 = vmatpush1.msra.mxu0 0.0
  %1461 = vmatprep.subr.mxu0 0.0
  %1462 = vmatpush1.msra.mxu0 0.0
  %1463 = vmatprep.subr.mxu0 0.0
  %1464 = vmatpush1.msra.mxu0 0.0
  %1465 = vmatprep.subr.mxu0 0.0
  %1466 = vmatpush1.msra.mxu0 0.0
  %1467 = vmatprep.subr.mxu0 0.0
  %1468 = vmatpush1.msra.mxu0 0.0
  %1469 = vmatprep.subr.mxu0 0.0
  %1470 = vmatpush1.msra.mxu0 0.0
  %1471 = vmatprep.subr.mxu0 0.0
  %1472 = vmatpush1.msra.mxu0 0.0
  %1473 = vmatprep.subr.mxu0 0.0
  %1474 = vmatpush1.msra.mxu0 0.0
  %1475 = vmatprep.subr.mxu0 0.0
  %1476 = vmatpush1.msra.mxu0 0.0
  %1477 = vmatprep.subr.mxu0 0.0
  %1478 = vmatpush1.msra.mxu0 0.0
  %1479 = vmatprep.subr.mxu0 0.0
  %1480 = vmatpush1.msra.mxu0 0.0
  %1481 = vmatprep.subr.mxu0 0.0
  %1482 = vmatpush1.msra.mxu0 0.0
  %1483 = vmatprep.subr.mxu0 0.0
  %1484 = vmatpush1.msra.mxu0 0.0
  %1485 = vmatprep.subr.mxu0 0.0
  %1486 = vmatpush1.msra.mxu0 0.0
  %1487 = vmatprep.subr.mxu0 0.0
  %1488 = vmatpush1.msra.mxu0 0.0
  %1489 = vmatprep.subr.mxu0 0.0
  %1490 = vmatpush1.msra.mxu0 0.0
  %1491 = vmatprep.subr.mxu0 0.0
  %1492 = vmatpush1.msra.mxu0 0.0
  %1493 = vmatprep.subr.mxu0 0.0
  %1494 = vmatpush1.msra.mxu0 0.0
  %1495 = vmatprep.subr.mxu0 0.0
  %1496 = vmatpush1.msra.mxu0 0.0
  %1497 = vmatprep.subr.mxu0 0.0
  %1498 = vmatpush1.msra.mxu0 0.0
  %1499 = vmatprep.subr.mxu0 0.0
  %1500 = vmatpush1.msra.mxu0 0.0
  %1501 = vmatprep.subr.mxu0 0.0
  %1502 = vmatpush1.msra.mxu0 0.0
  %1503 = vmatprep.subr.mxu0 0.0
  %1504 = vmatpush1.msra.mxu0 0.0
  %1505 = vmatprep.subr.mxu0 0.0
  %1506 = vmatpush1.msra.mxu0 0.0
  %1507 = vmatprep.mubr.f32.mxu0 0.0
  %1508 = vmatmul.mubr.f32.gmra.mrb[0].mxu0 %v1441
  %v1509 = vpop.f32.mrb[0].mxu0
  %v1510 = vadd.f32 0.0, %v1509
  %v1511 = vpop.f32.mrb[0].mxu0
  %1512 = vdwg.mxu0
  %v1513 = vadd.f32 %v1439, %v1510
  %v1515 = vsel %vm194, %v917, 0
  %1517 = vmatprep.subr.mxu0 0.0
  %1518 = vmatpush1.msra.mxu0 %v1276
  %1519 = vmatprep.subr.mxu0 0.0
  %1520 = vmatpush1.msra.mxu0 0.0
  %1521 = vmatprep.subr.mxu0 0.0
  %1522 = vmatpush1.msra.mxu0 0.0
  %1523 = vmatprep.subr.mxu0 0.0
  %1524 = vmatpush1.msra.mxu0 0.0
  %1525 = vmatprep.subr.mxu0 0.0
  %1526 = vmatpush1.msra.mxu0 0.0
  %1527 = vmatprep.subr.mxu0 0.0
  %1528 = vmatpush1.msra.mxu0 0.0
  %1529 = vmatprep.subr.mxu0 0.0
  %1530 = vmatpush1.msra.mxu0 0.0
  %1531 = vmatprep.subr.mxu0 0.0
  %1532 = vmatpush1.msra.mxu0 0.0
  %1533 = vmatprep.subr.mxu0 0.0
  %1534 = vmatpush1.msra.mxu0 0.0
  %1535 = vmatprep.subr.mxu0 0.0
  %1536 = vmatpush1.msra.mxu0 0.0
  %1537 = vmatprep.subr.mxu0 0.0
  %1538 = vmatpush1.msra.mxu0 0.0
  %1539 = vmatprep.subr.mxu0 0.0
  %1540 = vmatpush1.msra.mxu0 0.0
  %1541 = vmatprep.subr.mxu0 0.0
  %1542 = vmatpush1.msra.mxu0 0.0
  %1543 = vmatprep.subr.mxu0 0.0
  %1544 = vmatpush1.msra.mxu0 0.0
  %1545 = vmatprep.subr.mxu0 0.0
  %1546 = vmatpush1.msra.mxu0 0.0
  %1547 = vmatprep.subr.mxu0 0.0
  %1548 = vmatpush1.msra.mxu0 0.0
  %1549 = vmatprep.subr.mxu0 0.0
  %1550 = vmatpush1.msra.mxu0 0.0
  %1551 = vmatprep.subr.mxu0 0.0
  %1552 = vmatpush1.msra.mxu0 0.0
  %1553 = vmatprep.subr.mxu0 0.0
  %1554 = vmatpush1.msra.mxu0 0.0
  %1555 = vmatprep.subr.mxu0 0.0
  %1556 = vmatpush1.msra.mxu0 0.0
  %1557 = vmatprep.subr.mxu0 0.0
  %1558 = vmatpush1.msra.mxu0 0.0
  %1559 = vmatprep.subr.mxu0 0.0
  %1560 = vmatpush1.msra.mxu0 0.0
  %1561 = vmatprep.subr.mxu0 0.0
  %1562 = vmatpush1.msra.mxu0 0.0
  %1563 = vmatprep.subr.mxu0 0.0
  %1564 = vmatpush1.msra.mxu0 0.0
  %1565 = vmatprep.subr.mxu0 0.0
  %1566 = vmatpush1.msra.mxu0 0.0
  %1567 = vmatprep.subr.mxu0 0.0
  %1568 = vmatpush1.msra.mxu0 0.0
  %1569 = vmatprep.subr.mxu0 0.0
  %1570 = vmatpush1.msra.mxu0 0.0
  %1571 = vmatprep.subr.mxu0 0.0
  %1572 = vmatpush1.msra.mxu0 0.0
  %1573 = vmatprep.subr.mxu0 0.0
  %1574 = vmatpush1.msra.mxu0 0.0
  %1575 = vmatprep.subr.mxu0 0.0
  %1576 = vmatpush1.msra.mxu0 0.0
  %1577 = vmatprep.subr.mxu0 0.0
  %1578 = vmatpush1.msra.mxu0 0.0
  %1579 = vmatprep.subr.mxu0 0.0
  %1580 = vmatpush1.msra.mxu0 0.0
  %1581 = vmatprep.mubr.f32.mxu0 0.0
  %1582 = vmatmul.mubr.f32.gmra.mrb[0].mxu0 %v1515
  %v1583 = vpop.f32.mrb[0].mxu0
  %v1584 = vadd.f32 0.0, %v1583
  %v1585 = vpop.f32.mrb[0].mxu0
  %1586 = vdwg.mxu0
  %v1587 = vadd.f32 %v1513, %v1584
  %1588 = vst.msk [vmem:[#allocation3] sm:$0xff] %vm53, %v1587
  %v1589 = vld [vmem:[%s10] sm:$0x1]
  %v1591 = vlaneseq
  %v1592 = vshrl.u32 %v1591, 7
  %v1593 = vsub.s32 0, %v1592
  %v1594 = vrot.slane %v1589, %v1593
  %v1596 = vadd.f32 %v96, %v1594
  %v1598 = vsel %vm194, %v919, 0
  %1600 = vmatprep.subr.mxu0 0.0
  %1601 = vmatpush1.msra.mxu0 %v1017
  %1602 = vmatprep.subr.mxu0 0.0
  %1603 = vmatpush1.msra.mxu0 0.0
  %1604 = vmatprep.subr.mxu0 0.0
  %1605 = vmatpush1.msra.mxu0 0.0
  %1606 = vmatprep.subr.mxu0 0.0
  %1607 = vmatpush1.msra.mxu0 0.0
  %1608 = vmatprep.subr.mxu0 0.0
  %1609 = vmatpush1.msra.mxu0 0.0
  %1610 = vmatprep.subr.mxu0 0.0
  %1611 = vmatpush1.msra.mxu0 0.0
  %1612 = vmatprep.subr.mxu0 0.0
  %1613 = vmatpush1.msra.mxu0 0.0
  %1614 = vmatprep.subr.mxu0 0.0
  %1615 = vmatpush1.msra.mxu0 0.0
  %1616 = vmatprep.subr.mxu0 0.0
  %1617 = vmatpush1.msra.mxu0 0.0
  %1618 = vmatprep.subr.mxu0 0.0
  %1619 = vmatpush1.msra.mxu0 0.0
  %1620 = vmatprep.subr.mxu0 0.0
  %1621 = vmatpush1.msra.mxu0 0.0
  %1622 = vmatprep.subr.mxu0 0.0
  %1623 = vmatpush1.msra.mxu0 0.0
  %1624 = vmatprep.subr.mxu0 0.0
  %1625 = vmatpush1.msra.mxu0 0.0
  %1626 = vmatprep.subr.mxu0 0.0
  %1627 = vmatpush1.msra.mxu0 0.0
  %1628 = vmatprep.subr.mxu0 0.0
  %1629 = vmatpush1.msra.mxu0 0.0
  %1630 = vmatprep.subr.mxu0 0.0
  %1631 = vmatpush1.msra.mxu0 0.0
  %1632 = vmatprep.subr.mxu0 0.0
  %1633 = vmatpush1.msra.mxu0 0.0
  %1634 = vmatprep.subr.mxu0 0.0
  %1635 = vmatpush1.msra.mxu0 0.0
  %1636 = vmatprep.subr.mxu0 0.0
  %1637 = vmatpush1.msra.mxu0 0.0
  %1638 = vmatprep.subr.mxu0 0.0
  %1639 = vmatpush1.msra.mxu0 0.0
  %1640 = vmatprep.subr.mxu0 0.0
  %1641 = vmatpush1.msra.mxu0 0.0
  %1642 = vmatprep.subr.mxu0 0.0
  %1643 = vmatpush1.msra.mxu0 0.0
  %1644 = vmatprep.subr.mxu0 0.0
  %1645 = vmatpush1.msra.mxu0 0.0
  %1646 = vmatprep.subr.mxu0 0.0
  %1647 = vmatpush1.msra.mxu0 0.0
  %1648 = vmatprep.subr.mxu0 0.0
  %1649 = vmatpush1.msra.mxu0 0.0
  %1650 = vmatprep.subr.mxu0 0.0
  %1651 = vmatpush1.msra.mxu0 0.0
  %1652 = vmatprep.subr.mxu0 0.0
  %1653 = vmatpush1.msra.mxu0 0.0
  %1654 = vmatprep.subr.mxu0 0.0
  %1655 = vmatpush1.msra.mxu0 0.0
  %1656 = vmatprep.subr.mxu0 0.0
  %1657 = vmatpush1.msra.mxu0 0.0
  %1658 = vmatprep.subr.mxu0 0.0
  %1659 = vmatpush1.msra.mxu0 0.0
  %1660 = vmatprep.subr.mxu0 0.0
  %1661 = vmatpush1.msra.mxu0 0.0
  %1662 = vmatprep.subr.mxu0 0.0
  %1663 = vmatpush1.msra.mxu0 0.0
  %1664 = vmatprep.mubr.f32.mxu0 0.0
  %1665 = vmatmul.mubr.f32.gmra.mrb[0].mxu0 %v1598
  %v1666 = vpop.f32.mrb[0].mxu0
  %v1667 = vadd.f32 0.0, %v1666
  %v1668 = vpop.f32.mrb[0].mxu0
  %1669 = vdwg.mxu0
  %v1670 = vadd.f32 %v1596, %v1667
  %v1672 = vsel %vm194, %v921, 0
  %1674 = vmatprep.subr.mxu0 0.0
  %1675 = vmatpush1.msra.mxu0 %v1105
  %1676 = vmatprep.subr.mxu0 0.0
  %1677 = vmatpush1.msra.mxu0 0.0
  %1678 = vmatprep.subr.mxu0 0.0
  %1679 = vmatpush1.msra.mxu0 0.0
  %1680 = vmatprep.subr.mxu0 0.0
  %1681 = vmatpush1.msra.mxu0 0.0
  %1682 = vmatprep.subr.mxu0 0.0
  %1683 = vmatpush1.msra.mxu0 0.0
  %1684 = vmatprep.subr.mxu0 0.0
  %1685 = vmatpush1.msra.mxu0 0.0
  %1686 = vmatprep.subr.mxu0 0.0
  %1687 = vmatpush1.msra.mxu0 0.0
  %1688 = vmatprep.subr.mxu0 0.0
  %1689 = vmatpush1.msra.mxu0 0.0
  %1690 = vmatprep.subr.mxu0 0.0
  %1691 = vmatpush1.msra.mxu0 0.0
  %1692 = vmatprep.subr.mxu0 0.0
  %1693 = vmatpush1.msra.mxu0 0.0
  %1694 = vmatprep.subr.mxu0 0.0
  %1695 = vmatpush1.msra.mxu0 0.0
  %1696 = vmatprep.subr.mxu0 0.0
  %1697 = vmatpush1.msra.mxu0 0.0
  %1698 = vmatprep.subr.mxu0 0.0
  %1699 = vmatpush1.msra.mxu0 0.0
  %1700 = vmatprep.subr.mxu0 0.0
  %1701 = vmatpush1.msra.mxu0 0.0
  %1702 = vmatprep.subr.mxu0 0.0
  %1703 = vmatpush1.msra.mxu0 0.0
  %1704 = vmatprep.subr.mxu0 0.0
  %1705 = vmatpush1.msra.mxu0 0.0
  %1706 = vmatprep.subr.mxu0 0.0
  %1707 = vmatpush1.msra.mxu0 0.0
  %1708 = vmatprep.subr.mxu0 0.0
  %1709 = vmatpush1.msra.mxu0 0.0
  %1710 = vmatprep.subr.mxu0 0.0
  %1711 = vmatpush1.msra.mxu0 0.0
  %1712 = vmatprep.subr.mxu0 0.0
  %1713 = vmatpush1.msra.mxu0 0.0
  %1714 = vmatprep.subr.mxu0 0.0
  %1715 = vmatpush1.msra.mxu0 0.0
  %1716 = vmatprep.subr.mxu0 0.0
  %1717 = vmatpush1.msra.mxu0 0.0
  %1718 = vmatprep.subr.mxu0 0.0
  %1719 = vmatpush1.msra.mxu0 0.0
  %1720 = vmatprep.subr.mxu0 0.0
  %1721 = vmatpush1.msra.mxu0 0.0
  %1722 = vmatprep.subr.mxu0 0.0
  %1723 = vmatpush1.msra.mxu0 0.0
  %1724 = vmatprep.subr.mxu0 0.0
  %1725 = vmatpush1.msra.mxu0 0.0
  %1726 = vmatprep.subr.mxu0 0.0
  %1727 = vmatpush1.msra.mxu0 0.0
  %1728 = vmatprep.subr.mxu0 0.0
  %1729 = vmatpush1.msra.mxu0 0.0
  %1730 = vmatprep.subr.mxu0 0.0
  %1731 = vmatpush1.msra.mxu0 0.0
  %1732 = vmatprep.subr.mxu0 0.0
  %1733 = vmatpush1.msra.mxu0 0.0
  %1734 = vmatprep.subr.mxu0 0.0
  %1735 = vmatpush1.msra.mxu0 0.0
  %1736 = vmatprep.subr.mxu0 0.0
  %1737 = vmatpush1.msra.mxu0 0.0
  %1738 = vmatprep.mubr.f32.mxu0 0.0
  %1739 = vmatmul.mubr.f32.gmra.mrb[0].mxu0 %v1672
  %v1740 = vpop.f32.mrb[0].mxu0
  %v1741 = vadd.f32 0.0, %v1740
  %v1742 = vpop.f32.mrb[0].mxu0
  %1743 = vdwg.mxu0
  %v1744 = vadd.f32 %v1670, %v1741
  %v1746 = vsel %vm194, %v923, 0
  %1748 = vmatprep.subr.mxu0 0.0
  %1749 = vmatpush1.msra.mxu0 %v1193
  %1750 = vmatprep.subr.mxu0 0.0
  %1751 = vmatpush1.msra.mxu0 0.0
  %1752 = vmatprep.subr.mxu0 0.0
  %1753 = vmatpush1.msra.mxu0 0.0
  %1754 = vmatprep.subr.mxu0 0.0
  %1755 = vmatpush1.msra.mxu0 0.0
  %1756 = vmatprep.subr.mxu0 0.0
  %1757 = vmatpush1.msra.mxu0 0.0
  %1758 = vmatprep.subr.mxu0 0.0
  %1759 = vmatpush1.msra.mxu0 0.0
  %1760 = vmatprep.subr.mxu0 0.0
  %1761 = vmatpush1.msra.mxu0 0.0
  %1762 = vmatprep.subr.mxu0 0.0
  %1763 = vmatpush1.msra.mxu0 0.0
  %1764 = vmatprep.subr.mxu0 0.0
  %1765 = vmatpush1.msra.mxu0 0.0
  %1766 = vmatprep.subr.mxu0 0.0
  %1767 = vmatpush1.msra.mxu0 0.0
  %1768 = vmatprep.subr.mxu0 0.0
  %1769 = vmatpush1.msra.mxu0 0.0
  %1770 = vmatprep.subr.mxu0 0.0
  %1771 = vmatpush1.msra.mxu0 0.0
  %1772 = vmatprep.subr.mxu0 0.0
  %1773 = vmatpush1.msra.mxu0 0.0
  %1774 = vmatprep.subr.mxu0 0.0
  %1775 = vmatpush1.msra.mxu0 0.0
  %1776 = vmatprep.subr.mxu0 0.0
  %1777 = vmatpush1.msra.mxu0 0.0
  %1778 = vmatprep.subr.mxu0 0.0
  %1779 = vmatpush1.msra.mxu0 0.0
  %1780 = vmatprep.subr.mxu0 0.0
  %1781 = vmatpush1.msra.mxu0 0.0
  %1782 = vmatprep.subr.mxu0 0.0
  %1783 = vmatpush1.msra.mxu0 0.0
  %1784 = vmatprep.subr.mxu0 0.0
  %1785 = vmatpush1.msra.mxu0 0.0
  %1786 = vmatprep.subr.mxu0 0.0
  %1787 = vmatpush1.msra.mxu0 0.0
  %1788 = vmatprep.subr.mxu0 0.0
  %1789 = vmatpush1.msra.mxu0 0.0
  %1790 = vmatprep.subr.mxu0 0.0
  %1791 = vmatpush1.msra.mxu0 0.0
  %1792 = vmatprep.subr.mxu0 0.0
  %1793 = vmatpush1.msra.mxu0 0.0
  %1794 = vmatprep.subr.mxu0 0.0
  %1795 = vmatpush1.msra.mxu0 0.0
  %1796 = vmatprep.subr.mxu0 0.0
  %1797 = vmatpush1.msra.mxu0 0.0
  %1798 = vmatprep.subr.mxu0 0.0
  %1799 = vmatpush1.msra.mxu0 0.0
  %1800 = vmatprep.subr.mxu0 0.0
  %1801 = vmatpush1.msra.mxu0 0.0
  %1802 = vmatprep.subr.mxu0 0.0
  %1803 = vmatpush1.msra.mxu0 0.0
  %1804 = vmatprep.subr.mxu0 0.0
  %1805 = vmatpush1.msra.mxu0 0.0
  %1806 = vmatprep.subr.mxu0 0.0
  %1807 = vmatpush1.msra.mxu0 0.0
  %1808 = vmatprep.subr.mxu0 0.0
  %1809 = vmatpush1.msra.mxu0 0.0
  %1810 = vmatprep.subr.mxu0 0.0
  %1811 = vmatpush1.msra.mxu0 0.0
  %1812 = vmatprep.mubr.f32.mxu0 0.0
  %1813 = vmatmul.mubr.f32.gmra.mrb[0].mxu0 %v1746
  %v1814 = vpop.f32.mrb[0].mxu0
  %v1815 = vadd.f32 0.0, %v1814
  %v1816 = vpop.f32.mrb[0].mxu0
  %1817 = vdwg.mxu0
  %v1818 = vadd.f32 %v1744, %v1815
  %v1820 = vsel %vm194, %v925, 0
  %1822 = vmatprep.subr.mxu0 0.0
  %1823 = vmatpush1.msra.mxu0 %v1281
  %1824 = vmatprep.subr.mxu0 0.0
  %1825 = vmatpush1.msra.mxu0 0.0
  %1826 = vmatprep.subr.mxu0 0.0
  %1827 = vmatpush1.msra.mxu0 0.0
  %1828 = vmatprep.subr.mxu0 0.0
  %1829 = vmatpush1.msra.mxu0 0.0
  %1830 = vmatprep.subr.mxu0 0.0
  %1831 = vmatpush1.msra.mxu0 0.0
  %1832 = vmatprep.subr.mxu0 0.0
  %1833 = vmatpush1.msra.mxu0 0.0
  %1834 = vmatprep.subr.mxu0 0.0
  %1835 = vmatpush1.msra.mxu0 0.0
  %1836 = vmatprep.subr.mxu0 0.0
  %1837 = vmatpush1.msra.mxu0 0.0
  %1838 = vmatprep.subr.mxu0 0.0
  %1839 = vmatpush1.msra.mxu0 0.0
  %1840 = vmatprep.subr.mxu0 0.0
  %1841 = vmatpush1.msra.mxu0 0.0
  %1842 = vmatprep.subr.mxu0 0.0
  %1843 = vmatpush1.msra.mxu0 0.0
  %1844 = vmatprep.subr.mxu0 0.0
  %1845 = vmatpush1.msra.mxu0 0.0
  %1846 = vmatprep.subr.mxu0 0.0
  %1847 = vmatpush1.msra.mxu0 0.0
  %1848 = vmatprep.subr.mxu0 0.0
  %1849 = vmatpush1.msra.mxu0 0.0
  %1850 = vmatprep.subr.mxu0 0.0
  %1851 = vmatpush1.msra.mxu0 0.0
  %1852 = vmatprep.subr.mxu0 0.0
  %1853 = vmatpush1.msra.mxu0 0.0
  %1854 = vmatprep.subr.mxu0 0.0
  %1855 = vmatpush1.msra.mxu0 0.0
  %1856 = vmatprep.subr.mxu0 0.0
  %1857 = vmatpush1.msra.mxu0 0.0
  %1858 = vmatprep.subr.mxu0 0.0
  %1859 = vmatpush1.msra.mxu0 0.0
  %1860 = vmatprep.subr.mxu0 0.0
  %1861 = vmatpush1.msra.mxu0 0.0
  %1862 = vmatprep.subr.mxu0 0.0
  %1863 = vmatpush1.msra.mxu0 0.0
  %1864 = vmatprep.subr.mxu0 0.0
  %1865 = vmatpush1.msra.mxu0 0.0
  %1866 = vmatprep.subr.mxu0 0.0
  %1867 = vmatpush1.msra.mxu0 0.0
  %1868 = vmatprep.subr.mxu0 0.0
  %1869 = vmatpush1.msra.mxu0 0.0
  %1870 = vmatprep.subr.mxu0 0.0
  %1871 = vmatpush1.msra.mxu0 0.0
  %1872 = vmatprep.subr.mxu0 0.0
  %1873 = vmatpush1.msra.mxu0 0.0
  %1874 = vmatprep.subr.mxu0 0.0
  %1875 = vmatpush1.msra.mxu0 0.0
  %1876 = vmatprep.subr.mxu0 0.0
  %1877 = vmatpush1.msra.mxu0 0.0
  %1878 = vmatprep.subr.mxu0 0.0
  %1879 = vmatpush1.msra.mxu0 0.0
  %1880 = vmatprep.subr.mxu0 0.0
  %1881 = vmatpush1.msra.mxu0 0.0
  %1882 = vmatprep.subr.mxu0 0.0
  %1883 = vmatpush1.msra.mxu0 0.0
  %1884 = vmatprep.subr.mxu0 0.0
  %1885 = vmatpush1.msra.mxu0 0.0
  %1886 = vmatprep.mubr.f32.mxu0 0.0
  %1887 = vmatmul.mubr.f32.gmra.mrb[0].mxu0 %v1820
  %v1888 = vpop.f32.mrb[0].mxu0
  %v1889 = vadd.f32 0.0, %v1888
  %v1890 = vpop.f32.mrb[0].mxu0
  %1891 = vdwg.mxu0
  %v1892 = vadd.f32 %v1818, %v1889
  %1893 = vst.msk [vmem:[#allocation3 + $0x8] sm:$0xff] %vm53, %v1892
  %v1894 = vld [vmem:[#allocation3] sm:$0xff]
  %v1895 = vld [vmem:[#allocation3 + $0x8] sm:$0xff]
  %s1896 = scalar_lea.vmem %s10, 1
  %v1897 = vld [vmem:[%s1896] sm:$0x1]
  %s1898 = scalar_lea.vmem %s10, 2
  %v1899 = vld [vmem:[%s1898] sm:$0x1]
  %v1900 = vsel %vm53, %v1894, 0.0
  %1901 = vadd.xlane.f32.xlu0 %v1900
  %v1902 = vpop.xlane.xlu0 %1901
  %v1903 = vsel %vm53, %v1895, 0.0
  %1904 = vadd.xlane.f32.xlu0 %v1903
  %v1905 = vpop.xlane.xlu0 %1904
  %v1906 = vmul.f32 %v1902, %v60
  %v1907 = vmul.f32 %v1905, %v60
  %v1908 = vsub.f32 %v1894, %v1906
  %v1909 = vsub.f32 %v1895, %v1907
  %v1910 = vmul.f32 %v1908, %v1908
  %v1911 = vmul.f32 %v1909, %v1909
  %v1912 = vsel %vm53, %v1910, 0.0
  %1913 = vadd.xlane.f32.xlu0 %v1912
  %v1914 = vpop.xlane.xlu0 %1913
  %v1915 = vsel %vm53, %v1911, 0.0
  %1916 = vadd.xlane.f32.xlu0 %v1915
  %v1917 = vpop.xlane.xlu0 %1916
  %v1918 = vmul.f32 %v1914, %v60
  %v1919 = vmul.f32 %v1917, %v60
  %v1920 = vadd.f32 %v1918, 1e-12
  %v1921 = vadd.f32 %v1919, 1e-12
  %v1922 = vrsqrt.pop %v1920
  %v1923 = vrsqrt.pop %v1921
  %v1924 = vmul.f32 %v1908, %v1922
  %v1925 = vmul.f32 %v1909, %v1923
  %v1927 = vlaneseq
  %v1928 = vshrl.u32 %v1927, 7
  %v1929 = vsub.s32 0, %v1928
  %v1930 = vrot.slane %v1897, %v1929
  %v1932 = vmul.f32 %v1924, %v1930
  %v1933 = vmul.f32 %v1925, %v1930
  %v1935 = vlaneseq
  %v1936 = vshrl.u32 %v1935, 7
  %v1937 = vsub.s32 0, %v1936
  %v1938 = vrot.slane %v1899, %v1937
  %v1940 = vadd.f32 %v1932, %v1938
  %v1941 = vadd.f32 %v1933, %v1938
  %v1942 = vld [vmem:[%s7] sm:$0xff]
  %v1943 = vld [vmem:[%s7 + $0x8] sm:$0xff]
  %v1944 = vld [vmem:[%s7 + $0x10] sm:$0xff]
  %v1945 = vld [vmem:[%s7 + $0x18] sm:$0xff]
  %v1946 = vld [vmem:[%s8] sm:$0x1]
  %v1948 = vlaneseq
  %v1949 = vshrl.u32 %v1948, 7
  %v1950 = vsub.s32 0, %v1949
  %v1951 = vrot.slane %v1946, %v1950
  %v1954 = vsel %vm53, %v1940, 0
  %v1957 = vsel %vm53, %v1941, 0
  %1959 = vmatprep.subr.mxu0 0.0
  %1960 = vmatpush1.msra.mxu0 %v1942
  %1961 = vmatprep.subr.mxu0 0.0
  %1962 = vmatpush1.msra.mxu0 %v1943
  %1963 = vmatprep.subr.mxu0 0.0
  %1964 = vmatpush1.msra.mxu0 %v1944
  %1965 = vmatprep.subr.mxu0 0.0
  %1966 = vmatpush1.msra.mxu0 %v1945
  %1967 = vmatprep.subr.mxu0 0.0
  %1968 = vmatpush1.msra.mxu0 0.0
  %1969 = vmatprep.subr.mxu0 0.0
  %1970 = vmatpush1.msra.mxu0 0.0
  %1971 = vmatprep.subr.mxu0 0.0
  %1972 = vmatpush1.msra.mxu0 0.0
  %1973 = vmatprep.subr.mxu0 0.0
  %1974 = vmatpush1.msra.mxu0 0.0
  %1975 = vmatprep.subr.mxu0 0.0
  %1976 = vmatpush1.msra.mxu0 0.0
  %1977 = vmatprep.subr.mxu0 0.0
  %1978 = vmatpush1.msra.mxu0 0.0
  %1979 = vmatprep.subr.mxu0 0.0
  %1980 = vmatpush1.msra.mxu0 0.0
  %1981 = vmatprep.subr.mxu0 0.0
  %1982 = vmatpush1.msra.mxu0 0.0
  %1983 = vmatprep.subr.mxu0 0.0
  %1984 = vmatpush1.msra.mxu0 0.0
  %1985 = vmatprep.subr.mxu0 0.0
  %1986 = vmatpush1.msra.mxu0 0.0
  %1987 = vmatprep.subr.mxu0 0.0
  %1988 = vmatpush1.msra.mxu0 0.0
  %1989 = vmatprep.subr.mxu0 0.0
  %1990 = vmatpush1.msra.mxu0 0.0
  %1991 = vmatprep.subr.mxu0 0.0
  %1992 = vmatpush1.msra.mxu0 0.0
  %1993 = vmatprep.subr.mxu0 0.0
  %1994 = vmatpush1.msra.mxu0 0.0
  %1995 = vmatprep.subr.mxu0 0.0
  %1996 = vmatpush1.msra.mxu0 0.0
  %1997 = vmatprep.subr.mxu0 0.0
  %1998 = vmatpush1.msra.mxu0 0.0
  %1999 = vmatprep.subr.mxu0 0.0
  %2000 = vmatpush1.msra.mxu0 0.0
  %2001 = vmatprep.subr.mxu0 0.0
  %2002 = vmatpush1.msra.mxu0 0.0
  %2003 = vmatprep.subr.mxu0 0.0
  %2004 = vmatpush1.msra.mxu0 0.0
  %2005 = vmatprep.subr.mxu0 0.0
  %2006 = vmatpush1.msra.mxu0 0.0
  %2007 = vmatprep.subr.mxu0 0.0
  %2008 = vmatpush1.msra.mxu0 0.0
  %2009 = vmatprep.subr.mxu0 0.0
  %2010 = vmatpush1.msra.mxu0 0.0
  %2011 = vmatprep.subr.mxu0 0.0
  %2012 = vmatpush1.msra.mxu0 0.0
  %2013 = vmatprep.subr.mxu0 0.0
  %2014 = vmatpush1.msra.mxu0 0.0
  %2015 = vmatprep.subr.mxu0 0.0
  %2016 = vmatpush1.msra.mxu0 0.0
  %2017 = vmatprep.subr.mxu0 0.0
  %2018 = vmatpush1.msra.mxu0 0.0
  %2019 = vmatprep.subr.mxu0 0.0
  %2020 = vmatpush1.msra.mxu0 0.0
  %2021 = vmatprep.subr.mxu0 0.0
  %2022 = vmatpush1.msra.mxu0 0.0
  %2023 = vmatprep.mubr.f32.mxu0 0.0
  %2024 = vmatmul.mubr.f32.gmra.mrb[0].mxu0 %v1954
  %v2025 = vpop.f32.mrb[0].mxu0
  %v2026 = vadd.f32 %v1951, %v2025
  %v2027 = vpop.f32.mrb[0].mxu0
  %2028 = vmatprep.mubr.f32.mxu0 0.0
  %2029 = vmatmul.mubr.f32.gmra.mrb[0].mxu0 %v1957
  %v2030 = vpop.f32.mrb[0].mxu0
  %v2031 = vadd.f32 %v1951, %v2030
  %v2032 = vpop.f32.mrb[0].mxu0
  %2033 = vdwg.mxu0
  %v2034 = vmul.f32 %v2026, 0.5
  %v2035 = vmul.f32 %v2031, 0.5
  %v2036 = vmul.f32 %v2026, 0.044715
  %v2037 = vmul.f32 %v2031, 0.044715
  %v2038 = vmul.f32 %v2036, %v2026
  %v2039 = vmul.f32 %v2037, %v2031
  %v2040 = vmul.f32 %v2038, %v2026
  %v2041 = vmul.f32 %v2039, %v2031
  %v2042 = vadd.f32 %v2026, %v2040
  %v2043 = vadd.f32 %v2031, %v2041
  %v2044 = vmul.f32 %v2042, 0.7978846
  %v2045 = vmul.f32 %v2043, 0.7978846
  %v2046 = vtanh.pop %v2044
  %v2047 = vtanh.pop %v2045
  %v2048 = vadd.f32 %v2046, 1.0
  %v2049 = vadd.f32 %v2047, 1.0
  %v2050 = vmul.f32 %v2034, %v2048
  %v2051 = vmul.f32 %v2035, %v2049
  %v2052 = vld [vmem:[%s9] sm:$0xff]
  %v2053 = vld [vmem:[%s9 + $0x8] sm:$0xff]
  %v2054 = vld [vmem:[%s9 + $0x10] sm:$0xff]
  %v2055 = vld [vmem:[%s9 + $0x18] sm:$0xff]
  %v2056 = vld [vmem:[%s9 + $0x20] sm:$0xff]
  %v2057 = vld [vmem:[%s9 + $0x28] sm:$0xff]
  %v2058 = vld [vmem:[%s9 + $0x30] sm:$0xff]
  %v2059 = vld [vmem:[%s9 + $0x38] sm:$0xff]
  %s2060 = scalar_lea.vmem %s10, 3
  %v2061 = vld [vmem:[%s2060] sm:$0x1]
  %v2063 = vlaneseq
  %v2064 = vshrl.u32 %v2063, 7
  %v2065 = vsub.s32 0, %v2064
  %v2066 = vrot.slane %v2061, %v2065
  %vm2068 = vcmask 523264
  %v2070 = vsel %vm2068, %v2050, 0
  %v2073 = vsel %vm2068, %v2051, 0
  %2075 = vmatprep.subr.mxu0 0.0
  %2076 = vmatpush1.msra.mxu0 %v2052
  %2077 = vmatprep.subr.mxu0 0.0
  %2078 = vmatpush1.msra.mxu0 %v2053
  %2079 = vmatprep.subr.mxu0 0.0
  %2080 = vmatpush1.msra.mxu0 %v2054
  %2081 = vmatprep.subr.mxu0 0.0
  %2082 = vmatpush1.msra.mxu0 %v2055
  %2083 = vmatprep.subr.mxu0 0.0
  %2084 = vmatpush1.msra.mxu0 %v2056
  %2085 = vmatprep.subr.mxu0 0.0
  %2086 = vmatpush1.msra.mxu0 %v2057
  %2087 = vmatprep.subr.mxu0 0.0
  %2088 = vmatpush1.msra.mxu0 %v2058
  %2089 = vmatprep.subr.mxu0 0.0
  %2090 = vmatpush1.msra.mxu0 %v2059
  %2091 = vmatprep.subr.mxu0 0.0
  %2092 = vmatpush1.msra.mxu0 0.0
  %2093 = vmatprep.subr.mxu0 0.0
  %2094 = vmatpush1.msra.mxu0 0.0
  %2095 = vmatprep.subr.mxu0 0.0
  %2096 = vmatpush1.msra.mxu0 0.0
  %2097 = vmatprep.subr.mxu0 0.0
  %2098 = vmatpush1.msra.mxu0 0.0
  %2099 = vmatprep.subr.mxu0 0.0
  %2100 = vmatpush1.msra.mxu0 0.0
  %2101 = vmatprep.subr.mxu0 0.0
  %2102 = vmatpush1.msra.mxu0 0.0
  %2103 = vmatprep.subr.mxu0 0.0
  %2104 = vmatpush1.msra.mxu0 0.0
  %2105 = vmatprep.subr.mxu0 0.0
  %2106 = vmatpush1.msra.mxu0 0.0
  %2107 = vmatprep.subr.mxu0 0.0
  %2108 = vmatpush1.msra.mxu0 0.0
  %2109 = vmatprep.subr.mxu0 0.0
  %2110 = vmatpush1.msra.mxu0 0.0
  %2111 = vmatprep.subr.mxu0 0.0
  %2112 = vmatpush1.msra.mxu0 0.0
  %2113 = vmatprep.subr.mxu0 0.0
  %2114 = vmatpush1.msra.mxu0 0.0
  %2115 = vmatprep.subr.mxu0 0.0
  %2116 = vmatpush1.msra.mxu0 0.0
  %2117 = vmatprep.subr.mxu0 0.0
  %2118 = vmatpush1.msra.mxu0 0.0
  %2119 = vmatprep.subr.mxu0 0.0
  %2120 = vmatpush1.msra.mxu0 0.0
  %2121 = vmatprep.subr.mxu0 0.0
  %2122 = vmatpush1.msra.mxu0 0.0
  %2123 = vmatprep.subr.mxu0 0.0
  %2124 = vmatpush1.msra.mxu0 0.0
  %2125 = vmatprep.subr.mxu0 0.0
  %2126 = vmatpush1.msra.mxu0 0.0
  %2127 = vmatprep.subr.mxu0 0.0
  %2128 = vmatpush1.msra.mxu0 0.0
  %2129 = vmatprep.subr.mxu0 0.0
  %2130 = vmatpush1.msra.mxu0 0.0
  %2131 = vmatprep.subr.mxu0 0.0
  %2132 = vmatpush1.msra.mxu0 0.0
  %2133 = vmatprep.subr.mxu0 0.0
  %2134 = vmatpush1.msra.mxu0 0.0
  %2135 = vmatprep.subr.mxu0 0.0
  %2136 = vmatpush1.msra.mxu0 0.0
  %2137 = vmatprep.subr.mxu0 0.0
  %2138 = vmatpush1.msra.mxu0 0.0
  %2139 = vmatprep.mubr.f32.mxu0 0.0
  %2140 = vmatmul.mubr.f32.gmra.mrb[0].mxu0 %v2070
  %v2141 = vpop.f32.mrb[0].mxu0
  %v2142 = vadd.f32 %v2066, %v2141
  %v2143 = vpop.f32.mrb[0].mxu0
  %2144 = vmatprep.mubr.f32.mxu0 0.0
  %2145 = vmatmul.mubr.f32.gmra.mrb[0].mxu0 %v2073
  %v2146 = vpop.f32.mrb[0].mxu0
  %v2147 = vadd.f32 %v2066, %v2146
  %v2148 = vpop.f32.mrb[0].mxu0
  %2149 = vdwg.mxu0
  %v2150 = vadd.f32 %v2142, %v1940
  %v2151 = vadd.f32 %v2147, %v1941
  %s2152 = scalar_lea.vmem %s10, 4
  %v2153 = vld [vmem:[%s2152] sm:$0x1]
  %s2154 = scalar_lea.vmem %s10, 5
  %v2155 = vld [vmem:[%s2154] sm:$0x1]
  %v2156 = vsel %vm53, %v2150, 0.0
  %2157 = vadd.xlane.f32.xlu0 %v2156
  %v2158 = vpop.xlane.xlu0 %2157
  %v2159 = vsel %vm53, %v2151, 0.0
  %2160 = vadd.xlane.f32.xlu0 %v2159
  %v2161 = vpop.xlane.xlu0 %2160
  %v2162 = vmul.f32 %v2158, %v60
  %v2163 = vmul.f32 %v2161, %v60
  %v2164 = vsub.f32 %v2150, %v2162
  %v2165 = vsub.f32 %v2151, %v2163
  %v2166 = vmul.f32 %v2164, %v2164
  %v2167 = vmul.f32 %v2165, %v2165
  %v2168 = vsel %vm53, %v2166, 0.0
  %2169 = vadd.xlane.f32.xlu0 %v2168
  %v2170 = vpop.xlane.xlu0 %2169
  %v2171 = vsel %vm53, %v2167, 0.0
  %2172 = vadd.xlane.f32.xlu0 %v2171
  %v2173 = vpop.xlane.xlu0 %2172
  %v2174 = vmul.f32 %v2170, %v60
  %v2175 = vmul.f32 %v2173, %v60
  %v2176 = vadd.f32 %v2174, 1e-12
  %v2177 = vadd.f32 %v2175, 1e-12
  %v2178 = vrsqrt.pop %v2176
  %v2179 = vrsqrt.pop %v2177
  %v2180 = vmul.f32 %v2164, %v2178
  %v2181 = vmul.f32 %v2165, %v2179
  %v2183 = vlaneseq
  %v2184 = vshrl.u32 %v2183, 7
  %v2185 = vsub.s32 0, %v2184
  %v2186 = vrot.slane %v2153, %v2185
  %v2188 = vmul.f32 %v2180, %v2186
  %v2189 = vmul.f32 %v2181, %v2186
  %v2191 = vlaneseq
  %v2192 = vshrl.u32 %v2191, 7
  %v2193 = vsub.s32 0, %v2192
  %v2194 = vrot.slane %v2155, %v2193
  %v2196 = vadd.f32 %v2188, %v2194
  %v2197 = vadd.f32 %v2189, %v2194
  %s2198 = scalar_lea.vmem %s11, 16
  %2199 = vst.msk [vmem:[%s2198] sm:$0xff] %vm53, %v2196
  %2200 = vst.msk [vmem:[%s2198 + $0x8] sm:$0xff] %vm53, %v2197
  %s2201 = scalar_lea.vmem %s3, 32
  %v2202 = vld [vmem:[%s2201] sm:$0xff]
  %v2203 = vld [vmem:[%s2201 + $0x8] sm:$0xff]
  %v2204 = vld [vmem:[%s2201 + $0x10] sm:$0xff]
  %v2205 = vld [vmem:[%s2201 + $0x18] sm:$0xff]
  %s2206 = scalar_lea.vmem %s4, 1
  %v2207 = vld [vmem:[%s2206] sm:$0x1]
  %v2209 = vlaneseq
  %v2210 = vshrl.u32 %v2209, 7
  %v2211 = vsub.s32 0, %v2210
  %v2212 = vrot.slane %v2207, %v2211
  %v2215 = vsel %vm53, %v2196, 0
  %v2218 = vsel %vm53, %v2197, 0
  %2220 = vmatprep.subr.mxu0 0.0
  %2221 = vmatpush1.msra.mxu0 %v2202
  %2222 = vmatprep.subr.mxu0 0.0
  %2223 = vmatpush1.msra.mxu0 %v2203
  %2224 = vmatprep.subr.mxu0 0.0
  %2225 = vmatpush1.msra.mxu0 %v2204
  %2226 = vmatprep.subr.mxu0 0.0
  %2227 = vmatpush1.msra.mxu0 %v2205
  %2228 = vmatprep.subr.mxu0 0.0
  %2229 = vmatpush1.msra.mxu0 0.0
  %2230 = vmatprep.subr.mxu0 0.0
  %2231 = vmatpush1.msra.mxu0 0.0
  %2232 = vmatprep.subr.mxu0 0.0
  %2233 = vmatpush1.msra.mxu0 0.0
  %2234 = vmatprep.subr.mxu0 0.0
  %2235 = vmatpush1.msra.mxu0 0.0
  %2236 = vmatprep.subr.mxu0 0.0
  %2237 = vmatpush1.msra.mxu0 0.0
  %2238 = vmatprep.subr.mxu0 0.0
  %2239 = vmatpush1.msra.mxu0 0.0
  %2240 = vmatprep.subr.mxu0 0.0
  %2241 = vmatpush1.msra.mxu0 0.0
  %2242 = vmatprep.subr.mxu0 0.0
  %2243 = vmatpush1.msra.mxu0 0.0
  %2244 = vmatprep.subr.mxu0 0.0
  %2245 = vmatpush1.msra.mxu0 0.0
  %2246 = vmatprep.subr.mxu0 0.0
  %2247 = vmatpush1.msra.mxu0 0.0
  %2248 = vmatprep.subr.mxu0 0.0
  %2249 = vmatpush1.msra.mxu0 0.0
  %2250 = vmatprep.subr.mxu0 0.0
  %2251 = vmatpush1.msra.mxu0 0.0
  %2252 = vmatprep.subr.mxu0 0.0
  %2253 = vmatpush1.msra.mxu0 0.0
  %2254 = vmatprep.subr.mxu0 0.0
  %2255 = vmatpush1.msra.mxu0 0.0
  %2256 = vmatprep.subr.mxu0 0.0
  %2257 = vmatpush1.msra.mxu0 0.0
  %2258 = vmatprep.subr.mxu0 0.0
  %2259 = vmatpush1.msra.mxu0 0.0
  %2260 = vmatprep.subr.mxu0 0.0
  %2261 = vmatpush1.msra.mxu0 0.0
  %2262 = vmatprep.subr.mxu0 0.0
  %2263 = vmatpush1.msra.mxu0 0.0
  %2264 = vmatprep.subr.mxu0 0.0
  %2265 = vmatpush1.msra.mxu0 0.0
  %2266 = vmatprep.subr.mxu0 0.0
  %2267 = vmatpush1.msra.mxu0 0.0
  %2268 = vmatprep.subr.mxu0 0.0
  %2269 = vmatpush1.msra.mxu0 0.0
  %2270 = vmatprep.subr.mxu0 0.0
  %2271 = vmatpush1.msra.mxu0 0.0
  %2272 = vmatprep.subr.mxu0 0.0
  %2273 = vmatpush1.msra.mxu0 0.0
  %2274 = vmatprep.subr.mxu0 0.0
  %2275 = vmatpush1.msra.mxu0 0.0
  %2276 = vmatprep.subr.mxu0 0.0
  %2277 = vmatpush1.msra.mxu0 0.0
  %2278 = vmatprep.subr.mxu0 0.0
  %2279 = vmatpush1.msra.mxu0 0.0
  %2280 = vmatprep.subr.mxu0 0.0
  %2281 = vmatpush1.msra.mxu0 0.0
  %2282 = vmatprep.subr.mxu0 0.0
  %2283 = vmatpush1.msra.mxu0 0.0
  %2284 = vmatprep.mubr.f32.mxu0 0.0
  %2285 = vmatmul.mubr.f32.gmra.mrb[0].mxu0 %v2215
  %v2286 = vpop.f32.mrb[0].mxu0
  %v2287 = vadd.f32 %v2212, %v2286
  %v2288 = vpop.f32.mrb[0].mxu0
  %2289 = vmatprep.mubr.f32.mxu0 0.0
  %2290 = vmatmul.mubr.f32.gmra.mrb[0].mxu0 %v2218
  %v2291 = vpop.f32.mrb[0].mxu0
  %v2292 = vadd.f32 %v2212, %v2291
  %v2293 = vpop.f32.mrb[0].mxu0
  %2294 = vdwg.mxu0
  %2296 = vrot.lane.b32.xlu0 %v2287, 96
  %v2297 = vpop.permute.xlu0 %2296
  %v2298 = vsel %vm194, %v2287, 0
  %v2300 = vsel %vm194, %v2297, 0
  %2302 = vmatprep.subr.mxu0 0.0
  %2303 = vmatpush1.xpose.msra.mxu0 %v2300
  %2304 = vmatprep.subr.mxu0 0.0
  %2305 = vmatpush1.xpose.msra.mxu0 0.0
  %2306 = vmatprep.subr.mxu0 0.0
  %2307 = vmatpush1.xpose.msra.mxu0 0.0
  %2308 = vmatprep.subr.mxu0 0.0
  %2309 = vmatpush1.xpose.msra.mxu0 0.0
  %2310 = vmatprep.subr.mxu0 0.0
  %2311 = vmatpush1.xpose.msra.mxu0 0.0
  %2312 = vmatprep.subr.mxu0 0.0
  %2313 = vmatpush1.xpose.msra.mxu0 0.0
  %2314 = vmatprep.subr.mxu0 0.0
  %2315 = vmatpush1.xpose.msra.mxu0 0.0
  %2316 = vmatprep.subr.mxu0 0.0
  %2317 = vmatpush1.xpose.msra.mxu0 0.0
  %2318 = vmatprep.subr.mxu0 0.0
  %2319 = vmatpush1.xpose.msra.mxu0 0.0
  %2320 = vmatprep.subr.mxu0 0.0
  %2321 = vmatpush1.xpose.msra.mxu0 0.0
  %2322 = vmatprep.subr.mxu0 0.0
  %2323 = vmatpush1.xpose.msra.mxu0 0.0
  %2324 = vmatprep.subr.mxu0 0.0
  %2325 = vmatpush1.xpose.msra.mxu0 0.0
  %2326 = vmatprep.subr.mxu0 0.0
  %2327 = vmatpush1.xpose.msra.mxu0 0.0
  %2328 = vmatprep.subr.mxu0 0.0
  %2329 = vmatpush1.xpose.msra.mxu0 0.0
  %2330 = vmatprep.subr.mxu0 0.0
  %2331 = vmatpush1.xpose.msra.mxu0 0.0
  %2332 = vmatprep.subr.mxu0 0.0
  %2333 = vmatpush1.xpose.msra.mxu0 0.0
  %2334 = vmatprep.subr.mxu0 0.0
  %2335 = vmatpush1.xpose.msra.mxu0 0.0
  %2336 = vmatprep.subr.mxu0 0.0
  %2337 = vmatpush1.xpose.msra.mxu0 0.0
  %2338 = vmatprep.subr.mxu0 0.0
  %2339 = vmatpush1.xpose.msra.mxu0 0.0
  %2340 = vmatprep.subr.mxu0 0.0
  %2341 = vmatpush1.xpose.msra.mxu0 0.0
  %2342 = vmatprep.subr.mxu0 0.0
  %2343 = vmatpush1.xpose.msra.mxu0 0.0
  %2344 = vmatprep.subr.mxu0 0.0
  %2345 = vmatpush1.xpose.msra.mxu0 0.0
  %2346 = vmatprep.subr.mxu0 0.0
  %2347 = vmatpush1.xpose.msra.mxu0 0.0
  %2348 = vmatprep.subr.mxu0 0.0
  %2349 = vmatpush1.xpose.msra.mxu0 0.0
  %2350 = vmatprep.subr.mxu0 0.0
  %2351 = vmatpush1.xpose.msra.mxu0 0.0
  %2352 = vmatprep.subr.mxu0 0.0
  %2353 = vmatpush1.xpose.msra.mxu0 0.0
  %2354 = vmatprep.subr.mxu0 0.0
  %2355 = vmatpush1.xpose.msra.mxu0 0.0
  %2356 = vmatprep.subr.mxu0 0.0
  %2357 = vmatpush1.xpose.msra.mxu0 0.0
  %2358 = vmatprep.subr.mxu0 0.0
  %2359 = vmatpush1.xpose.msra.mxu0 0.0
  %2360 = vmatprep.subr.mxu0 0.0
  %2361 = vmatpush1.xpose.msra.mxu0 0.0
  %2362 = vmatprep.subr.mxu0 0.0
  %2363 = vmatpush1.xpose.msra.mxu0 0.0
  %2364 = vmatprep.subr.mxu0 0.0
  %2365 = vmatpush1.xpose.msra.mxu0 0.0
  %2366 = vmatprep.mubr.f32.mxu0 0.0
  %2367 = vmatmul.mubr.f32.gmra.mrb[0].mxu0 %v2298
  %v2368 = vpop.f32.mrb[0].mxu0
  %v2369 = vadd.f32 0.0, %v2368
  %v2370 = vpop.f32.mrb[0].mxu0
  %2371 = vdwg.mxu0
  %2372 = vst.msk [vmem:[#allocation2] sm:$0xff] %vm194, %v2369
  %2373 = vrot.lane.b32.xlu0 %v2287, 120
  %v2374 = vpop.permute.xlu0 %2373
  %2375 = vrot.lane.b32.xlu0 %v2287, 88
  %v2376 = vpop.permute.xlu0 %2375
  %v2377 = vsel %vm194, %v2374, 0
  %v2379 = vsel %vm194, %v2376, 0
  %2381 = vmatprep.subr.mxu0 0.0
  %2382 = vmatpush1.xpose.msra.mxu0 %v2379
  %2383 = vmatprep.subr.mxu0 0.0
  %2384 = vmatpush1.xpose.msra.mxu0 0.0
  %2385 = vmatprep.subr.mxu0 0.0
  %2386 = vmatpush1.xpose.msra.mxu0 0.0
  %2387 = vmatprep.subr.mxu0 0.0
  %2388 = vmatpush1.xpose.msra.mxu0 0.0
  %2389 = vmatprep.subr.mxu0 0.0
  %2390 = vmatpush1.xpose.msra.mxu0 0.0
  %2391 = vmatprep.subr.mxu0 0.0
  %2392 = vmatpush1.xpose.msra.mxu0 0.0
  %2393 = vmatprep.subr.mxu0 0.0
  %2394 = vmatpush1.xpose.msra.mxu0 0.0
  %2395 = vmatprep.subr.mxu0 0.0
  %2396 = vmatpush1.xpose.msra.mxu0 0.0
  %2397 = vmatprep.subr.mxu0 0.0
  %2398 = vmatpush1.xpose.msra.mxu0 0.0
  %2399 = vmatprep.subr.mxu0 0.0
  %2400 = vmatpush1.xpose.msra.mxu0 0.0
  %2401 = vmatprep.subr.mxu0 0.0
  %2402 = vmatpush1.xpose.msra.mxu0 0.0
  %2403 = vmatprep.subr.mxu0 0.0
  %2404 = vmatpush1.xpose.msra.mxu0 0.0
  %2405 = vmatprep.subr.mxu0 0.0
  %2406 = vmatpush1.xpose.msra.mxu0 0.0
  %2407 = vmatprep.subr.mxu0 0.0
  %2408 = vmatpush1.xpose.msra.mxu0 0.0
  %2409 = vmatprep.subr.mxu0 0.0
  %2410 = vmatpush1.xpose.msra.mxu0 0.0
  %2411 = vmatprep.subr.mxu0 0.0
  %2412 = vmatpush1.xpose.msra.mxu0 0.0
  %2413 = vmatprep.subr.mxu0 0.0
  %2414 = vmatpush1.xpose.msra.mxu0 0.0
  %2415 = vmatprep.subr.mxu0 0.0
  %2416 = vmatpush1.xpose.msra.mxu0 0.0
  %2417 = vmatprep.subr.mxu0 0.0
  %2418 = vmatpush1.xpose.msra.mxu0 0.0
  %2419 = vmatprep.subr.mxu0 0.0
  %2420 = vmatpush1.xpose.msra.mxu0 0.0
  %2421 = vmatprep.subr.mxu0 0.0
  %2422 = vmatpush1.xpose.msra.mxu0 0.0
  %2423 = vmatprep.subr.mxu0 0.0
  %2424 = vmatpush1.xpose.msra.mxu0 0.0
  %2425 = vmatprep.subr.mxu0 0.0
  %2426 = vmatpush1.xpose.msra.mxu0 0.0
  %2427 = vmatprep.subr.mxu0 0.0
  %2428 = vmatpush1.xpose.msra.mxu0 0.0
  %2429 = vmatprep.subr.mxu0 0.0
  %2430 = vmatpush1.xpose.msra.mxu0 0.0
  %2431 = vmatprep.subr.mxu0 0.0
  %2432 = vmatpush1.xpose.msra.mxu0 0.0
  %2433 = vmatprep.subr.mxu0 0.0
  %2434 = vmatpush1.xpose.msra.mxu0 0.0
  %2435 = vmatprep.subr.mxu0 0.0
  %2436 = vmatpush1.xpose.msra.mxu0 0.0
  %2437 = vmatprep.subr.mxu0 0.0
  %2438 = vmatpush1.xpose.msra.mxu0 0.0
  %2439 = vmatprep.subr.mxu0 0.0
  %2440 = vmatpush1.xpose.msra.mxu0 0.0
  %2441 = vmatprep.subr.mxu0 0.0
  %2442 = vmatpush1.xpose.msra.mxu0 0.0
  %2443 = vmatprep.subr.mxu0 0.0
  %2444 = vmatpush1.xpose.msra.mxu0 0.0
  %2445 = vmatprep.mubr.f32.mxu0 0.0
  %2446 = vmatmul.mubr.f32.gmra.mrb[0].mxu0 %v2377
  %v2447 = vpop.f32.mrb[0].mxu0
  %v2448 = vadd.f32 0.0, %v2447
  %v2449 = vpop.f32.mrb[0].mxu0
  %2450 = vdwg.mxu0
  %2451 = vst.msk [vmem:[#allocation2 + $0x8] sm:$0xff] %vm194, %v2448
  %2452 = vrot.lane.b32.xlu0 %v2287, 112
  %v2453 = vpop.permute.xlu0 %2452
  %2454 = vrot.lane.b32.xlu0 %v2287, 80
  %v2455 = vpop.permute.xlu0 %2454
  %v2456 = vsel %vm194, %v2453, 0
  %v2458 = vsel %vm194, %v2455, 0
  %2460 = vmatprep.subr.mxu0 0.0
  %2461 = vmatpush1.xpose.msra.mxu0 %v2458
  %2462 = vmatprep.subr.mxu0 0.0
  %2463 = vmatpush1.xpose.msra.mxu0 0.0
  %2464 = vmatprep.subr.mxu0 0.0
  %2465 = vmatpush1.xpose.msra.mxu0 0.0
  %2466 = vmatprep.subr.mxu0 0.0
  %2467 = vmatpush1.xpose.msra.mxu0 0.0
  %2468 = vmatprep.subr.mxu0 0.0
  %2469 = vmatpush1.xpose.msra.mxu0 0.0
  %2470 = vmatprep.subr.mxu0 0.0
  %2471 = vmatpush1.xpose.msra.mxu0 0.0
  %2472 = vmatprep.subr.mxu0 0.0
  %2473 = vmatpush1.xpose.msra.mxu0 0.0
  %2474 = vmatprep.subr.mxu0 0.0
  %2475 = vmatpush1.xpose.msra.mxu0 0.0
  %2476 = vmatprep.subr.mxu0 0.0
  %2477 = vmatpush1.xpose.msra.mxu0 0.0
  %2478 = vmatprep.subr.mxu0 0.0
  %2479 = vmatpush1.xpose.msra.mxu0 0.0
  %2480 = vmatprep.subr.mxu0 0.0
  %2481 = vmatpush1.xpose.msra.mxu0 0.0
  %2482 = vmatprep.subr.mxu0 0.0
  %2483 = vmatpush1.xpose.msra.mxu0 0.0
  %2484 = vmatprep.subr.mxu0 0.0
  %2485 = vmatpush1.xpose.msra.mxu0 0.0
  %2486 = vmatprep.subr.mxu0 0.0
  %2487 = vmatpush1.xpose.msra.mxu0 0.0
  %2488 = vmatprep.subr.mxu0 0.0
  %2489 = vmatpush1.xpose.msra.mxu0 0.0
  %2490 = vmatprep.subr.mxu0 0.0
  %2491 = vmatpush1.xpose.msra.mxu0 0.0
  %2492 = vmatprep.subr.mxu0 0.0
  %2493 = vmatpush1.xpose.msra.mxu0 0.0
  %2494 = vmatprep.subr.mxu0 0.0
  %2495 = vmatpush1.xpose.msra.mxu0 0.0
  %2496 = vmatprep.subr.mxu0 0.0
  %2497 = vmatpush1.xpose.msra.mxu0 0.0
  %2498 = vmatprep.subr.mxu0 0.0
  %2499 = vmatpush1.xpose.msra.mxu0 0.0
  %2500 = vmatprep.subr.mxu0 0.0
  %2501 = vmatpush1.xpose.msra.mxu0 0.0
  %2502 = vmatprep.subr.mxu0 0.0
  %2503 = vmatpush1.xpose.msra.mxu0 0.0
  %2504 = vmatprep.subr.mxu0 0.0
  %2505 = vmatpush1.xpose.msra.mxu0 0.0
  %2506 = vmatprep.subr.mxu0 0.0
  %2507 = vmatpush1.xpose.msra.mxu0 0.0
  %2508 = vmatprep.subr.mxu0 0.0
  %2509 = vmatpush1.xpose.msra.mxu0 0.0
  %2510 = vmatprep.subr.mxu0 0.0
  %2511 = vmatpush1.xpose.msra.mxu0 0.0
  %2512 = vmatprep.subr.mxu0 0.0
  %2513 = vmatpush1.xpose.msra.mxu0 0.0
  %2514 = vmatprep.subr.mxu0 0.0
  %2515 = vmatpush1.xpose.msra.mxu0 0.0
  %2516 = vmatprep.subr.mxu0 0.0
  %2517 = vmatpush1.xpose.msra.mxu0 0.0
  %2518 = vmatprep.subr.mxu0 0.0
  %2519 = vmatpush1.xpose.msra.mxu0 0.0
  %2520 = vmatprep.subr.mxu0 0.0
  %2521 = vmatpush1.xpose.msra.mxu0 0.0
  %2522 = vmatprep.subr.mxu0 0.0
  %2523 = vmatpush1.xpose.msra.mxu0 0.0
  %2524 = vmatprep.mubr.f32.mxu0 0.0
  %2525 = vmatmul.mubr.f32.gmra.mrb[0].mxu0 %v2456
  %v2526 = vpop.f32.mrb[0].mxu0
  %v2527 = vadd.f32 0.0, %v2526
  %v2528 = vpop.f32.mrb[0].mxu0
  %2529 = vdwg.mxu0
  %2530 = vst.msk [vmem:[#allocation2 + $0x10] sm:$0xff] %vm194, %v2527
  %2531 = vrot.lane.b32.xlu0 %v2287, 104
  %v2532 = vpop.permute.xlu0 %2531
  %2533 = vrot.lane.b32.xlu0 %v2287, 72
  %v2534 = vpop.permute.xlu0 %2533
  %v2535 = vsel %vm194, %v2532, 0
  %v2537 = vsel %vm194, %v2534, 0
  %2539 = vmatprep.subr.mxu0 0.0
  %2540 = vmatpush1.xpose.msra.mxu0 %v2537
  %2541 = vmatprep.subr.mxu0 0.0
  %2542 = vmatpush1.xpose.msra.mxu0 0.0
  %2543 = vmatprep.subr.mxu0 0.0
  %2544 = vmatpush1.xpose.msra.mxu0 0.0
  %2545 = vmatprep.subr.mxu0 0.0
  %2546 = vmatpush1.xpose.msra.mxu0 0.0
  %2547 = vmatprep.subr.mxu0 0.0
  %2548 = vmatpush1.xpose.msra.mxu0 0.0
  %2549 = vmatprep.subr.mxu0 0.0
  %2550 = vmatpush1.xpose.msra.mxu0 0.0
  %2551 = vmatprep.subr.mxu0 0.0
  %2552 = vmatpush1.xpose.msra.mxu0 0.0
  %2553 = vmatprep.subr.mxu0 0.0
  %2554 = vmatpush1.xpose.msra.mxu0 0.0
  %2555 = vmatprep.subr.mxu0 0.0
  %2556 = vmatpush1.xpose.msra.mxu0 0.0
  %2557 = vmatprep.subr.mxu0 0.0
  %2558 = vmatpush1.xpose.msra.mxu0 0.0
  %2559 = vmatprep.subr.mxu0 0.0
  %2560 = vmatpush1.xpose.msra.mxu0 0.0
  %2561 = vmatprep.subr.mxu0 0.0
  %2562 = vmatpush1.xpose.msra.mxu0 0.0
  %2563 = vmatprep.subr.mxu0 0.0
  %2564 = vmatpush1.xpose.msra.mxu0 0.0
  %2565 = vmatprep.subr.mxu0 0.0
  %2566 = vmatpush1.xpose.msra.mxu0 0.0
  %2567 = vmatprep.subr.mxu0 0.0
  %2568 = vmatpush1.xpose.msra.mxu0 0.0
  %2569 = vmatprep.subr.mxu0 0.0
  %2570 = vmatpush1.xpose.msra.mxu0 0.0
  %2571 = vmatprep.subr.mxu0 0.0
  %2572 = vmatpush1.xpose.msra.mxu0 0.0
  %2573 = vmatprep.subr.mxu0 0.0
  %2574 = vmatpush1.xpose.msra.mxu0 0.0
  %2575 = vmatprep.subr.mxu0 0.0
  %2576 = vmatpush1.xpose.msra.mxu0 0.0
  %2577 = vmatprep.subr.mxu0 0.0
  %2578 = vmatpush1.xpose.msra.mxu0 0.0
  %2579 = vmatprep.subr.mxu0 0.0
  %2580 = vmatpush1.xpose.msra.mxu0 0.0
  %2581 = vmatprep.subr.mxu0 0.0
  %2582 = vmatpush1.xpose.msra.mxu0 0.0
  %2583 = vmatprep.subr.mxu0 0.0
  %2584 = vmatpush1.xpose.msra.mxu0 0.0
  %2585 = vmatprep.subr.mxu0 0.0
  %2586 = vmatpush1.xpose.msra.mxu0 0.0
  %2587 = vmatprep.subr.mxu0 0.0
  %2588 = vmatpush1.xpose.msra.mxu0 0.0
  %2589 = vmatprep.subr.mxu0 0.0
  %2590 = vmatpush1.xpose.msra.mxu0 0.0
  %2591 = vmatprep.subr.mxu0 0.0
  %2592 = vmatpush1.xpose.msra.mxu0 0.0
  %2593 = vmatprep.subr.mxu0 0.0
  %2594 = vmatpush1.xpose.msra.mxu0 0.0
  %2595 = vmatprep.subr.mxu0 0.0
  %2596 = vmatpush1.xpose.msra.mxu0 0.0
  %2597 = vmatprep.subr.mxu0 0.0
  %2598 = vmatpush1.xpose.msra.mxu0 0.0
  %2599 = vmatprep.subr.mxu0 0.0
  %2600 = vmatpush1.xpose.msra.mxu0 0.0
  %2601 = vmatprep.subr.mxu0 0.0
  %2602 = vmatpush1.xpose.msra.mxu0 0.0
  %2603 = vmatprep.mubr.f32.mxu0 0.0
  %2604 = vmatmul.mubr.f32.gmra.mrb[0].mxu0 %v2535
  %v2605 = vpop.f32.mrb[0].mxu0
  %v2606 = vadd.f32 0.0, %v2605
  %v2607 = vpop.f32.mrb[0].mxu0
  %2608 = vdwg.mxu0
  %2609 = vst.msk [vmem:[#allocation2 + $0x18] sm:$0xff] %vm194, %v2606
  %2611 = vrot.lane.b32.xlu0 %v2292, 96
  %v2612 = vpop.permute.xlu0 %2611
  %v2613 = vsel %vm194, %v2292, 0
  %v2615 = vsel %vm194, %v2612, 0
  %2617 = vmatprep.subr.mxu0 0.0
  %2618 = vmatpush1.xpose.msra.mxu0 %v2615
  %2619 = vmatprep.subr.mxu0 0.0
  %2620 = vmatpush1.xpose.msra.mxu0 0.0
  %2621 = vmatprep.subr.mxu0 0.0
  %2622 = vmatpush1.xpose.msra.mxu0 0.0
  %2623 = vmatprep.subr.mxu0 0.0
  %2624 = vmatpush1.xpose.msra.mxu0 0.0
  %2625 = vmatprep.subr.mxu0 0.0
  %2626 = vmatpush1.xpose.msra.mxu0 0.0
  %2627 = vmatprep.subr.mxu0 0.0
  %2628 = vmatpush1.xpose.msra.mxu0 0.0
  %2629 = vmatprep.subr.mxu0 0.0
  %2630 = vmatpush1.xpose.msra.mxu0 0.0
  %2631 = vmatprep.subr.mxu0 0.0
  %2632 = vmatpush1.xpose.msra.mxu0 0.0
  %2633 = vmatprep.subr.mxu0 0.0
  %2634 = vmatpush1.xpose.msra.mxu0 0.0
  %2635 = vmatprep.subr.mxu0 0.0
  %2636 = vmatpush1.xpose.msra.mxu0 0.0
  %2637 = vmatprep.subr.mxu0 0.0
  %2638 = vmatpush1.xpose.msra.mxu0 0.0
  %2639 = vmatprep.subr.mxu0 0.0
  %2640 = vmatpush1.xpose.msra.mxu0 0.0
  %2641 = vmatprep.subr.mxu0 0.0
  %2642 = vmatpush1.xpose.msra.mxu0 0.0
  %2643 = vmatprep.subr.mxu0 0.0
  %2644 = vmatpush1.xpose.msra.mxu0 0.0
  %2645 = vmatprep.subr.mxu0 0.0
  %2646 = vmatpush1.xpose.msra.mxu0 0.0
  %2647 = vmatprep.subr.mxu0 0.0
  %2648 = vmatpush1.xpose.msra.mxu0 0.0
  %2649 = vmatprep.subr.mxu0 0.0
  %2650 = vmatpush1.xpose.msra.mxu0 0.0
  %2651 = vmatprep.subr.mxu0 0.0
  %2652 = vmatpush1.xpose.msra.mxu0 0.0
  %2653 = vmatprep.subr.mxu0 0.0
  %2654 = vmatpush1.xpose.msra.mxu0 0.0
  %2655 = vmatprep.subr.mxu0 0.0
  %2656 = vmatpush1.xpose.msra.mxu0 0.0
  %2657 = vmatprep.subr.mxu0 0.0
  %2658 = vmatpush1.xpose.msra.mxu0 0.0
  %2659 = vmatprep.subr.mxu0 0.0
  %2660 = vmatpush1.xpose.msra.mxu0 0.0
  %2661 = vmatprep.subr.mxu0 0.0
  %2662 = vmatpush1.xpose.msra.mxu0 0.0
  %2663 = vmatprep.subr.mxu0 0.0
  %2664 = vmatpush1.xpose.msra.mxu0 0.0
  %2665 = vmatprep.subr.mxu0 0.0
  %2666 = vmatpush1.xpose.msra.mxu0 0.0
  %2667 = vmatprep.subr.mxu0 0.0
  %2668 = vmatpush1.xpose.msra.mxu0 0.0
  %2669 = vmatprep.subr.mxu0 0.0
  %2670 = vmatpush1.xpose.msra.mxu0 0.0
  %2671 = vmatprep.subr.mxu0 0.0
  %2672 = vmatpush1.xpose.msra.mxu0 0.0
  %2673 = vmatprep.subr.mxu0 0.0
  %2674 = vmatpush1.xpose.msra.mxu0 0.0
  %2675 = vmatprep.subr.mxu0 0.0
  %2676 = vmatpush1.xpose.msra.mxu0 0.0
  %2677 = vmatprep.subr.mxu0 0.0
  %2678 = vmatpush1.xpose.msra.mxu0 0.0
  %2679 = vmatprep.subr.mxu0 0.0
  %2680 = vmatpush1.xpose.msra.mxu0 0.0
  %2681 = vmatprep.mubr.f32.mxu0 0.0
  %2682 = vmatmul.mubr.f32.gmra.mrb[0].mxu0 %v2613
  %v2683 = vpop.f32.mrb[0].mxu0
  %v2684 = vadd.f32 0.0, %v2683
  %v2685 = vpop.f32.mrb[0].mxu0
  %2686 = vdwg.mxu0
  %2687 = vst.msk [vmem:[#allocation2 + $0x20] sm:$0xff] %vm194, %v2684
  %2688 = vrot.lane.b32.xlu0 %v2292, 120
  %v2689 = vpop.permute.xlu0 %2688
  %2690 = vrot.lane.b32.xlu0 %v2292, 88
  %v2691 = vpop.permute.xlu0 %2690
  %v2692 = vsel %vm194, %v2689, 0
  %v2694 = vsel %vm194, %v2691, 0
  %2696 = vmatprep.subr.mxu0 0.0
  %2697 = vmatpush1.xpose.msra.mxu0 %v2694
  %2698 = vmatprep.subr.mxu0 0.0
  %2699 = vmatpush1.xpose.msra.mxu0 0.0
  %2700 = vmatprep.subr.mxu0 0.0
  %2701 = vmatpush1.xpose.msra.mxu0 0.0
  %2702 = vmatprep.subr.mxu0 0.0
  %2703 = vmatpush1.xpose.msra.mxu0 0.0
  %2704 = vmatprep.subr.mxu0 0.0
  %2705 = vmatpush1.xpose.msra.mxu0 0.0
  %2706 = vmatprep.subr.mxu0 0.0
  %2707 = vmatpush1.xpose.msra.mxu0 0.0
  %2708 = vmatprep.subr.mxu0 0.0
  %2709 = vmatpush1.xpose.msra.mxu0 0.0
  %2710 = vmatprep.subr.mxu0 0.0
  %2711 = vmatpush1.xpose.msra.mxu0 0.0
  %2712 = vmatprep.subr.mxu0 0.0
  %2713 = vmatpush1.xpose.msra.mxu0 0.0
  %2714 = vmatprep.subr.mxu0 0.0
  %2715 = vmatpush1.xpose.msra.mxu0 0.0
  %2716 = vmatprep.subr.mxu0 0.0
  %2717 = vmatpush1.xpose.msra.mxu0 0.0
  %2718 = vmatprep.subr.mxu0 0.0
  %2719 = vmatpush1.xpose.msra.mxu0 0.0
  %2720 = vmatprep.subr.mxu0 0.0
  %2721 = vmatpush1.xpose.msra.mxu0 0.0
  %2722 = vmatprep.subr.mxu0 0.0
  %2723 = vmatpush1.xpose.msra.mxu0 0.0
  %2724 = vmatprep.subr.mxu0 0.0
  %2725 = vmatpush1.xpose.msra.mxu0 0.0
  %2726 = vmatprep.subr.mxu0 0.0
  %2727 = vmatpush1.xpose.msra.mxu0 0.0
  %2728 = vmatprep.subr.mxu0 0.0
  %2729 = vmatpush1.xpose.msra.mxu0 0.0
  %2730 = vmatprep.subr.mxu0 0.0
  %2731 = vmatpush1.xpose.msra.mxu0 0.0
  %2732 = vmatprep.subr.mxu0 0.0
  %2733 = vmatpush1.xpose.msra.mxu0 0.0
  %2734 = vmatprep.subr.mxu0 0.0
  %2735 = vmatpush1.xpose.msra.mxu0 0.0
  %2736 = vmatprep.subr.mxu0 0.0
  %2737 = vmatpush1.xpose.msra.mxu0 0.0
  %2738 = vmatprep.subr.mxu0 0.0
  %2739 = vmatpush1.xpose.msra.mxu0 0.0
  %2740 = vmatprep.subr.mxu0 0.0
  %2741 = vmatpush1.xpose.msra.mxu0 0.0
  %2742 = vmatprep.subr.mxu0 0.0
  %2743 = vmatpush1.xpose.msra.mxu0 0.0
  %2744 = vmatprep.subr.mxu0 0.0
  %2745 = vmatpush1.xpose.msra.mxu0 0.0
  %2746 = vmatprep.subr.mxu0 0.0
  %2747 = vmatpush1.xpose.msra.mxu0 0.0
  %2748 = vmatprep.subr.mxu0 0.0
  %2749 = vmatpush1.xpose.msra.mxu0 0.0
  %2750 = vmatprep.subr.mxu0 0.0
  %2751 = vmatpush1.xpose.msra.mxu0 0.0
  %2752 = vmatprep.subr.mxu0 0.0
  %2753 = vmatpush1.xpose.msra.mxu0 0.0
  %2754 = vmatprep.subr.mxu0 0.0
  %2755 = vmatpush1.xpose.msra.mxu0 0.0
  %2756 = vmatprep.subr.mxu0 0.0
  %2757 = vmatpush1.xpose.msra.mxu0 0.0
  %2758 = vmatprep.subr.mxu0 0.0
  %2759 = vmatpush1.xpose.msra.mxu0 0.0
  %2760 = vmatprep.mubr.f32.mxu0 0.0
  %2761 = vmatmul.mubr.f32.gmra.mrb[0].mxu0 %v2692
  %v2762 = vpop.f32.mrb[0].mxu0
  %v2763 = vadd.f32 0.0, %v2762
  %v2764 = vpop.f32.mrb[0].mxu0
  %2765 = vdwg.mxu0
  %2766 = vst.msk [vmem:[#allocation2 + $0x28] sm:$0xff] %vm194, %v2763
  %2767 = vrot.lane.b32.xlu0 %v2292, 112
  %v2768 = vpop.permute.xlu0 %2767
  %2769 = vrot.lane.b32.xlu0 %v2292, 80
  %v2770 = vpop.permute.xlu0 %2769
  %v2771 = vsel %vm194, %v2768, 0
  %v2773 = vsel %vm194, %v2770, 0
  %2775 = vmatprep.subr.mxu0 0.0
  %2776 = vmatpush1.xpose.msra.mxu0 %v2773
  %2777 = vmatprep.subr.mxu0 0.0
  %2778 = vmatpush1.xpose.msra.mxu0 0.0
  %2779 = vmatprep.subr.mxu0 0.0
  %2780 = vmatpush1.xpose.msra.mxu0 0.0
  %2781 = vmatprep.subr.mxu0 0.0
  %2782 = vmatpush1.xpose.msra.mxu0 0.0
  %2783 = vmatprep.subr.mxu0 0.0
  %2784 = vmatpush1.xpose.msra.mxu0 0.0
  %2785 = vmatprep.subr.mxu0 0.0
  %2786 = vmatpush1.xpose.msra.mxu0 0.0
  %2787 = vmatprep.subr.mxu0 0.0
  %2788 = vmatpush1.xpose.msra.mxu0 0.0
  %2789 = vmatprep.subr.mxu0 0.0
  %2790 = vmatpush1.xpose.msra.mxu0 0.0
  %2791 = vmatprep.subr.mxu0 0.0
  %2792 = vmatpush1.xpose.msra.mxu0 0.0
  %2793 = vmatprep.subr.mxu0 0.0
  %2794 = vmatpush1.xpose.msra.mxu0 0.0
  %2795 = vmatprep.subr.mxu0 0.0
  %2796 = vmatpush1.xpose.msra.mxu0 0.0
  %2797 = vmatprep.subr.mxu0 0.0
  %2798 = vmatpush1.xpose.msra.mxu0 0.0
  %2799 = vmatprep.subr.mxu0 0.0
  %2800 = vmatpush1.xpose.msra.mxu0 0.0
  %2801 = vmatprep.subr.mxu0 0.0
  %2802 = vmatpush1.xpose.msra.mxu0 0.0
  %2803 = vmatprep.subr.mxu0 0.0
  %2804 = vmatpush1.xpose.msra.mxu0 0.0
  %2805 = vmatprep.subr.mxu0 0.0
  %2806 = vmatpush1.xpose.msra.mxu0 0.0
  %2807 = vmatprep.subr.mxu0 0.0
  %2808 = vmatpush1.xpose.msra.mxu0 0.0
  %2809 = vmatprep.subr.mxu0 0.0
  %2810 = vmatpush1.xpose.msra.mxu0 0.0
  %2811 = vmatprep.subr.mxu0 0.0
  %2812 = vmatpush1.xpose.msra.mxu0 0.0
  %2813 = vmatprep.subr.mxu0 0.0
  %2814 = vmatpush1.xpose.msra.mxu0 0.0
  %2815 = vmatprep.subr.mxu0 0.0
  %2816 = vmatpush1.xpose.msra.mxu0 0.0
  %2817 = vmatprep.subr.mxu0 0.0
  %2818 = vmatpush1.xpose.msra.mxu0 0.0
  %2819 = vmatprep.subr.mxu0 0.0
  %2820 = vmatpush1.xpose.msra.mxu0 0.0
  %2821 = vmatprep.subr.mxu0 0.0
  %2822 = vmatpush1.xpose.msra.mxu0 0.0
  %2823 = vmatprep.subr.mxu0 0.0
  %2824 = vmatpush1.xpose.msra.mxu0 0.0
  %2825 = vmatprep.subr.mxu0 0.0
  %2826 = vmatpush1.xpose.msra.mxu0 0.0
  %2827 = vmatprep.subr.mxu0 0.0
  %2828 = vmatpush1.xpose.msra.mxu0 0.0
  %2829 = vmatprep.subr.mxu0 0.0
  %2830 = vmatpush1.xpose.msra.mxu0 0.0
  %2831 = vmatprep.subr.mxu0 0.0
  %2832 = vmatpush1.xpose.msra.mxu0 0.0
  %2833 = vmatprep.subr.mxu0 0.0
  %2834 = vmatpush1.xpose.msra.mxu0 0.0
  %2835 = vmatprep.subr.mxu0 0.0
  %2836 = vmatpush1.xpose.msra.mxu0 0.0
  %2837 = vmatprep.subr.mxu0 0.0
  %2838 = vmatpush1.xpose.msra.mxu0 0.0
  %2839 = vmatprep.mubr.f32.mxu0 0.0
  %2840 = vmatmul.mubr.f32.gmra.mrb[0].mxu0 %v2771
  %v2841 = vpop.f32.mrb[0].mxu0
  %v2842 = vadd.f32 0.0, %v2841
  %v2843 = vpop.f32.mrb[0].mxu0
  %2844 = vdwg.mxu0
  %2845 = vst.msk [vmem:[#allocation2 + $0x30] sm:$0xff] %vm194, %v2842
  %2846 = vrot.lane.b32.xlu0 %v2292, 104
  %v2847 = vpop.permute.xlu0 %2846
  %2848 = vrot.lane.b32.xlu0 %v2292, 72
  %v2849 = vpop.permute.xlu0 %2848
  %v2850 = vsel %vm194, %v2847, 0
  %v2852 = vsel %vm194, %v2849, 0
  %2854 = vmatprep.subr.mxu0 0.0
  %2855 = vmatpush1.xpose.msra.mxu0 %v2852
  %2856 = vmatprep.subr.mxu0 0.0
  %2857 = vmatpush1.xpose.msra.mxu0 0.0
  %2858 = vmatprep.subr.mxu0 0.0
  %2859 = vmatpush1.xpose.msra.mxu0 0.0
  %2860 = vmatprep.subr.mxu0 0.0
  %2861 = vmatpush1.xpose.msra.mxu0 0.0
  %2862 = vmatprep.subr.mxu0 0.0
  %2863 = vmatpush1.xpose.msra.mxu0 0.0
  %2864 = vmatprep.subr.mxu0 0.0
  %2865 = vmatpush1.xpose.msra.mxu0 0.0
  %2866 = vmatprep.subr.mxu0 0.0
  %2867 = vmatpush1.xpose.msra.mxu0 0.0
  %2868 = vmatprep.subr.mxu0 0.0
  %2869 = vmatpush1.xpose.msra.mxu0 0.0
  %2870 = vmatprep.subr.mxu0 0.0
  %2871 = vmatpush1.xpose.msra.mxu0 0.0
  %2872 = vmatprep.subr.mxu0 0.0
  %2873 = vmatpush1.xpose.msra.mxu0 0.0
  %2874 = vmatprep.subr.mxu0 0.0
  %2875 = vmatpush1.xpose.msra.mxu0 0.0
  %2876 = vmatprep.subr.mxu0 0.0
  %2877 = vmatpush1.xpose.msra.mxu0 0.0
  %2878 = vmatprep.subr.mxu0 0.0
  %2879 = vmatpush1.xpose.msra.mxu0 0.0
  %2880 = vmatprep.subr.mxu0 0.0
  %2881 = vmatpush1.xpose.msra.mxu0 0.0
  %2882 = vmatprep.subr.mxu0 0.0
  %2883 = vmatpush1.xpose.msra.mxu0 0.0
  %2884 = vmatprep.subr.mxu0 0.0
  %2885 = vmatpush1.xpose.msra.mxu0 0.0
  %2886 = vmatprep.subr.mxu0 0.0
  %2887 = vmatpush1.xpose.msra.mxu0 0.0
  %2888 = vmatprep.subr.mxu0 0.0
  %2889 = vmatpush1.xpose.msra.mxu0 0.0
  %2890 = vmatprep.subr.mxu0 0.0
  %2891 = vmatpush1.xpose.msra.mxu0 0.0
  %2892 = vmatprep.subr.mxu0 0.0
  %2893 = vmatpush1.xpose.msra.mxu0 0.0
  %2894 = vmatprep.subr.mxu0 0.0
  %2895 = vmatpush1.xpose.msra.mxu0 0.0
  %2896 = vmatprep.subr.mxu0 0.0
  %2897 = vmatpush1.xpose.msra.mxu0 0.0
  %2898 = vmatprep.subr.mxu0 0.0
  %2899 = vmatpush1.xpose.msra.mxu0 0.0
  %2900 = vmatprep.subr.mxu0 0.0
  %2901 = vmatpush1.xpose.msra.mxu0 0.0
  %2902 = vmatprep.subr.mxu0 0.0
  %2903 = vmatpush1.xpose.msra.mxu0 0.0
  %2904 = vmatprep.subr.mxu0 0.0
  %2905 = vmatpush1.xpose.msra.mxu0 0.0
  %2906 = vmatprep.subr.mxu0 0.0
  %2907 = vmatpush1.xpose.msra.mxu0 0.0
  %2908 = vmatprep.subr.mxu0 0.0
  %2909 = vmatpush1.xpose.msra.mxu0 0.0
  %2910 = vmatprep.subr.mxu0 0.0
  %2911 = vmatpush1.xpose.msra.mxu0 0.0
  %2912 = vmatprep.subr.mxu0 0.0
  %2913 = vmatpush1.xpose.msra.mxu0 0.0
  %2914 = vmatprep.subr.mxu0 0.0
  %2915 = vmatpush1.xpose.msra.mxu0 0.0
  %2916 = vmatprep.subr.mxu0 0.0
  %2917 = vmatpush1.xpose.msra.mxu0 0.0
  %2918 = vmatprep.mubr.f32.mxu0 0.0
  %2919 = vmatmul.mubr.f32.gmra.mrb[0].mxu0 %v2850
  %v2920 = vpop.f32.mrb[0].mxu0
  %v2921 = vadd.f32 0.0, %v2920
  %v2922 = vpop.f32.mrb[0].mxu0
  %2923 = vdwg.mxu0
  %2924 = vst.msk [vmem:[#allocation2 + $0x38] sm:$0xff] %vm194, %v2921
  %v2925 = vld [vmem:[#allocation2] sm:$0xff]
  %v2926 = vld [vmem:[#allocation2 + $0x8] sm:$0xff]
  %v2927 = vld [vmem:[#allocation2 + $0x10] sm:$0xff]
  %v2928 = vld [vmem:[#allocation2 + $0x18] sm:$0xff]
  %v2929 = vld [vmem:[#allocation2 + $0x20] sm:$0xff]
  %v2930 = vld [vmem:[#allocation2 + $0x28] sm:$0xff]
  %v2931 = vld [vmem:[#allocation2 + $0x30] sm:$0xff]
  %v2932 = vld [vmem:[#allocation2 + $0x38] sm:$0xff]
  %v2933 = vadd.f32 %v2925, %v40
  %v2934 = vadd.f32 %v2926, %v41
  %v2935 = vadd.f32 %v2927, %v42
  %v2936 = vadd.f32 %v2928, %v43
  %v2937 = vadd.f32 %v2929, %v44
  %v2938 = vadd.f32 %v2930, %v45
  %v2939 = vadd.f32 %v2931, %v46
  %v2940 = vadd.f32 %v2932, %v47
  %v2941 = vsel %vm194, %v2933, -inf
  %2942 = vmax.xlane.f32.xlu0 %v2941
  %v2943 = vpop.xlane.xlu0 %2942
  %v2944 = vsel %vm194, %v2934, -inf
  %2945 = vmax.xlane.f32.xlu0 %v2944
  %v2946 = vpop.xlane.xlu0 %2945
  %v2947 = vsel %vm194, %v2935, -inf
  %2948 = vmax.xlane.f32.xlu0 %v2947
  %v2949 = vpop.xlane.xlu0 %2948
  %v2950 = vsel %vm194, %v2936, -inf
  %2951 = vmax.xlane.f32.xlu0 %v2950
  %v2952 = vpop.xlane.xlu0 %2951
  %v2953 = vsel %vm194, %v2937, -inf
  %2954 = vmax.xlane.f32.xlu0 %v2953
  %v2955 = vpop.xlane.xlu0 %2954
  %v2956 = vsel %vm194, %v2938, -inf
  %2957 = vmax.xlane.f32.xlu0 %v2956
  %v2958 = vpop.xlane.xlu0 %2957
  %v2959 = vsel %vm194, %v2939, -inf
  %2960 = vmax.xlane.f32.xlu0 %v2959
  %v2961 = vpop.xlane.xlu0 %2960
  %v2962 = vsel %vm194, %v2940, -inf
  %2963 = vmax.xlane.f32.xlu0 %v2962
  %v2964 = vpop.xlane.xlu0 %2963
  %v2965 = vsub.f32 %v2933, %v2943
  %v2966 = vsub.f32 %v2934, %v2946
  %v2967 = vsub.f32 %v2935, %v2949
  %v2968 = vsub.f32 %v2936, %v2952
  %v2969 = vsub.f32 %v2937, %v2955
  %v2970 = vsub.f32 %v2938, %v2958
  %v2971 = vsub.f32 %v2939, %v2961
  %v2972 = vsub.f32 %v2940, %v2964
  %v2973 = vmul.f32 %v2965, 1.442695
  %v2974 = vpow.pop %v2973
  %v2975 = vmul.f32 %v2966, 1.442695
  %v2976 = vpow.pop %v2975
  %v2977 = vmul.f32 %v2967, 1.442695
  %v2978 = vpow.pop %v2977
  %v2979 = vmul.f32 %v2968, 1.442695
  %v2980 = vpow.pop %v2979
  %v2981 = vmul.f32 %v2969, 1.442695
  %v2982 = vpow.pop %v2981
  %v2983 = vmul.f32 %v2970, 1.442695
  %v2984 = vpow.pop %v2983
  %v2985 = vmul.f32 %v2971, 1.442695
  %v2986 = vpow.pop %v2985
  %v2987 = vmul.f32 %v2972, 1.442695
  %v2988 = vpow.pop %v2987
  %v2989 = vsel %vm194, %v2974, 0.0
  %2990 = vadd.xlane.f32.xlu0 %v2989
  %v2991 = vpop.xlane.xlu0 %2990
  %v2992 = vsel %vm194, %v2976, 0.0
  %2993 = vadd.xlane.f32.xlu0 %v2992
  %v2994 = vpop.xlane.xlu0 %2993
  %v2995 = vsel %vm194, %v2978, 0.0
  %2996 = vadd.xlane.f32.xlu0 %v2995
  %v2997 = vpop.xlane.xlu0 %2996
  %v2998 = vsel %vm194, %v2980, 0.0
  %2999 = vadd.xlane.f32.xlu0 %v2998
  %v3000 = vpop.xlane.xlu0 %2999
  %v3001 = vsel %vm194, %v2982, 0.0
  %3002 = vadd.xlane.f32.xlu0 %v3001
  %v3003 = vpop.xlane.xlu0 %3002
  %v3004 = vsel %vm194, %v2984, 0.0
  %3005 = vadd.xlane.f32.xlu0 %v3004
  %v3006 = vpop.xlane.xlu0 %3005
  %v3007 = vsel %vm194, %v2986, 0.0
  %3008 = vadd.xlane.f32.xlu0 %v3007
  %v3009 = vpop.xlane.xlu0 %3008
  %v3010 = vsel %vm194, %v2988, 0.0
  %3011 = vadd.xlane.f32.xlu0 %v3010
  %v3012 = vpop.xlane.xlu0 %3011
  %v3013 = vrcp.pop %v2991
  %v3014 = vmul.f32 %v2974, %v3013
  %v3015 = vrcp.pop %v2994
  %v3016 = vmul.f32 %v2976, %v3015
  %v3017 = vrcp.pop %v2997
  %v3018 = vmul.f32 %v2978, %v3017
  %v3019 = vrcp.pop %v3000
  %v3020 = vmul.f32 %v2980, %v3019
  %v3021 = vrcp.pop %v3003
  %v3022 = vmul.f32 %v2982, %v3021
  %v3023 = vrcp.pop %v3006
  %v3024 = vmul.f32 %v2984, %v3023
  %v3025 = vrcp.pop %v3009
  %v3026 = vmul.f32 %v2986, %v3025
  %v3027 = vrcp.pop %v3012
  %v3028 = vmul.f32 %v2988, %v3027
  %s3029 = scalar_lea.vmem %s12, 64
  %3030 = vst.msk [vmem:[%s3029] sm:$0xff] %vm194, %v3014
  %3031 = vst.msk [vmem:[%s3029 + $0x8] sm:$0xff] %vm194, %v3016
  %3032 = vst.msk [vmem:[%s3029 + $0x10] sm:$0xff] %vm194, %v3018
  %3033 = vst.msk [vmem:[%s3029 + $0x18] sm:$0xff] %vm194, %v3020
  %3034 = vst.msk [vmem:[%s3029 + $0x20] sm:$0xff] %vm194, %v3022
  %3035 = vst.msk [vmem:[%s3029 + $0x28] sm:$0xff] %vm194, %v3024
  %3036 = vst.msk [vmem:[%s3029 + $0x30] sm:$0xff] %vm194, %v3026
  %3037 = vst.msk [vmem:[%s3029 + $0x38] sm:$0xff] %vm194, %v3028
  %s3038 = scalar_lea.vmem %s5, 128
  %v3039 = vld [vmem:[%s3038] sm:$0xff]
  %v3040 = vld [vmem:[%s3038 + $0x8] sm:$0xff]
  %v3041 = vld [vmem:[%s3038 + $0x10] sm:$0xff]
  %v3042 = vld [vmem:[%s3038 + $0x18] sm:$0xff]
  %s3043 = scalar_lea.vmem %s6, 4
  %v3044 = vld [vmem:[%s3043] sm:$0x1]
  %v3046 = vlaneseq
  %v3047 = vshrl.u32 %v3046, 7
  %v3048 = vsub.s32 0, %v3047
  %v3049 = vrot.slane %v3044, %v3048
  %3051 = vmatprep.subr.mxu0 0.0
  %3052 = vmatpush1.msra.mxu0 %v3039
  %3053 = vmatprep.subr.mxu0 0.0
  %3054 = vmatpush1.msra.mxu0 %v3040
  %3055 = vmatprep.subr.mxu0 0.0
  %3056 = vmatpush1.msra.mxu0 %v3041
  %3057 = vmatprep.subr.mxu0 0.0
  %3058 = vmatpush1.msra.mxu0 %v3042
  %3059 = vmatprep.subr.mxu0 0.0
  %3060 = vmatpush1.msra.mxu0 0.0
  %3061 = vmatprep.subr.mxu0 0.0
  %3062 = vmatpush1.msra.mxu0 0.0
  %3063 = vmatprep.subr.mxu0 0.0
  %3064 = vmatpush1.msra.mxu0 0.0
  %3065 = vmatprep.subr.mxu0 0.0
  %3066 = vmatpush1.msra.mxu0 0.0
  %3067 = vmatprep.subr.mxu0 0.0
  %3068 = vmatpush1.msra.mxu0 0.0
  %3069 = vmatprep.subr.mxu0 0.0
  %3070 = vmatpush1.msra.mxu0 0.0
  %3071 = vmatprep.subr.mxu0 0.0
  %3072 = vmatpush1.msra.mxu0 0.0
  %3073 = vmatprep.subr.mxu0 0.0
  %3074 = vmatpush1.msra.mxu0 0.0
  %3075 = vmatprep.subr.mxu0 0.0
  %3076 = vmatpush1.msra.mxu0 0.0
  %3077 = vmatprep.subr.mxu0 0.0
  %3078 = vmatpush1.msra.mxu0 0.0
  %3079 = vmatprep.subr.mxu0 0.0
  %3080 = vmatpush1.msra.mxu0 0.0
  %3081 = vmatprep.subr.mxu0 0.0
  %3082 = vmatpush1.msra.mxu0 0.0
  %3083 = vmatprep.subr.mxu0 0.0
  %3084 = vmatpush1.msra.mxu0 0.0
  %3085 = vmatprep.subr.mxu0 0.0
  %3086 = vmatpush1.msra.mxu0 0.0
  %3087 = vmatprep.subr.mxu0 0.0
  %3088 = vmatpush1.msra.mxu0 0.0
  %3089 = vmatprep.subr.mxu0 0.0
  %3090 = vmatpush1.msra.mxu0 0.0
  %3091 = vmatprep.subr.mxu0 0.0
  %3092 = vmatpush1.msra.mxu0 0.0
  %3093 = vmatprep.subr.mxu0 0.0
  %3094 = vmatpush1.msra.mxu0 0.0
  %3095 = vmatprep.subr.mxu0 0.0
  %3096 = vmatpush1.msra.mxu0 0.0
  %3097 = vmatprep.subr.mxu0 0.0
  %3098 = vmatpush1.msra.mxu0 0.0
  %3099 = vmatprep.subr.mxu0 0.0
  %3100 = vmatpush1.msra.mxu0 0.0
  %3101 = vmatprep.subr.mxu0 0.0
  %3102 = vmatpush1.msra.mxu0 0.0
  %3103 = vmatprep.subr.mxu0 0.0
  %3104 = vmatpush1.msra.mxu0 0.0
  %3105 = vmatprep.subr.mxu0 0.0
  %3106 = vmatpush1.msra.mxu0 0.0
  %3107 = vmatprep.subr.mxu0 0.0
  %3108 = vmatpush1.msra.mxu0 0.0
  %3109 = vmatprep.subr.mxu0 0.0
  %3110 = vmatpush1.msra.mxu0 0.0
  %3111 = vmatprep.subr.mxu0 0.0
  %3112 = vmatpush1.msra.mxu0 0.0
  %3113 = vmatprep.subr.mxu0 0.0
  %3114 = vmatpush1.msra.mxu0 0.0
  %3115 = vmatprep.mubr.f32.mxu0 0.0
  %3116 = vmatmul.mubr.f32.gmra.mrb[0].mxu0 %v2215
  %v3117 = vpop.f32.mrb[0].mxu0
  %v3118 = vadd.f32 %v3049, %v3117
  %v3119 = vpop.f32.mrb[0].mxu0
  %3120 = vmatprep.mubr.f32.mxu0 0.0
  %3121 = vmatmul.mubr.f32.gmra.mrb[0].mxu0 %v2218
  %v3122 = vpop.f32.mrb[0].mxu0
  %v3123 = vadd.f32 %v3049, %v3122
  %v3124 = vpop.f32.mrb[0].mxu0
  %3125 = vdwg.mxu0
  %s3126 = scalar_lea.vmem %s5, 160
  %v3127 = vld [vmem:[%s3126] sm:$0xff]
  %v3128 = vld [vmem:[%s3126 + $0x8] sm:$0xff]
  %v3129 = vld [vmem:[%s3126 + $0x10] sm:$0xff]
  %v3130 = vld [vmem:[%s3126 + $0x18] sm:$0xff]
  %s3131 = scalar_lea.vmem %s6, 5
  %v3132 = vld [vmem:[%s3131] sm:$0x1]
  %v3134 = vlaneseq
  %v3135 = vshrl.u32 %v3134, 7
  %v3136 = vsub.s32 0, %v3135
  %v3137 = vrot.slane %v3132, %v3136
  %3139 = vmatprep.subr.mxu0 0.0
  %3140 = vmatpush1.msra.mxu0 %v3127
  %3141 = vmatprep.subr.mxu0 0.0
  %3142 = vmatpush1.msra.mxu0 %v3128
  %3143 = vmatprep.subr.mxu0 0.0
  %3144 = vmatpush1.msra.mxu0 %v3129
  %3145 = vmatprep.subr.mxu0 0.0
  %3146 = vmatpush1.msra.mxu0 %v3130
  %3147 = vmatprep.subr.mxu0 0.0
  %3148 = vmatpush1.msra.mxu0 0.0
  %3149 = vmatprep.subr.mxu0 0.0
  %3150 = vmatpush1.msra.mxu0 0.0
  %3151 = vmatprep.subr.mxu0 0.0
  %3152 = vmatpush1.msra.mxu0 0.0
  %3153 = vmatprep.subr.mxu0 0.0
  %3154 = vmatpush1.msra.mxu0 0.0
  %3155 = vmatprep.subr.mxu0 0.0
  %3156 = vmatpush1.msra.mxu0 0.0
  %3157 = vmatprep.subr.mxu0 0.0
  %3158 = vmatpush1.msra.mxu0 0.0
  %3159 = vmatprep.subr.mxu0 0.0
  %3160 = vmatpush1.msra.mxu0 0.0
  %3161 = vmatprep.subr.mxu0 0.0
  %3162 = vmatpush1.msra.mxu0 0.0
  %3163 = vmatprep.subr.mxu0 0.0
  %3164 = vmatpush1.msra.mxu0 0.0
  %3165 = vmatprep.subr.mxu0 0.0
  %3166 = vmatpush1.msra.mxu0 0.0
  %3167 = vmatprep.subr.mxu0 0.0
  %3168 = vmatpush1.msra.mxu0 0.0
  %3169 = vmatprep.subr.mxu0 0.0
  %3170 = vmatpush1.msra.mxu0 0.0
  %3171 = vmatprep.subr.mxu0 0.0
  %3172 = vmatpush1.msra.mxu0 0.0
  %3173 = vmatprep.subr.mxu0 0.0
  %3174 = vmatpush1.msra.mxu0 0.0
  %3175 = vmatprep.subr.mxu0 0.0
  %3176 = vmatpush1.msra.mxu0 0.0
  %3177 = vmatprep.subr.mxu0 0.0
  %3178 = vmatpush1.msra.mxu0 0.0
  %3179 = vmatprep.subr.mxu0 0.0
  %3180 = vmatpush1.msra.mxu0 0.0
  %3181 = vmatprep.subr.mxu0 0.0
  %3182 = vmatpush1.msra.mxu0 0.0
  %3183 = vmatprep.subr.mxu0 0.0
  %3184 = vmatpush1.msra.mxu0 0.0
  %3185 = vmatprep.subr.mxu0 0.0
  %3186 = vmatpush1.msra.mxu0 0.0
  %3187 = vmatprep.subr.mxu0 0.0
  %3188 = vmatpush1.msra.mxu0 0.0
  %3189 = vmatprep.subr.mxu0 0.0
  %3190 = vmatpush1.msra.mxu0 0.0
  %3191 = vmatprep.subr.mxu0 0.0
  %3192 = vmatpush1.msra.mxu0 0.0
  %3193 = vmatprep.subr.mxu0 0.0
  %3194 = vmatpush1.msra.mxu0 0.0
  %3195 = vmatprep.subr.mxu0 0.0
  %3196 = vmatpush1.msra.mxu0 0.0
  %3197 = vmatprep.subr.mxu0 0.0
  %3198 = vmatpush1.msra.mxu0 0.0
  %3199 = vmatprep.subr.mxu0 0.0
  %3200 = vmatpush1.msra.mxu0 0.0
  %3201 = vmatprep.subr.mxu0 0.0
  %3202 = vmatpush1.msra.mxu0 0.0
  %3203 = vmatprep.mubr.f32.mxu0 0.0
  %3204 = vmatmul.mubr.f32.gmra.mrb[0].mxu0 %v2215
  %v3205 = vpop.f32.mrb[0].mxu0
  %v3206 = vadd.f32 %v3137, %v3205
  %v3207 = vpop.f32.mrb[0].mxu0
  %3208 = vmatprep.mubr.f32.mxu0 0.0
  %3209 = vmatmul.mubr.f32.gmra.mrb[0].mxu0 %v2218
  %v3210 = vpop.f32.mrb[0].mxu0
  %v3211 = vadd.f32 %v3137, %v3210
  %v3212 = vpop.f32.mrb[0].mxu0
  %3213 = vdwg.mxu0
  %s3214 = scalar_lea.vmem %s5, 192
  %v3215 = vld [vmem:[%s3214] sm:$0xff]
  %v3216 = vld [vmem:[%s3214 + $0x8] sm:$0xff]
  %v3217 = vld [vmem:[%s3214 + $0x10] sm:$0xff]
  %v3218 = vld [vmem:[%s3214 + $0x18] sm:$0xff]
  %s3219 = scalar_lea.vmem %s6, 6
  %v3220 = vld [vmem:[%s3219] sm:$0x1]
  %v3222 = vlaneseq
  %v3223 = vshrl.u32 %v3222, 7
  %v3224 = vsub.s32 0, %v3223
  %v3225 = vrot.slane %v3220, %v3224
  %3227 = vmatprep.subr.mxu0 0.0
  %3228 = vmatpush1.msra.mxu0 %v3215
  %3229 = vmatprep.subr.mxu0 0.0
  %3230 = vmatpush1.msra.mxu0 %v3216
  %3231 = vmatprep.subr.mxu0 0.0
  %3232 = vmatpush1.msra.mxu0 %v3217
  %3233 = vmatprep.subr.mxu0 0.0
  %3234 = vmatpush1.msra.mxu0 %v3218
  %3235 = vmatprep.subr.mxu0 0.0
  %3236 = vmatpush1.msra.mxu0 0.0
  %3237 = vmatprep.subr.mxu0 0.0
  %3238 = vmatpush1.msra.mxu0 0.0
  %3239 = vmatprep.subr.mxu0 0.0
  %3240 = vmatpush1.msra.mxu0 0.0
  %3241 = vmatprep.subr.mxu0 0.0
  %3242 = vmatpush1.msra.mxu0 0.0
  %3243 = vmatprep.subr.mxu0 0.0
  %3244 = vmatpush1.msra.mxu0 0.0
  %3245 = vmatprep.subr.mxu0 0.0
  %3246 = vmatpush1.msra.mxu0 0.0
  %3247 = vmatprep.subr.mxu0 0.0
  %3248 = vmatpush1.msra.mxu0 0.0
  %3249 = vmatprep.subr.mxu0 0.0
  %3250 = vmatpush1.msra.mxu0 0.0
  %3251 = vmatprep.subr.mxu0 0.0
  %3252 = vmatpush1.msra.mxu0 0.0
  %3253 = vmatprep.subr.mxu0 0.0
  %3254 = vmatpush1.msra.mxu0 0.0
  %3255 = vmatprep.subr.mxu0 0.0
  %3256 = vmatpush1.msra.mxu0 0.0
  %3257 = vmatprep.subr.mxu0 0.0
  %3258 = vmatpush1.msra.mxu0 0.0
  %3259 = vmatprep.subr.mxu0 0.0
  %3260 = vmatpush1.msra.mxu0 0.0
  %3261 = vmatprep.subr.mxu0 0.0
  %3262 = vmatpush1.msra.mxu0 0.0
  %3263 = vmatprep.subr.mxu0 0.0
  %3264 = vmatpush1.msra.mxu0 0.0
  %3265 = vmatprep.subr.mxu0 0.0
  %3266 = vmatpush1.msra.mxu0 0.0
  %3267 = vmatprep.subr.mxu0 0.0
  %3268 = vmatpush1.msra.mxu0 0.0
  %3269 = vmatprep.subr.mxu0 0.0
  %3270 = vmatpush1.msra.mxu0 0.0
  %3271 = vmatprep.subr.mxu0 0.0
  %3272 = vmatpush1.msra.mxu0 0.0
  %3273 = vmatprep.subr.mxu0 0.0
  %3274 = vmatpush1.msra.mxu0 0.0
  %3275 = vmatprep.subr.mxu0 0.0
  %3276 = vmatpush1.msra.mxu0 0.0
  %3277 = vmatprep.subr.mxu0 0.0
  %3278 = vmatpush1.msra.mxu0 0.0
  %3279 = vmatprep.subr.mxu0 0.0
  %3280 = vmatpush1.msra.mxu0 0.0
  %3281 = vmatprep.subr.mxu0 0.0
  %3282 = vmatpush1.msra.mxu0 0.0
  %3283 = vmatprep.subr.mxu0 0.0
  %3284 = vmatpush1.msra.mxu0 0.0
  %3285 = vmatprep.subr.mxu0 0.0
  %3286 = vmatpush1.msra.mxu0 0.0
  %3287 = vmatprep.subr.mxu0 0.0
  %3288 = vmatpush1.msra.mxu0 0.0
  %3289 = vmatprep.subr.mxu0 0.0
  %3290 = vmatpush1.msra.mxu0 0.0
  %3291 = vmatprep.mubr.f32.mxu0 0.0
  %3292 = vmatmul.mubr.f32.gmra.mrb[0].mxu0 %v2215
  %v3293 = vpop.f32.mrb[0].mxu0
  %v3294 = vadd.f32 %v3225, %v3293
  %v3295 = vpop.f32.mrb[0].mxu0
  %3296 = vmatprep.mubr.f32.mxu0 0.0
  %3297 = vmatmul.mubr.f32.gmra.mrb[0].mxu0 %v2218
  %v3298 = vpop.f32.mrb[0].mxu0
  %v3299 = vadd.f32 %v3225, %v3298
  %v3300 = vpop.f32.mrb[0].mxu0
  %3301 = vdwg.mxu0
  %s3302 = scalar_lea.vmem %s5, 224
  %v3303 = vld [vmem:[%s3302] sm:$0xff]
  %v3304 = vld [vmem:[%s3302 + $0x8] sm:$0xff]
  %v3305 = vld [vmem:[%s3302 + $0x10] sm:$0xff]
  %v3306 = vld [vmem:[%s3302 + $0x18] sm:$0xff]
  %s3307 = scalar_lea.vmem %s6, 7
  %v3308 = vld [vmem:[%s3307] sm:$0x1]
  %v3310 = vlaneseq
  %v3311 = vshrl.u32 %v3310, 7
  %v3312 = vsub.s32 0, %v3311
  %v3313 = vrot.slane %v3308, %v3312
  %3315 = vmatprep.subr.mxu0 0.0
  %3316 = vmatpush1.msra.mxu0 %v3303
  %3317 = vmatprep.subr.mxu0 0.0
  %3318 = vmatpush1.msra.mxu0 %v3304
  %3319 = vmatprep.subr.mxu0 0.0
  %3320 = vmatpush1.msra.mxu0 %v3305
  %3321 = vmatprep.subr.mxu0 0.0
  %3322 = vmatpush1.msra.mxu0 %v3306
  %3323 = vmatprep.subr.mxu0 0.0
  %3324 = vmatpush1.msra.mxu0 0.0
  %3325 = vmatprep.subr.mxu0 0.0
  %3326 = vmatpush1.msra.mxu0 0.0
  %3327 = vmatprep.subr.mxu0 0.0
  %3328 = vmatpush1.msra.mxu0 0.0
  %3329 = vmatprep.subr.mxu0 0.0
  %3330 = vmatpush1.msra.mxu0 0.0
  %3331 = vmatprep.subr.mxu0 0.0
  %3332 = vmatpush1.msra.mxu0 0.0
  %3333 = vmatprep.subr.mxu0 0.0
  %3334 = vmatpush1.msra.mxu0 0.0
  %3335 = vmatprep.subr.mxu0 0.0
  %3336 = vmatpush1.msra.mxu0 0.0
  %3337 = vmatprep.subr.mxu0 0.0
  %3338 = vmatpush1.msra.mxu0 0.0
  %3339 = vmatprep.subr.mxu0 0.0
  %3340 = vmatpush1.msra.mxu0 0.0
  %3341 = vmatprep.subr.mxu0 0.0
  %3342 = vmatpush1.msra.mxu0 0.0
  %3343 = vmatprep.subr.mxu0 0.0
  %3344 = vmatpush1.msra.mxu0 0.0
  %3345 = vmatprep.subr.mxu0 0.0
  %3346 = vmatpush1.msra.mxu0 0.0
  %3347 = vmatprep.subr.mxu0 0.0
  %3348 = vmatpush1.msra.mxu0 0.0
  %3349 = vmatprep.subr.mxu0 0.0
  %3350 = vmatpush1.msra.mxu0 0.0
  %3351 = vmatprep.subr.mxu0 0.0
  %3352 = vmatpush1.msra.mxu0 0.0
  %3353 = vmatprep.subr.mxu0 0.0
  %3354 = vmatpush1.msra.mxu0 0.0
  %3355 = vmatprep.subr.mxu0 0.0
  %3356 = vmatpush1.msra.mxu0 0.0
  %3357 = vmatprep.subr.mxu0 0.0
  %3358 = vmatpush1.msra.mxu0 0.0
  %3359 = vmatprep.subr.mxu0 0.0
  %3360 = vmatpush1.msra.mxu0 0.0
  %3361 = vmatprep.subr.mxu0 0.0
  %3362 = vmatpush1.msra.mxu0 0.0
  %3363 = vmatprep.subr.mxu0 0.0
  %3364 = vmatpush1.msra.mxu0 0.0
  %3365 = vmatprep.subr.mxu0 0.0
  %3366 = vmatpush1.msra.mxu0 0.0
  %3367 = vmatprep.subr.mxu0 0.0
  %3368 = vmatpush1.msra.mxu0 0.0
  %3369 = vmatprep.subr.mxu0 0.0
  %3370 = vmatpush1.msra.mxu0 0.0
  %3371 = vmatprep.subr.mxu0 0.0
  %3372 = vmatpush1.msra.mxu0 0.0
  %3373 = vmatprep.subr.mxu0 0.0
  %3374 = vmatpush1.msra.mxu0 0.0
  %3375 = vmatprep.subr.mxu0 0.0
  %3376 = vmatpush1.msra.mxu0 0.0
  %3377 = vmatprep.subr.mxu0 0.0
  %3378 = vmatpush1.msra.mxu0 0.0
  %3379 = vmatprep.mubr.f32.mxu0 0.0
  %3380 = vmatmul.mubr.f32.gmra.mrb[0].mxu0 %v2215
  %v3381 = vpop.f32.mrb[0].mxu0
  %v3382 = vadd.f32 %v3313, %v3381
  %v3383 = vpop.f32.mrb[0].mxu0
  %3384 = vmatprep.mubr.f32.mxu0 0.0
  %3385 = vmatmul.mubr.f32.gmra.mrb[0].mxu0 %v2218
  %v3386 = vpop.f32.mrb[0].mxu0
  %v3387 = vadd.f32 %v3313, %v3386
  %v3388 = vpop.f32.mrb[0].mxu0
  %3389 = vdwg.mxu0
  %s3390 = scalar_lea.vmem %s10, 6
  %v3391 = vld [vmem:[%s3390] sm:$0x1]
  %v3393 = vlaneseq
  %v3394 = vshrl.u32 %v3393, 7
  %v3395 = vsub.s32 0, %v3394
  %v3396 = vrot.slane %v3391, %v3395
  %v3398 = vadd.f32 %v2196, %v3396
  %v3400 = vsel %vm194, %v3014, 0
  %3402 = vmatprep.subr.mxu0 0.0
  %3403 = vmatpush1.msra.mxu0 %v3118
  %3404 = vmatprep.subr.mxu0 0.0
  %3405 = vmatpush1.msra.mxu0 0.0
  %3406 = vmatprep.subr.mxu0 0.0
  %3407 = vmatpush1.msra.mxu0 0.0
  %3408 = vmatprep.subr.mxu0 0.0
  %3409 = vmatpush1.msra.mxu0 0.0
  %3410 = vmatprep.subr.mxu0 0.0
  %3411 = vmatpush1.msra.mxu0 0.0
  %3412 = vmatprep.subr.mxu0 0.0
  %3413 = vmatpush1.msra.mxu0 0.0
  %3414 = vmatprep.subr.mxu0 0.0
  %3415 = vmatpush1.msra.mxu0 0.0
  %3416 = vmatprep.subr.mxu0 0.0
  %3417 = vmatpush1.msra.mxu0 0.0
  %3418 = vmatprep.subr.mxu0 0.0
  %3419 = vmatpush1.msra.mxu0 0.0
  %3420 = vmatprep.subr.mxu0 0.0
  %3421 = vmatpush1.msra.mxu0 0.0
  %3422 = vmatprep.subr.mxu0 0.0
  %3423 = vmatpush1.msra.mxu0 0.0
  %3424 = vmatprep.subr.mxu0 0.0
  %3425 = vmatpush1.msra.mxu0 0.0
  %3426 = vmatprep.subr.mxu0 0.0
  %3427 = vmatpush1.msra.mxu0 0.0
  %3428 = vmatprep.subr.mxu0 0.0
  %3429 = vmatpush1.msra.mxu0 0.0
  %3430 = vmatprep.subr.mxu0 0.0
  %3431 = vmatpush1.msra.mxu0 0.0
  %3432 = vmatprep.subr.mxu0 0.0
  %3433 = vmatpush1.msra.mxu0 0.0
  %3434 = vmatprep.subr.mxu0 0.0
  %3435 = vmatpush1.msra.mxu0 0.0
  %3436 = vmatprep.subr.mxu0 0.0
  %3437 = vmatpush1.msra.mxu0 0.0
  %3438 = vmatprep.subr.mxu0 0.0
  %3439 = vmatpush1.msra.mxu0 0.0
  %3440 = vmatprep.subr.mxu0 0.0
  %3441 = vmatpush1.msra.mxu0 0.0
  %3442 = vmatprep.subr.mxu0 0.0
  %3443 = vmatpush1.msra.mxu0 0.0
  %3444 = vmatprep.subr.mxu0 0.0
  %3445 = vmatpush1.msra.mxu0 0.0
  %3446 = vmatprep.subr.mxu0 0.0
  %3447 = vmatpush1.msra.mxu0 0.0
  %3448 = vmatprep.subr.mxu0 0.0
  %3449 = vmatpush1.msra.mxu0 0.0
  %3450 = vmatprep.subr.mxu0 0.0
  %3451 = vmatpush1.msra.mxu0 0.0
  %3452 = vmatprep.subr.mxu0 0.0
  %3453 = vmatpush1.msra.mxu0 0.0
  %3454 = vmatprep.subr.mxu0 0.0
  %3455 = vmatpush1.msra.mxu0 0.0
  %3456 = vmatprep.subr.mxu0 0.0
  %3457 = vmatpush1.msra.mxu0 0.0
  %3458 = vmatprep.subr.mxu0 0.0
  %3459 = vmatpush1.msra.mxu0 0.0
  %3460 = vmatprep.subr.mxu0 0.0
  %3461 = vmatpush1.msra.mxu0 0.0
  %3462 = vmatprep.subr.mxu0 0.0
  %3463 = vmatpush1.msra.mxu0 0.0
  %3464 = vmatprep.subr.mxu0 0.0
  %3465 = vmatpush1.msra.mxu0 0.0
  %3466 = vmatprep.mubr.f32.mxu0 0.0
  %3467 = vmatmul.mubr.f32.gmra.mrb[0].mxu0 %v3400
  %v3468 = vpop.f32.mrb[0].mxu0
  %v3469 = vadd.f32 0.0, %v3468
  %v3470 = vpop.f32.mrb[0].mxu0
  %3471 = vdwg.mxu0
  %v3472 = vadd.f32 %v3398, %v3469
  %v3474 = vsel %vm194, %v3016, 0
  %3476 = vmatprep.subr.mxu0 0.0
  %3477 = vmatpush1.msra.mxu0 %v3206
  %3478 = vmatprep.subr.mxu0 0.0
  %3479 = vmatpush1.msra.mxu0 0.0
  %3480 = vmatprep.subr.mxu0 0.0
  %3481 = vmatpush1.msra.mxu0 0.0
  %3482 = vmatprep.subr.mxu0 0.0
  %3483 = vmatpush1.msra.mxu0 0.0
  %3484 = vmatprep.subr.mxu0 0.0
  %3485 = vmatpush1.msra.mxu0 0.0
  %3486 = vmatprep.subr.mxu0 0.0
  %3487 = vmatpush1.msra.mxu0 0.0
  %3488 = vmatprep.subr.mxu0 0.0
  %3489 = vmatpush1.msra.mxu0 0.0
  %3490 = vmatprep.subr.mxu0 0.0
  %3491 = vmatpush1.msra.mxu0 0.0
  %3492 = vmatprep.subr.mxu0 0.0
  %3493 = vmatpush1.msra.mxu0 0.0
  %3494 = vmatprep.subr.mxu0 0.0
  %3495 = vmatpush1.msra.mxu0 0.0
  %3496 = vmatprep.subr.mxu0 0.0
  %3497 = vmatpush1.msra.mxu0 0.0
  %3498 = vmatprep.subr.mxu0 0.0
  %3499 = vmatpush1.msra.mxu0 0.0
  %3500 = vmatprep.subr.mxu0 0.0
  %3501 = vmatpush1.msra.mxu0 0.0
  %3502 = vmatprep.subr.mxu0 0.0
  %3503 = vmatpush1.msra.mxu0 0.0
  %3504 = vmatprep.subr.mxu0 0.0
  %3505 = vmatpush1.msra.mxu0 0.0
  %3506 = vmatprep.subr.mxu0 0.0
  %3507 = vmatpush1.msra.mxu0 0.0
  %3508 = vmatprep.subr.mxu0 0.0
  %3509 = vmatpush1.msra.mxu0 0.0
  %3510 = vmatprep.subr.mxu0 0.0
  %3511 = vmatpush1.msra.mxu0 0.0
  %3512 = vmatprep.subr.mxu0 0.0
  %3513 = vmatpush1.msra.mxu0 0.0
  %3514 = vmatprep.subr.mxu0 0.0
  %3515 = vmatpush1.msra.mxu0 0.0
  %3516 = vmatprep.subr.mxu0 0.0
  %3517 = vmatpush1.msra.mxu0 0.0
  %3518 = vmatprep.subr.mxu0 0.0
  %3519 = vmatpush1.msra.mxu0 0.0
  %3520 = vmatprep.subr.mxu0 0.0
  %3521 = vmatpush1.msra.mxu0 0.0
  %3522 = vmatprep.subr.mxu0 0.0
  %3523 = vmatpush1.msra.mxu0 0.0
  %3524 = vmatprep.subr.mxu0 0.0
  %3525 = vmatpush1.msra.mxu0 0.0
  %3526 = vmatprep.subr.mxu0 0.0
  %3527 = vmatpush1.msra.mxu0 0.0
  %3528 = vmatprep.subr.mxu0 0.0
  %3529 = vmatpush1.msra.mxu0 0.0
  %3530 = vmatprep.subr.mxu0 0.0
  %3531 = vmatpush1.msra.mxu0 0.0
  %3532 = vmatprep.subr.mxu0 0.0
  %3533 = vmatpush1.msra.mxu0 0.0
  %3534 = vmatprep.subr.mxu0 0.0
  %3535 = vmatpush1.msra.mxu0 0.0
  %3536 = vmatprep.subr.mxu0 0.0
  %3537 = vmatpush1.msra.mxu0 0.0
  %3538 = vmatprep.subr.mxu0 0.0
  %3539 = vmatpush1.msra.mxu0 0.0
  %3540 = vmatprep.mubr.f32.mxu0 0.0
  %3541 = vmatmul.mubr.f32.gmra.mrb[0].mxu0 %v3474
  %v3542 = vpop.f32.mrb[0].mxu0
  %v3543 = vadd.f32 0.0, %v3542
  %v3544 = vpop.f32.mrb[0].mxu0
  %3545 = vdwg.mxu0
  %v3546 = vadd.f32 %v3472, %v3543
  %v3548 = vsel %vm194, %v3018, 0
  %3550 = vmatprep.subr.mxu0 0.0
  %3551 = vmatpush1.msra.mxu0 %v3294
  %3552 = vmatprep.subr.mxu0 0.0
  %3553 = vmatpush1.msra.mxu0 0.0
  %3554 = vmatprep.subr.mxu0 0.0
  %3555 = vmatpush1.msra.mxu0 0.0
  %3556 = vmatprep.subr.mxu0 0.0
  %3557 = vmatpush1.msra.mxu0 0.0
  %3558 = vmatprep.subr.mxu0 0.0
  %3559 = vmatpush1.msra.mxu0 0.0
  %3560 = vmatprep.subr.mxu0 0.0
  %3561 = vmatpush1.msra.mxu0 0.0
  %3562 = vmatprep.subr.mxu0 0.0
  %3563 = vmatpush1.msra.mxu0 0.0
  %3564 = vmatprep.subr.mxu0 0.0
  %3565 = vmatpush1.msra.mxu0 0.0
  %3566 = vmatprep.subr.mxu0 0.0
  %3567 = vmatpush1.msra.mxu0 0.0
  %3568 = vmatprep.subr.mxu0 0.0
  %3569 = vmatpush1.msra.mxu0 0.0
  %3570 = vmatprep.subr.mxu0 0.0
  %3571 = vmatpush1.msra.mxu0 0.0
  %3572 = vmatprep.subr.mxu0 0.0
  %3573 = vmatpush1.msra.mxu0 0.0
  %3574 = vmatprep.subr.mxu0 0.0
  %3575 = vmatpush1.msra.mxu0 0.0
  %3576 = vmatprep.subr.mxu0 0.0
  %3577 = vmatpush1.msra.mxu0 0.0
  %3578 = vmatprep.subr.mxu0 0.0
  %3579 = vmatpush1.msra.mxu0 0.0
  %3580 = vmatprep.subr.mxu0 0.0
  %3581 = vmatpush1.msra.mxu0 0.0
  %3582 = vmatprep.subr.mxu0 0.0
  %3583 = vmatpush1.msra.mxu0 0.0
  %3584 = vmatprep.subr.mxu0 0.0
  %3585 = vmatpush1.msra.mxu0 0.0
  %3586 = vmatprep.subr.mxu0 0.0
  %3587 = vmatpush1.msra.mxu0 0.0
  %3588 = vmatprep.subr.mxu0 0.0
  %3589 = vmatpush1.msra.mxu0 0.0
  %3590 = vmatprep.subr.mxu0 0.0
  %3591 = vmatpush1.msra.mxu0 0.0
  %3592 = vmatprep.subr.mxu0 0.0
  %3593 = vmatpush1.msra.mxu0 0.0
  %3594 = vmatprep.subr.mxu0 0.0
  %3595 = vmatpush1.msra.mxu0 0.0
  %3596 = vmatprep.subr.mxu0 0.0
  %3597 = vmatpush1.msra.mxu0 0.0
  %3598 = vmatprep.subr.mxu0 0.0
  %3599 = vmatpush1.msra.mxu0 0.0
  %3600 = vmatprep.subr.mxu0 0.0
  %3601 = vmatpush1.msra.mxu0 0.0
  %3602 = vmatprep.subr.mxu0 0.0
  %3603 = vmatpush1.msra.mxu0 0.0
  %3604 = vmatprep.subr.mxu0 0.0
  %3605 = vmatpush1.msra.mxu0 0.0
  %3606 = vmatprep.subr.mxu0 0.0
  %3607 = vmatpush1.msra.mxu0 0.0
  %3608 = vmatprep.subr.mxu0 0.0
  %3609 = vmatpush1.msra.mxu0 0.0
  %3610 = vmatprep.subr.mxu0 0.0
  %3611 = vmatpush1.msra.mxu0 0.0
  %3612 = vmatprep.subr.mxu0 0.0
  %3613 = vmatpush1.msra.mxu0 0.0
  %3614 = vmatprep.mubr.f32.mxu0 0.0
  %3615 = vmatmul.mubr.f32.gmra.mrb[0].mxu0 %v3548
  %v3616 = vpop.f32.mrb[0].mxu0
  %v3617 = vadd.f32 0.0, %v3616
  %v3618 = vpop.f32.mrb[0].mxu0
  %3619 = vdwg.mxu0
  %v3620 = vadd.f32 %v3546, %v3617
  %v3622 = vsel %vm194, %v3020, 0
  %3624 = vmatprep.subr.mxu0 0.0
  %3625 = vmatpush1.msra.mxu0 %v3382
  %3626 = vmatprep.subr.mxu0 0.0
  %3627 = vmatpush1.msra.mxu0 0.0
  %3628 = vmatprep.subr.mxu0 0.0
  %3629 = vmatpush1.msra.mxu0 0.0
  %3630 = vmatprep.subr.mxu0 0.0
  %3631 = vmatpush1.msra.mxu0 0.0
  %3632 = vmatprep.subr.mxu0 0.0
  %3633 = vmatpush1.msra.mxu0 0.0
  %3634 = vmatprep.subr.mxu0 0.0
  %3635 = vmatpush1.msra.mxu0 0.0
  %3636 = vmatprep.subr.mxu0 0.0
  %3637 = vmatpush1.msra.mxu0 0.0
  %3638 = vmatprep.subr.mxu0 0.0
  %3639 = vmatpush1.msra.mxu0 0.0
  %3640 = vmatprep.subr.mxu0 0.0
  %3641 = vmatpush1.msra.mxu0 0.0
  %3642 = vmatprep.subr.mxu0 0.0
  %3643 = vmatpush1.msra.mxu0 0.0
  %3644 = vmatprep.subr.mxu0 0.0
  %3645 = vmatpush1.msra.mxu0 0.0
  %3646 = vmatprep.subr.mxu0 0.0
  %3647 = vmatpush1.msra.mxu0 0.0
  %3648 = vmatprep.subr.mxu0 0.0
  %3649 = vmatpush1.msra.mxu0 0.0
  %3650 = vmatprep.subr.mxu0 0.0
  %3651 = vmatpush1.msra.mxu0 0.0
  %3652 = vmatprep.subr.mxu0 0.0
  %3653 = vmatpush1.msra.mxu0 0.0
  %3654 = vmatprep.subr.mxu0 0.0
  %3655 = vmatpush1.msra.mxu0 0.0
  %3656 = vmatprep.subr.mxu0 0.0
  %3657 = vmatpush1.msra.mxu0 0.0
  %3658 = vmatprep.subr.mxu0 0.0
  %3659 = vmatpush1.msra.mxu0 0.0
  %3660 = vmatprep.subr.mxu0 0.0
  %3661 = vmatpush1.msra.mxu0 0.0
  %3662 = vmatprep.subr.mxu0 0.0
  %3663 = vmatpush1.msra.mxu0 0.0
  %3664 = vmatprep.subr.mxu0 0.0
  %3665 = vmatpush1.msra.mxu0 0.0
  %3666 = vmatprep.subr.mxu0 0.0
  %3667 = vmatpush1.msra.mxu0 0.0
  %3668 = vmatprep.subr.mxu0 0.0
  %3669 = vmatpush1.msra.mxu0 0.0
  %3670 = vmatprep.subr.mxu0 0.0
  %3671 = vmatpush1.msra.mxu0 0.0
  %3672 = vmatprep.subr.mxu0 0.0
  %3673 = vmatpush1.msra.mxu0 0.0
  %3674 = vmatprep.subr.mxu0 0.0
  %3675 = vmatpush1.msra.mxu0 0.0
  %3676 = vmatprep.subr.mxu0 0.0
  %3677 = vmatpush1.msra.mxu0 0.0
  %3678 = vmatprep.subr.mxu0 0.0
  %3679 = vmatpush1.msra.mxu0 0.0
  %3680 = vmatprep.subr.mxu0 0.0
  %3681 = vmatpush1.msra.mxu0 0.0
  %3682 = vmatprep.subr.mxu0 0.0
  %3683 = vmatpush1.msra.mxu0 0.0
  %3684 = vmatprep.subr.mxu0 0.0
  %3685 = vmatpush1.msra.mxu0 0.0
  %3686 = vmatprep.subr.mxu0 0.0
  %3687 = vmatpush1.msra.mxu0 0.0
  %3688 = vmatprep.mubr.f32.mxu0 0.0
  %3689 = vmatmul.mubr.f32.gmra.mrb[0].mxu0 %v3622
  %v3690 = vpop.f32.mrb[0].mxu0
  %v3691 = vadd.f32 0.0, %v3690
  %v3692 = vpop.f32.mrb[0].mxu0
  %3693 = vdwg.mxu0
  %v3694 = vadd.f32 %v3620, %v3691
  %3695 = vst.msk [vmem:[#allocation3] sm:$0xff] %vm53, %v3694
  %v3696 = vld [vmem:[%s3390] sm:$0x1]
  %v3698 = vlaneseq
  %v3699 = vshrl.u32 %v3698, 7
  %v3700 = vsub.s32 0, %v3699
  %v3701 = vrot.slane %v3696, %v3700
  %v3703 = vadd.f32 %v2197, %v3701
  %v3705 = vsel %vm194, %v3022, 0
  %3707 = vmatprep.subr.mxu0 0.0
  %3708 = vmatpush1.msra.mxu0 %v3123
  %3709 = vmatprep.subr.mxu0 0.0
  %3710 = vmatpush1.msra.mxu0 0.0
  %3711 = vmatprep.subr.mxu0 0.0
  %3712 = vmatpush1.msra.mxu0 0.0
  %3713 = vmatprep.subr.mxu0 0.0
  %3714 = vmatpush1.msra.mxu0 0.0
  %3715 = vmatprep.subr.mxu0 0.0
  %3716 = vmatpush1.msra.mxu0 0.0
  %3717 = vmatprep.subr.mxu0 0.0
  %3718 = vmatpush1.msra.mxu0 0.0
  %3719 = vmatprep.subr.mxu0 0.0
  %3720 = vmatpush1.msra.mxu0 0.0
  %3721 = vmatprep.subr.mxu0 0.0
  %3722 = vmatpush1.msra.mxu0 0.0
  %3723 = vmatprep.subr.mxu0 0.0
  %3724 = vmatpush1.msra.mxu0 0.0
  %3725 = vmatprep.subr.mxu0 0.0
  %3726 = vmatpush1.msra.mxu0 0.0
  %3727 = vmatprep.subr.mxu0 0.0
  %3728 = vmatpush1.msra.mxu0 0.0
  %3729 = vmatprep.subr.mxu0 0.0
  %3730 = vmatpush1.msra.mxu0 0.0
  %3731 = vmatprep.subr.mxu0 0.0
  %3732 = vmatpush1.msra.mxu0 0.0
  %3733 = vmatprep.subr.mxu0 0.0
  %3734 = vmatpush1.msra.mxu0 0.0
  %3735 = vmatprep.subr.mxu0 0.0
  %3736 = vmatpush1.msra.mxu0 0.0
  %3737 = vmatprep.subr.mxu0 0.0
  %3738 = vmatpush1.msra.mxu0 0.0
  %3739 = vmatprep.subr.mxu0 0.0
  %3740 = vmatpush1.msra.mxu0 0.0
  %3741 = vmatprep.subr.mxu0 0.0
  %3742 = vmatpush1.msra.mxu0 0.0
  %3743 = vmatprep.subr.mxu0 0.0
  %3744 = vmatpush1.msra.mxu0 0.0
  %3745 = vmatprep.subr.mxu0 0.0
  %3746 = vmatpush1.msra.mxu0 0.0
  %3747 = vmatprep.subr.mxu0 0.0
  %3748 = vmatpush1.msra.mxu0 0.0
  %3749 = vmatprep.subr.mxu0 0.0
  %3750 = vmatpush1.msra.mxu0 0.0
  %3751 = vmatprep.subr.mxu0 0.0
  %3752 = vmatpush1.msra.mxu0 0.0
  %3753 = vmatprep.subr.mxu0 0.0
  %3754 = vmatpush1.msra.mxu0 0.0
  %3755 = vmatprep.subr.mxu0 0.0
  %3756 = vmatpush1.msra.mxu0 0.0
  %3757 = vmatprep.subr.mxu0 0.0
  %3758 = vmatpush1.msra.mxu0 0.0
  %3759 = vmatprep.subr.mxu0 0.0
  %3760 = vmatpush1.msra.mxu0 0.0
  %3761 = vmatprep.subr.mxu0 0.0
  %3762 = vmatpush1.msra.mxu0 0.0
  %3763 = vmatprep.subr.mxu0 0.0
  %3764 = vmatpush1.msra.mxu0 0.0
  %3765 = vmatprep.subr.mxu0 0.0
  %3766 = vmatpush1.msra.mxu0 0.0
  %3767 = vmatprep.subr.mxu0 0.0
  %3768 = vmatpush1.msra.mxu0 0.0
  %3769 = vmatprep.subr.mxu0 0.0
  %3770 = vmatpush1.msra.mxu0 0.0
  %3771 = vmatprep.mubr.f32.mxu0 0.0
  %3772 = vmatmul.mubr.f32.gmra.mrb[0].mxu0 %v3705
  %v3773 = vpop.f32.mrb[0].mxu0
  %v3774 = vadd.f32 0.0, %v3773
  %v3775 = vpop.f32.mrb[0].mxu0
  %3776 = vdwg.mxu0
  %v3777 = vadd.f32 %v3703, %v3774
  %v3779 = vsel %vm194, %v3024, 0
  %3781 = vmatprep.subr.mxu0 0.0
  %3782 = vmatpush1.msra.mxu0 %v3211
  %3783 = vmatprep.subr.mxu0 0.0
  %3784 = vmatpush1.msra.mxu0 0.0
  %3785 = vmatprep.subr.mxu0 0.0
  %3786 = vmatpush1.msra.mxu0 0.0
  %3787 = vmatprep.subr.mxu0 0.0
  %3788 = vmatpush1.msra.mxu0 0.0
  %3789 = vmatprep.subr.mxu0 0.0
  %3790 = vmatpush1.msra.mxu0 0.0
  %3791 = vmatprep.subr.mxu0 0.0
  %3792 = vmatpush1.msra.mxu0 0.0
  %3793 = vmatprep.subr.mxu0 0.0
  %3794 = vmatpush1.msra.mxu0 0.0
  %3795 = vmatprep.subr.mxu0 0.0
  %3796 = vmatpush1.msra.mxu0 0.0
  %3797 = vmatprep.subr.mxu0 0.0
  %3798 = vmatpush1.msra.mxu0 0.0
  %3799 = vmatprep.subr.mxu0 0.0
  %3800 = vmatpush1.msra.mxu0 0.0
  %3801 = vmatprep.subr.mxu0 0.0
  %3802 = vmatpush1.msra.mxu0 0.0
  %3803 = vmatprep.subr.mxu0 0.0
  %3804 = vmatpush1.msra.mxu0 0.0
  %3805 = vmatprep.subr.mxu0 0.0
  %3806 = vmatpush1.msra.mxu0 0.0
  %3807 = vmatprep.subr.mxu0 0.0
  %3808 = vmatpush1.msra.mxu0 0.0
  %3809 = vmatprep.subr.mxu0 0.0
  %3810 = vmatpush1.msra.mxu0 0.0
  %3811 = vmatprep.subr.mxu0 0.0
  %3812 = vmatpush1.msra.mxu0 0.0
  %3813 = vmatprep.subr.mxu0 0.0
  %3814 = vmatpush1.msra.mxu0 0.0
  %3815 = vmatprep.subr.mxu0 0.0
  %3816 = vmatpush1.msra.mxu0 0.0
  %3817 = vmatprep.subr.mxu0 0.0
  %3818 = vmatpush1.msra.mxu0 0.0
  %3819 = vmatprep.subr.mxu0 0.0
  %3820 = vmatpush1.msra.mxu0 0.0
  %3821 = vmatprep.subr.mxu0 0.0
  %3822 = vmatpush1.msra.mxu0 0.0
  %3823 = vmatprep.subr.mxu0 0.0
  %3824 = vmatpush1.msra.mxu0 0.0
  %3825 = vmatprep.subr.mxu0 0.0
  %3826 = vmatpush1.msra.mxu0 0.0
  %3827 = vmatprep.subr.mxu0 0.0
  %3828 = vmatpush1.msra.mxu0 0.0
  %3829 = vmatprep.subr.mxu0 0.0
  %3830 = vmatpush1.msra.mxu0 0.0
  %3831 = vmatprep.subr.mxu0 0.0
  %3832 = vmatpush1.msra.mxu0 0.0
  %3833 = vmatprep.subr.mxu0 0.0
  %3834 = vmatpush1.msra.mxu0 0.0
  %3835 = vmatprep.subr.mxu0 0.0
  %3836 = vmatpush1.msra.mxu0 0.0
  %3837 = vmatprep.subr.mxu0 0.0
  %3838 = vmatpush1.msra.mxu0 0.0
  %3839 = vmatprep.subr.mxu0 0.0
  %3840 = vmatpush1.msra.mxu0 0.0
  %3841 = vmatprep.subr.mxu0 0.0
  %3842 = vmatpush1.msra.mxu0 0.0
  %3843 = vmatprep.subr.mxu0 0.0
  %3844 = vmatpush1.msra.mxu0 0.0
  %3845 = vmatprep.mubr.f32.mxu0 0.0
  %3846 = vmatmul.mubr.f32.gmra.mrb[0].mxu0 %v3779
  %v3847 = vpop.f32.mrb[0].mxu0
  %v3848 = vadd.f32 0.0, %v3847
  %v3849 = vpop.f32.mrb[0].mxu0
  %3850 = vdwg.mxu0
  %v3851 = vadd.f32 %v3777, %v3848
  %v3853 = vsel %vm194, %v3026, 0
  %3855 = vmatprep.subr.mxu0 0.0
  %3856 = vmatpush1.msra.mxu0 %v3299
  %3857 = vmatprep.subr.mxu0 0.0
  %3858 = vmatpush1.msra.mxu0 0.0
  %3859 = vmatprep.subr.mxu0 0.0
  %3860 = vmatpush1.msra.mxu0 0.0
  %3861 = vmatprep.subr.mxu0 0.0
  %3862 = vmatpush1.msra.mxu0 0.0
  %3863 = vmatprep.subr.mxu0 0.0
  %3864 = vmatpush1.msra.mxu0 0.0
  %3865 = vmatprep.subr.mxu0 0.0
  %3866 = vmatpush1.msra.mxu0 0.0
  %3867 = vmatprep.subr.mxu0 0.0
  %3868 = vmatpush1.msra.mxu0 0.0
  %3869 = vmatprep.subr.mxu0 0.0
  %3870 = vmatpush1.msra.mxu0 0.0
  %3871 = vmatprep.subr.mxu0 0.0
  %3872 = vmatpush1.msra.mxu0 0.0
  %3873 = vmatprep.subr.mxu0 0.0
  %3874 = vmatpush1.msra.mxu0 0.0
  %3875 = vmatprep.subr.mxu0 0.0
  %3876 = vmatpush1.msra.mxu0 0.0
  %3877 = vmatprep.subr.mxu0 0.0
  %3878 = vmatpush1.msra.mxu0 0.0
  %3879 = vmatprep.subr.mxu0 0.0
  %3880 = vmatpush1.msra.mxu0 0.0
  %3881 = vmatprep.subr.mxu0 0.0
  %3882 = vmatpush1.msra.mxu0 0.0
  %3883 = vmatprep.subr.mxu0 0.0
  %3884 = vmatpush1.msra.mxu0 0.0
  %3885 = vmatprep.subr.mxu0 0.0
  %3886 = vmatpush1.msra.mxu0 0.0
  %3887 = vmatprep.subr.mxu0 0.0
  %3888 = vmatpush1.msra.mxu0 0.0
  %3889 = vmatprep.subr.mxu0 0.0
  %3890 = vmatpush1.msra.mxu0 0.0
  %3891 = vmatprep.subr.mxu0 0.0
  %3892 = vmatpush1.msra.mxu0 0.0
  %3893 = vmatprep.subr.mxu0 0.0
  %3894 = vmatpush1.msra.mxu0 0.0
  %3895 = vmatprep.subr.mxu0 0.0
  %3896 = vmatpush1.msra.mxu0 0.0
  %3897 = vmatprep.subr.mxu0 0.0
  %3898 = vmatpush1.msra.mxu0 0.0
  %3899 = vmatprep.subr.mxu0 0.0
  %3900 = vmatpush1.msra.mxu0 0.0
  %3901 = vmatprep.subr.mxu0 0.0
  %3902 = vmatpush1.msra.mxu0 0.0
  %3903 = vmatprep.subr.mxu0 0.0
  %3904 = vmatpush1.msra.mxu0 0.0
  %3905 = vmatprep.subr.mxu0 0.0
  %3906 = vmatpush1.msra.mxu0 0.0
  %3907 = vmatprep.subr.mxu0 0.0
  %3908 = vmatpush1.msra.mxu0 0.0
  %3909 = vmatprep.subr.mxu0 0.0
  %3910 = vmatpush1.msra.mxu0 0.0
  %3911 = vmatprep.subr.mxu0 0.0
  %3912 = vmatpush1.msra.mxu0 0.0
  %3913 = vmatprep.subr.mxu0 0.0
  %3914 = vmatpush1.msra.mxu0 0.0
  %3915 = vmatprep.subr.mxu0 0.0
  %3916 = vmatpush1.msra.mxu0 0.0
  %3917 = vmatprep.subr.mxu0 0.0
  %3918 = vmatpush1.msra.mxu0 0.0
  %3919 = vmatprep.mubr.f32.mxu0 0.0
  %3920 = vmatmul.mubr.f32.gmra.mrb[0].mxu0 %v3853
  %v3921 = vpop.f32.mrb[0].mxu0
  %v3922 = vadd.f32 0.0, %v3921
  %v3923 = vpop.f32.mrb[0].mxu0
  %3924 = vdwg.mxu0
  %v3925 = vadd.f32 %v3851, %v3922
  %v3927 = vsel %vm194, %v3028, 0
  %3929 = vmatprep.subr.mxu0 0.0
  %3930 = vmatpush1.msra.mxu0 %v3387
  %3931 = vmatprep.subr.mxu0 0.0
  %3932 = vmatpush1.msra.mxu0 0.0
  %3933 = vmatprep.subr.mxu0 0.0
  %3934 = vmatpush1.msra.mxu0 0.0
  %3935 = vmatprep.subr.mxu0 0.0
  %3936 = vmatpush1.msra.mxu0 0.0
  %3937 = vmatprep.subr.mxu0 0.0
  %3938 = vmatpush1.msra.mxu0 0.0
  %3939 = vmatprep.subr.mxu0 0.0
  %3940 = vmatpush1.msra.mxu0 0.0
  %3941 = vmatprep.subr.mxu0 0.0
  %3942 = vmatpush1.msra.mxu0 0.0
  %3943 = vmatprep.subr.mxu0 0.0
  %3944 = vmatpush1.msra.mxu0 0.0
  %3945 = vmatprep.subr.mxu0 0.0
  %3946 = vmatpush1.msra.mxu0 0.0
  %3947 = vmatprep.subr.mxu0 0.0
  %3948 = vmatpush1.msra.mxu0 0.0
  %3949 = vmatprep.subr.mxu0 0.0
  %3950 = vmatpush1.msra.mxu0 0.0
  %3951 = vmatprep.subr.mxu0 0.0
  %3952 = vmatpush1.msra.mxu0 0.0
  %3953 = vmatprep.subr.mxu0 0.0
  %3954 = vmatpush1.msra.mxu0 0.0
  %3955 = vmatprep.subr.mxu0 0.0
  %3956 = vmatpush1.msra.mxu0 0.0
  %3957 = vmatprep.subr.mxu0 0.0
  %3958 = vmatpush1.msra.mxu0 0.0
  %3959 = vmatprep.subr.mxu0 0.0
  %3960 = vmatpush1.msra.mxu0 0.0
  %3961 = vmatprep.subr.mxu0 0.0
  %3962 = vmatpush1.msra.mxu0 0.0
  %3963 = vmatprep.subr.mxu0 0.0
  %3964 = vmatpush1.msra.mxu0 0.0
  %3965 = vmatprep.subr.mxu0 0.0
  %3966 = vmatpush1.msra.mxu0 0.0
  %3967 = vmatprep.subr.mxu0 0.0
  %3968 = vmatpush1.msra.mxu0 0.0
  %3969 = vmatprep.subr.mxu0 0.0
  %3970 = vmatpush1.msra.mxu0 0.0
  %3971 = vmatprep.subr.mxu0 0.0
  %3972 = vmatpush1.msra.mxu0 0.0
  %3973 = vmatprep.subr.mxu0 0.0
  %3974 = vmatpush1.msra.mxu0 0.0
  %3975 = vmatprep.subr.mxu0 0.0
  %3976 = vmatpush1.msra.mxu0 0.0
  %3977 = vmatprep.subr.mxu0 0.0
  %3978 = vmatpush1.msra.mxu0 0.0
  %3979 = vmatprep.subr.mxu0 0.0
  %3980 = vmatpush1.msra.mxu0 0.0
  %3981 = vmatprep.subr.mxu0 0.0
  %3982 = vmatpush1.msra.mxu0 0.0
  %3983 = vmatprep.subr.mxu0 0.0
  %3984 = vmatpush1.msra.mxu0 0.0
  %3985 = vmatprep.subr.mxu0 0.0
  %3986 = vmatpush1.msra.mxu0 0.0
  %3987 = vmatprep.subr.mxu0 0.0
  %3988 = vmatpush1.msra.mxu0 0.0
  %3989 = vmatprep.subr.mxu0 0.0
  %3990 = vmatpush1.msra.mxu0 0.0
  %3991 = vmatprep.subr.mxu0 0.0
  %3992 = vmatpush1.msra.mxu0 0.0
  %3993 = vmatprep.mubr.f32.mxu0 0.0
  %3994 = vmatmul.mubr.f32.gmra.mrb[0].mxu0 %v3927
  %v3995 = vpop.f32.mrb[0].mxu0
  %v3996 = vadd.f32 0.0, %v3995
  %v3997 = vpop.f32.mrb[0].mxu0
  %3998 = vdwg.mxu0
  %v3999 = vadd.f32 %v3925, %v3996
  %4000 = vst.msk [vmem:[#allocation3 + $0x8] sm:$0xff] %vm53, %v3999
  %v4001 = vld [vmem:[#allocation3] sm:$0xff]
  %v4002 = vld [vmem:[#allocation3 + $0x8] sm:$0xff]
  %s4003 = scalar_lea.vmem %s10, 7
  %v4004 = vld [vmem:[%s4003] sm:$0x1]
  %s4005 = scalar_lea.vmem %s10, 8
  %v4006 = vld [vmem:[%s4005] sm:$0x1]
  %v4007 = vsel %vm53, %v4001, 0.0
  %4008 = vadd.xlane.f32.xlu0 %v4007
  %v4009 = vpop.xlane.xlu0 %4008
  %v4010 = vsel %vm53, %v4002, 0.0
  %4011 = vadd.xlane.f32.xlu0 %v4010
  %v4012 = vpop.xlane.xlu0 %4011
  %v4013 = vmul.f32 %v4009, %v60
  %v4014 = vmul.f32 %v4012, %v60
  %v4015 = vsub.f32 %v4001, %v4013
  %v4016 = vsub.f32 %v4002, %v4014
  %v4017 = vmul.f32 %v4015, %v4015
  %v4018 = vmul.f32 %v4016, %v4016
  %v4019 = vsel %vm53, %v4017, 0.0
  %4020 = vadd.xlane.f32.xlu0 %v4019
  %v4021 = vpop.xlane.xlu0 %4020
  %v4022 = vsel %vm53, %v4018, 0.0
  %4023 = vadd.xlane.f32.xlu0 %v4022
  %v4024 = vpop.xlane.xlu0 %4023
  %v4025 = vmul.f32 %v4021, %v60
  %v4026 = vmul.f32 %v4024, %v60
  %v4027 = vadd.f32 %v4025, 1e-12
  %v4028 = vadd.f32 %v4026, 1e-12
  %v4029 = vrsqrt.pop %v4027
  %v4030 = vrsqrt.pop %v4028
  %v4031 = vmul.f32 %v4015, %v4029
  %v4032 = vmul.f32 %v4016, %v4030
  %v4034 = vlaneseq
  %v4035 = vshrl.u32 %v4034, 7
  %v4036 = vsub.s32 0, %v4035
  %v4037 = vrot.slane %v4004, %v4036
  %v4039 = vmul.f32 %v4031, %v4037
  %v4040 = vmul.f32 %v4032, %v4037
  %v4042 = vlaneseq
  %v4043 = vshrl.u32 %v4042, 7
  %v4044 = vsub.s32 0, %v4043
  %v4045 = vrot.slane %v4006, %v4044
  %v4047 = vadd.f32 %v4039, %v4045
  %v4048 = vadd.f32 %v4040, %v4045
  %s4049 = scalar_lea.vmem %s7, 32
  %v4050 = vld [vmem:[%s4049] sm:$0xff]
  %v4051 = vld [vmem:[%s4049 + $0x8] sm:$0xff]
  %v4052 = vld [vmem:[%s4049 + $0x10] sm:$0xff]
  %v4053 = vld [vmem:[%s4049 + $0x18] sm:$0xff]
  %s4054 = scalar_lea.vmem %s8, 1
  %v4055 = vld [vmem:[%s4054] sm:$0x1]
  %v4057 = vlaneseq
  %v4058 = vshrl.u32 %v4057, 7
  %v4059 = vsub.s32 0, %v4058
  %v4060 = vrot.slane %v4055, %v4059
  %v4063 = vsel %vm53, %v4047, 0
  %v4066 = vsel %vm53, %v4048, 0
  %4068 = vmatprep.subr.mxu0 0.0
  %4069 = vmatpush1.msra.mxu0 %v4050
  %4070 = vmatprep.subr.mxu0 0.0
  %4071 = vmatpush1.msra.mxu0 %v4051
  %4072 = vmatprep.subr.mxu0 0.0
  %4073 = vmatpush1.msra.mxu0 %v4052
  %4074 = vmatprep.subr.mxu0 0.0
  %4075 = vmatpush1.msra.mxu0 %v4053
  %4076 = vmatprep.subr.mxu0 0.0
  %4077 = vmatpush1.msra.mxu0 0.0
  %4078 = vmatprep.subr.mxu0 0.0
  %4079 = vmatpush1.msra.mxu0 0.0
  %4080 = vmatprep.subr.mxu0 0.0
  %4081 = vmatpush1.msra.mxu0 0.0
  %4082 = vmatprep.subr.mxu0 0.0
  %4083 = vmatpush1.msra.mxu0 0.0
  %4084 = vmatprep.subr.mxu0 0.0
  %4085 = vmatpush1.msra.mxu0 0.0
  %4086 = vmatprep.subr.mxu0 0.0
  %4087 = vmatpush1.msra.mxu0 0.0
  %4088 = vmatprep.subr.mxu0 0.0
  %4089 = vmatpush1.msra.mxu0 0.0
  %4090 = vmatprep.subr.mxu0 0.0
  %4091 = vmatpush1.msra.mxu0 0.0
  %4092 = vmatprep.subr.mxu0 0.0
  %4093 = vmatpush1.msra.mxu0 0.0
  %4094 = vmatprep.subr.mxu0 0.0
  %4095 = vmatpush1.msra.mxu0 0.0
  %4096 = vmatprep.subr.mxu0 0.0
  %4097 = vmatpush1.msra.mxu0 0.0
  %4098 = vmatprep.subr.mxu0 0.0
  %4099 = vmatpush1.msra.mxu0 0.0
  %4100 = vmatprep.subr.mxu0 0.0
  %4101 = vmatpush1.msra.mxu0 0.0
  %4102 = vmatprep.subr.mxu0 0.0
  %4103 = vmatpush1.msra.mxu0 0.0
  %4104 = vmatprep.subr.mxu0 0.0
  %4105 = vmatpush1.msra.mxu0 0.0
  %4106 = vmatprep.subr.mxu0 0.0
  %4107 = vmatpush1.msra.mxu0 0.0
  %4108 = vmatprep.subr.mxu0 0.0
  %4109 = vmatpush1.msra.mxu0 0.0
  %4110 = vmatprep.subr.mxu0 0.0
  %4111 = vmatpush1.msra.mxu0 0.0
  %4112 = vmatprep.subr.mxu0 0.0
  %4113 = vmatpush1.msra.mxu0 0.0
  %4114 = vmatprep.subr.mxu0 0.0
  %4115 = vmatpush1.msra.mxu0 0.0
  %4116 = vmatprep.subr.mxu0 0.0
  %4117 = vmatpush1.msra.mxu0 0.0
  %4118 = vmatprep.subr.mxu0 0.0
  %4119 = vmatpush1.msra.mxu0 0.0
  %4120 = vmatprep.subr.mxu0 0.0
  %4121 = vmatpush1.msra.mxu0 0.0
  %4122 = vmatprep.subr.mxu0 0.0
  %4123 = vmatpush1.msra.mxu0 0.0
  %4124 = vmatprep.subr.mxu0 0.0
  %4125 = vmatpush1.msra.mxu0 0.0
  %4126 = vmatprep.subr.mxu0 0.0
  %4127 = vmatpush1.msra.mxu0 0.0
  %4128 = vmatprep.subr.mxu0 0.0
  %4129 = vmatpush1.msra.mxu0 0.0
  %4130 = vmatprep.subr.mxu0 0.0
  %4131 = vmatpush1.msra.mxu0 0.0
  %4132 = vmatprep.mubr.f32.mxu0 0.0
  %4133 = vmatmul.mubr.f32.gmra.mrb[0].mxu0 %v4063
  %v4134 = vpop.f32.mrb[0].mxu0
  %v4135 = vadd.f32 %v4060, %v4134
  %v4136 = vpop.f32.mrb[0].mxu0
  %4137 = vmatprep.mubr.f32.mxu0 0.0
  %4138 = vmatmul.mubr.f32.gmra.mrb[0].mxu0 %v4066
  %v4139 = vpop.f32.mrb[0].mxu0
  %v4140 = vadd.f32 %v4060, %v4139
  %v4141 = vpop.f32.mrb[0].mxu0
  %4142 = vdwg.mxu0
  %v4143 = vmul.f32 %v4135, 0.5
  %v4144 = vmul.f32 %v4140, 0.5
  %v4145 = vmul.f32 %v4135, 0.044715
  %v4146 = vmul.f32 %v4140, 0.044715
  %v4147 = vmul.f32 %v4145, %v4135
  %v4148 = vmul.f32 %v4146, %v4140
  %v4149 = vmul.f32 %v4147, %v4135
  %v4150 = vmul.f32 %v4148, %v4140
  %v4151 = vadd.f32 %v4135, %v4149
  %v4152 = vadd.f32 %v4140, %v4150
  %v4153 = vmul.f32 %v4151, 0.7978846
  %v4154 = vmul.f32 %v4152, 0.7978846
  %v4155 = vtanh.pop %v4153
  %v4156 = vtanh.pop %v4154
  %v4157 = vadd.f32 %v4155, 1.0
  %v4158 = vadd.f32 %v4156, 1.0
  %v4159 = vmul.f32 %v4143, %v4157
  %v4160 = vmul.f32 %v4144, %v4158
  %s4161 = scalar_lea.vmem %s9, 64
  %v4162 = vld [vmem:[%s4161] sm:$0xff]
  %v4163 = vld [vmem:[%s4161 + $0x8] sm:$0xff]
  %v4164 = vld [vmem:[%s4161 + $0x10] sm:$0xff]
  %v4165 = vld [vmem:[%s4161 + $0x18] sm:$0xff]
  %v4166 = vld [vmem:[%s4161 + $0x20] sm:$0xff]
  %v4167 = vld [vmem:[%s4161 + $0x28] sm:$0xff]
  %v4168 = vld [vmem:[%s4161 + $0x30] sm:$0xff]
  %v4169 = vld [vmem:[%s4161 + $0x38] sm:$0xff]
  %s4170 = scalar_lea.vmem %s10, 9
  %v4171 = vld [vmem:[%s4170] sm:$0x1]
  %v4173 = vlaneseq
  %v4174 = vshrl.u32 %v4173, 7
  %v4175 = vsub.s32 0, %v4174
  %v4176 = vrot.slane %v4171, %v4175
  %v4179 = vsel %vm2068, %v4159, 0
  %v4182 = vsel %vm2068, %v4160, 0
  %4184 = vmatprep.subr.mxu0 0.0
  %4185 = vmatpush1.msra.mxu0 %v4162
  %4186 = vmatprep.subr.mxu0 0.0
  %4187 = vmatpush1.msra.mxu0 %v4163
  %4188 = vmatprep.subr.mxu0 0.0
  %4189 = vmatpush1.msra.mxu0 %v4164
  %4190 = vmatprep.subr.mxu0 0.0
  %4191 = vmatpush1.msra.mxu0 %v4165
  %4192 = vmatprep.subr.mxu0 0.0
  %4193 = vmatpush1.msra.mxu0 %v4166
  %4194 = vmatprep.subr.mxu0 0.0
  %4195 = vmatpush1.msra.mxu0 %v4167
  %4196 = vmatprep.subr.mxu0 0.0
  %4197 = vmatpush1.msra.mxu0 %v4168
  %4198 = vmatprep.subr.mxu0 0.0
  %4199 = vmatpush1.msra.mxu0 %v4169
  %4200 = vmatprep.subr.mxu0 0.0
  %4201 = vmatpush1.msra.mxu0 0.0
  %4202 = vmatprep.subr.mxu0 0.0
  %4203 = vmatpush1.msra.mxu0 0.0
  %4204 = vmatprep.subr.mxu0 0.0
  %4205 = vmatpush1.msra.mxu0 0.0
  %4206 = vmatprep.subr.mxu0 0.0
  %4207 = vmatpush1.msra.mxu0 0.0
  %4208 = vmatprep.subr.mxu0 0.0
  %4209 = vmatpush1.msra.mxu0 0.0
  %4210 = vmatprep.subr.mxu0 0.0
  %4211 = vmatpush1.msra.mxu0 0.0
  %4212 = vmatprep.subr.mxu0 0.0
  %4213 = vmatpush1.msra.mxu0 0.0
  %4214 = vmatprep.subr.mxu0 0.0
  %4215 = vmatpush1.msra.mxu0 0.0
  %4216 = vmatprep.subr.mxu0 0.0
  %4217 = vmatpush1.msra.mxu0 0.0
  %4218 = vmatprep.subr.mxu0 0.0
  %4219 = vmatpush1.msra.mxu0 0.0
  %4220 = vmatprep.subr.mxu0 0.0
  %4221 = vmatpush1.msra.mxu0 0.0
  %4222 = vmatprep.subr.mxu0 0.0
  %4223 = vmatpush1.msra.mxu0 0.0
  %4224 = vmatprep.subr.mxu0 0.0
  %4225 = vmatpush1.msra.mxu0 0.0
  %4226 = vmatprep.subr.mxu0 0.0
  %4227 = vmatpush1.msra.mxu0 0.0
  %4228 = vmatprep.subr.mxu0 0.0
  %4229 = vmatpush1.msra.mxu0 0.0
  %4230 = vmatprep.subr.mxu0 0.0
  %4231 = vmatpush1.msra.mxu0 0.0
  %4232 = vmatprep.subr.mxu0 0.0
  %4233 = vmatpush1.msra.mxu0 0.0
  %4234 = vmatprep.subr.mxu0 0.0
  %4235 = vmatpush1.msra.mxu0 0.0
  %4236 = vmatprep.subr.mxu0 0.0
  %4237 = vmatpush1.msra.mxu0 0.0
  %4238 = vmatprep.subr.mxu0 0.0
  %4239 = vmatpush1.msra.mxu0 0.0
  %4240 = vmatprep.subr.mxu0 0.0
  %4241 = vmatpush1.msra.mxu0 0.0
  %4242 = vmatprep.subr.mxu0 0.0
  %4243 = vmatpush1.msra.mxu0 0.0
  %4244 = vmatprep.subr.mxu0 0.0
  %4245 = vmatpush1.msra.mxu0 0.0
  %4246 = vmatprep.subr.mxu0 0.0
  %4247 = vmatpush1.msra.mxu0 0.0
  %4248 = vmatprep.mubr.f32.mxu0 0.0
  %4249 = vmatmul.mubr.f32.gmra.mrb[0].mxu0 %v4179
  %v4250 = vpop.f32.mrb[0].mxu0
  %v4251 = vadd.f32 %v4176, %v4250
  %v4252 = vpop.f32.mrb[0].mxu0
  %4253 = vmatprep.mubr.f32.mxu0 0.0
  %4254 = vmatmul.mubr.f32.gmra.mrb[0].mxu0 %v4182
  %v4255 = vpop.f32.mrb[0].mxu0
  %v4256 = vadd.f32 %v4176, %v4255
  %v4257 = vpop.f32.mrb[0].mxu0
  %4258 = vdwg.mxu0
  %v4259 = vadd.f32 %v4251, %v4047
  %v4260 = vadd.f32 %v4256, %v4048
  %s4261 = scalar_lea.vmem %s10, 10
  %v4262 = vld [vmem:[%s4261] sm:$0x1]
  %s4263 = scalar_lea.vmem %s10, 11
  %v4264 = vld [vmem:[%s4263] sm:$0x1]
  %v4265 = vsel %vm53, %v4259, 0.0
  %4266 = vadd.xlane.f32.xlu0 %v4265
  %v4267 = vpop.xlane.xlu0 %4266
  %v4268 = vsel %vm53, %v4260, 0.0
  %4269 = vadd.xlane.f32.xlu0 %v4268
  %v4270 = vpop.xlane.xlu0 %4269
  %v4271 = vmul.f32 %v4267, %v60
  %v4272 = vmul.f32 %v4270, %v60
  %v4273 = vsub.f32 %v4259, %v4271
  %v4274 = vsub.f32 %v4260, %v4272
  %v4275 = vmul.f32 %v4273, %v4273
  %v4276 = vmul.f32 %v4274, %v4274
  %v4277 = vsel %vm53, %v4275, 0.0
  %4278 = vadd.xlane.f32.xlu0 %v4277
  %v4279 = vpop.xlane.xlu0 %4278
  %v4280 = vsel %vm53, %v4276, 0.0
  %4281 = vadd.xlane.f32.xlu0 %v4280
  %v4282 = vpop.xlane.xlu0 %4281
  %v4283 = vmul.f32 %v4279, %v60
  %v4284 = vmul.f32 %v4282, %v60
  %v4285 = vadd.f32 %v4283, 1e-12
  %v4286 = vadd.f32 %v4284, 1e-12
  %v4287 = vrsqrt.pop %v4285
  %v4288 = vrsqrt.pop %v4286
  %v4289 = vmul.f32 %v4273, %v4287
  %v4290 = vmul.f32 %v4274, %v4288
  %v4292 = vlaneseq
  %v4293 = vshrl.u32 %v4292, 7
  %v4294 = vsub.s32 0, %v4293
  %v4295 = vrot.slane %v4262, %v4294
  %v4297 = vmul.f32 %v4289, %v4295
  %v4298 = vmul.f32 %v4290, %v4295
  %v4300 = vlaneseq
  %v4301 = vshrl.u32 %v4300, 7
  %v4302 = vsub.s32 0, %v4301
  %v4303 = vrot.slane %v4264, %v4302
  %v4305 = vadd.f32 %v4297, %v4303
  %v4306 = vadd.f32 %v4298, %v4303
  %s4307 = scalar_lea.vmem %s11, 32
  %4308 = vst.msk [vmem:[%s4307] sm:$0xff] %vm53, %v4305
  %4309 = vst.msk [vmem:[%s4307 + $0x8] sm:$0xff] %vm53, %v4306
  // Predicated region
  $region46: #{distil_bert_wrap_forward.1} parent=0 // pred_check
    _
  $region47: #{distil_bert_wrap_forward.1} parent=0 // pred_check_branch
    %4311 = sbr.rel (0) target = $region49
  $region48: #{distil_bert_wrap_forward.1} parent=0 // pred_region
    _
  $region49: #{distil_bert_wrap_forward.1} parent=0 // pred_fallthru
    _
  // Predicated region
  $region50: #{distil_bert_wrap_forward.1} parent=0 // pred_check
    _
  $region51: #{distil_bert_wrap_forward.1} parent=0 // pred_check_branch
    %4313 = sbr.rel (0) target = $region53
  $region52: #{distil_bert_wrap_forward.1} parent=0 // pred_region
    _
  $region53: #{distil_bert_wrap_forward.1} parent=0 // pred_fallthru
    _
  // Predicated region
  $region54: #{distil_bert_wrap_forward.1} parent=0 // pred_check
    _
  $region55: #{distil_bert_wrap_forward.1} parent=0 // pred_check_branch
    %4315 = sbr.rel (0) target = $region57
  $region56: #{distil_bert_wrap_forward.1} parent=0 // pred_region
    _
  $region57: #{distil_bert_wrap_forward.1} parent=0 // pred_fallthru
    _
  // Predicated region
  $region58: #{distil_bert_wrap_forward.1} parent=0 // pred_check
    _
  $region59: #{distil_bert_wrap_forward.1} parent=0 // pred_check_branch
    %4317 = sbr.rel (0) target = $region61
  $region60: #{distil_bert_wrap_forward.1} parent=0 // pred_region
    _
  $region61: #{distil_bert_wrap_forward.1} parent=0 // pred_fallthru
    _

</llo_original>
